<compile_context>
chip_gen: v5e
topology: v5e:2x2
jax: 0.10.0
libtpu: 0.0.40
codegen_flags: <defaults>
</compile_context>

<pallas_src>
import math
import sys
import numpy as np

import jax
import jax.numpy as jnp
from jax import lax
from jax.experimental import pallas as pl
from jax.experimental.pallas import tpu as pltpu

# ----------------------------- config ---------------------------------------
D_IN = 3
HIDDEN_DIMS = (64, 64, 64, 64)
D_OUT = 1
FEATURE_VECTOR_SIZE = 32
MULTIRES = 6
COND_DIM_RAW = 69            # cond == 'smpl'
DIM_POSE_EMBED = 32          # lin_p0: 69 -> 32
BIAS_INIT = 0.6
INSIDE_OUTSIDE = False

INPUT_CH = D_IN * (1 + 2 * MULTIRES)                                    # 39
DIMS = [INPUT_CH] + list(HIDDEN_DIMS) + [D_OUT + FEATURE_VECTOR_SIZE]   # [39,64,64,64,64,33]
OUT_DIM = D_OUT + FEATURE_VECTOR_SIZE                                   # 33
SKIP_OUT = DIMS[3] - DIMS[0]                                            # 25 (layer-2 output)
PAD2 = 32                                                               # layer-2 output padded width

SOFTPLUS_BETA = 100.0
SOFTPLUS_THRESHOLD = 20.0    # PyTorch nn.Softplus default threshold
INV_SQRT2 = 1.0 / math.sqrt(2.0)


def _cdiv(a, b):
    return (a + b - 1) // b


def _round_up(a, m):
    return _cdiv(a, m) * m


# ----------------------------- math helpers ----------------------------------
def _softplus_beta100(x, trans_dtype=jnp.float32):
    # nn.Softplus(beta=100): (1/beta)*log(1+exp(beta*x)), linear above threshold.
    # trans_dtype lets v6e/v7x experiment with bf16 transcendentals (EUP) behind a flag.
    z = SOFTPLUS_BETA * x
    zt = jnp.minimum(z, SOFTPLUS_THRESHOLD).astype(trans_dtype)
    soft = jnp.log1p(jnp.exp(zt)).astype(jnp.float32) * (1.0 / SOFTPLUS_BETA)
    return jnp.where(z > SOFTPLUS_THRESHOLD, x, soft)


def _embed_matrices():
    """sc (36,3), phase (36,1): emb[3:] rows = sin(sc @ x + phase) in the NeRF
    channel order [sin(2^0 x), cos(2^0 x), sin(2^1 x), cos(2^1 x), ...]."""
    n = 2 * MULTIRES * D_IN
    sc = np.zeros((n, D_IN), np.float32)
    phase = np.zeros((n, 1), np.float32)
    eye = np.eye(D_IN, dtype=np.float32)
    for k in range(MULTIRES):
        f = float(2.0 ** k)
        sc[6 * k: 6 * k + 3, :] = f * eye           # sin rows (phase 0)
        sc[6 * k + 3: 6 * k + 6, :] = f * eye       # cos rows (phase pi/2)
        phase[6 * k + 3: 6 * k + 6, 0] = np.pi / 2.0
    return jnp.asarray(sc), jnp.asarray(phase)


def positional_embed(x_flat):
    # NeRF-style fourier embedder: [x, sin(2^k x), cos(2^k x)]_{k=0..multires-1}
    parts = [x_flat]
    for k in range(MULTIRES):
        f = float(2.0 ** k)
        parts.append(jnp.sin(x_flat * f))
        parts.append(jnp.cos(x_flat * f))
    return jnp.concatenate(parts, axis=-1)            # (N, 39)


# ------------------ in-kernel sin capability probe ----------------------------
_SIN_OK = None


def _in_kernel_sin_supported():
    """Probe whether jnp.sin lowers inside a Mosaic kernel on this build.

    Keeps the production kernel free of silent try/except fallbacks: only a tiny
    dedicated probe is guarded, and the chosen path is logged to stderr."""
    global _SIN_OK
    if _SIN_OK is None:
        def probe(x_ref, o_ref):
            o_ref[...] = jnp.sin(x_ref[...])
        try:
            r = pl.pallas_call(
                probe, out_shape=jax.ShapeDtypeStruct((8, 128), jnp.float32)
            )(jnp.zeros((8, 128), jnp.float32))
            jax.block_until_ready(r)
            _SIN_OK = True
        except Exception as e:  # noqa: BLE001 - probe only; real kernel is never masked
            print(f"[implicitnet] in-kernel sin unavailable ({type(e).__name__}); "
                  "using XLA-side fourier embedding", file=sys.stderr)
            _SIN_OK = False
    return _SIN_OK


# ----------------------------- kernel ---------------------------------------
def _tail(h0pre, cond_ref, w1_ref, w2p_ref, w3xp_ref, w4_ref, b_ref, o_ref, act_dtype):
    """Layers 0..4 after the fused emb matmul. All tensors are (channels, tile_n)."""
    f32 = jnp.float32
    cdt = w1_ref.dtype
    H1 = DIMS[1]                                    # 64
    b_all = b_ref[...]                              # (193, 1)
    b1 = b_all[0:H1]
    b2 = b_all[H1:H1 + PAD2]
    b3 = b_all[H1 + PAD2:H1 + PAD2 + DIMS[4]]
    b4 = b_all[H1 + PAD2 + DIMS[4]:]

    skip_e = h0pre[H1:, :]                          # (64,T) = (w3e/sqrt2) @ emb
    # layer 0: cond_ref already holds (w0c @ cond_emb + b0) for this batch element.
    h = _softplus_beta100(h0pre[:H1, :] + cond_ref[...], act_dtype)
    # layer 1
    h = _softplus_beta100(
        jnp.dot(w1_ref[...], h.astype(cdt), preferred_element_type=f32) + b1, act_dtype)
    # layer 2 (25-wide output zero-padded to 32 rows; padded w3x columns are zero)
    h = _softplus_beta100(
        jnp.dot(w2p_ref[...], h.astype(cdt), preferred_element_type=f32) + b2, act_dtype)
    # layer 3 (skip): (w3x/sqrt2) @ h + (w3e/sqrt2) @ emb + b3
    h = _softplus_beta100(
        jnp.dot(w3xp_ref[...], h.astype(cdt), preferred_element_type=f32) + skip_e + b3,
        act_dtype)
    # layer 4 (last): linear, no activation; lane-dense (33, T) store
    o_ref[...] = (jnp.dot(w4_ref[...], h.astype(cdt), preferred_element_type=f32)
                  + b4).astype(o_ref.dtype)


def _make_kernel(embed_in_kernel, act_dtype=jnp.float32):
    if embed_in_kernel:
        def kernel(pts_ref, cond_ref, sc_ref, ph_ref, wf3_ref, wf36_ref,
                   w1_ref, w2p_ref, w3xp_ref, w4_ref, b_ref, o_ref):
            f32 = jnp.float32
            cdt = w1_ref.dtype
            xs = pts_ref[...]                                               # (3, T) f32
            # fourier features (f32 scaling + sin, then cast to compute dtype)
            pre = jnp.dot(sc_ref[...], xs, preferred_element_type=f32) + ph_ref[...]
            sincos = jnp.sin(pre)                                           # (36, T)
            # fused [layer-0 | layer-3 skip] emb matmul, K split as 3 + 36 (no concat)
            h0pre = (jnp.dot(wf3_ref[...], xs.astype(cdt), preferred_element_type=f32)
                     + jnp.dot(wf36_ref[...], sincos.astype(cdt),
                               preferred_element_type=f32))                 # (128, T)
            _tail(h0pre, cond_ref, w1_ref, w2p_ref, w3xp_ref, w4_ref, b_ref, o_ref,
                  act_dtype)
        return kernel

    def kernel(emb_ref, cond_ref, wf_ref, w1_ref, w2p_ref, w3xp_ref, w4_ref, b_ref, o_ref):
        f32 = jnp.float32
        h0pre = jnp.dot(wf_ref[...], emb_ref[...], preferred_element_type=f32)  # (128, T)
        _tail(h0pre, cond_ref, w1_ref, w2p_ref, w3xp_ref, w4_ref, b_ref, o_ref, act_dtype)
    return kernel


# ----------------------------- wrapper ---------------------------------------
def implicitnet_forward(x, cond_smpl, params, *, tile_n=2048,
                        compute_dtype=jnp.bfloat16, out_dtype=jnp.float32,
                        softplus_bf16=False, embed_in_kernel=None):
    """x: (B, P, 3) float32, cond_smpl: (B, 69) float32 -> (B, P, 33) out_dtype."""
    HP = lax.Precision.HIGHEST
    B, P, _ = x.shape
    if B * P == 0:
        return jnp.zeros((B, P, OUT_DIM), out_dtype)

    # --- tile selection: multiple of 128 (lane-dense), large to amortize per-step cost,
    #     capped by P, and >=2 grid steps when B==1 so v7x megacore has work to split.
    tile = max(128, min(tile_n, _round_up(P, 128)))
    if B * _cdiv(P, tile) < 2 and P > 128:
        tile = max(128, _round_up(_cdiv(P, 2), 128))
    n_tiles = _cdiv(P, tile)
    P_pad = n_tiles * tile

    cdt = compute_dtype

    # points: channels-on-sublanes / points-on-lanes, only 12 B/point streamed
    xT = jnp.swapaxes(x.astype(jnp.float32), 1, 2)            # (B, 3, P)
    if P_pad != P:
        xT = jnp.pad(xT, ((0, 0), (0, 0), (0, P_pad - P)))

    # per-batch cond column: lin_p0, then fold layer-0 cond columns and b0
    w0 = params["w0"]                                          # (64, 71)
    w0x = w0[:, :INPUT_CH]                                     # (64, 39)
    w0c = w0[:, INPUT_CH:]                                     # (64, 32)
    cond_emb = jnp.dot(cond_smpl, params["wp0"].T, precision=HP) + params["bp0"]   # (B,32)
    cond_col = (jnp.dot(cond_emb, w0c.T, precision=HP) + params["b0"])             # (B,64)
    cond_col = cond_col.astype(jnp.float32).reshape(B, DIMS[1], 1)

    # fused [layer-0 emb | layer-3 skip-emb] weight; 1/sqrt(2) folded into the skip half
    w3 = params["w3"]
    w3x = w3[:, :SKIP_OUT] * INV_SQRT2                         # (64, 25)
    w3e = w3[:, SKIP_OUT:] * INV_SQRT2                         # (64, 39)
    wf = jnp.concatenate([w0x, w3e], axis=0).astype(cdt)       # (128, 39)
    w3xp = (jnp.zeros((DIMS[4], PAD2), jnp.float32)
            .at[:, :SKIP_OUT].set(w3x).astype(cdt))            # (64, 32)
    w2p = (jnp.zeros((PAD2, DIMS[2]), jnp.float32)
           .at[:SKIP_OUT, :].set(params["w2"]).astype(cdt))    # (32, 64)
    w1 = params["w1"].astype(cdt)                              # (64, 64)
    w4 = params["w4"].astype(cdt)                              # (33, 64)

    # consolidated bias column: [b1 | b2(pad to 32) | b3 | b4] -> (193, 1)
    b2p = jnp.zeros((PAD2,), jnp.float32).at[:SKIP_OUT].set(params["b2"])
    bpack = jnp.concatenate(
        [params["b1"], b2p, params["b3"], params["b4"]]).astype(jnp.float32).reshape(-1, 1)

    act_dtype = jnp.bfloat16 if softplus_bf16 else jnp.float32  # bf16 EUP experiment (v6e/v7x)

    if embed_in_kernel is None:
        embed_in_kernel = _in_kernel_sin_supported()

    def rspec(a):  # small weight/bias arrays, resident in VMEM across the whole grid
        return pl.BlockSpec(a.shape, lambda b, i: (0,) * a.ndim)

    cond_spec = pl.BlockSpec((None, DIMS[1], 1), lambda b, i: (b, 0, 0))
    out_spec = pl.BlockSpec((None, OUT_DIM, tile), lambda b, i: (b, 0, i))
    common_specs = [rspec(w1), rspec(w2p), rspec(w3xp), rspec(w4), rspec(bpack)]

    if embed_in_kernel:
        sc, phase = _embed_matrices()                          # (36,3), (36,1) f32
        wf3, wf36 = wf[:, :D_IN], wf[:, D_IN:]
        args = (xT, cond_col, sc, phase, wf3, wf36, w1, w2p, w3xp, w4, bpack)
        in_specs = [pl.BlockSpec((None, D_IN, tile), lambda b, i: (b, 0, i)),
                    cond_spec, rspec(sc), rspec(phase), rspec(wf3), rspec(wf36)
                    ] + common_specs
    else:
        # fallback: fourier embedding precomputed in XLA, streamed lane-dense (B,39,P)
        parts = [xT]
        for k in range(MULTIRES):
            f = float(2.0 ** k)
            parts.append(jnp.sin(xT * f))
            parts.append(jnp.cos(xT * f))
        embT = jnp.concatenate(parts, axis=1).astype(cdt)      # (B, 39, P_pad)
        args = (embT, cond_col, wf, w1, w2p, w3xp, w4, bpack)
        in_specs = [pl.BlockSpec((None, INPUT_CH, tile), lambda b, i: (b, 0, i)),
                    cond_spec, rspec(wf)] + common_specs

    out = pl.pallas_call(
        _make_kernel(embed_in_kernel, act_dtype),
        out_shape=jax.ShapeDtypeStruct((B, OUT_DIM, P_pad), out_dtype),
        grid_spec=pltpu.PrefetchScalarGridSpec(
            num_scalar_prefetch=0,
            grid=(B, n_tiles),
            in_specs=in_specs,
            out_specs=out_spec),
        compiler_params=pltpu.CompilerParams(
            dimension_semantics=("parallel", "parallel"),
            vmem_limit_bytes=32 * 1024 * 1024),
    )(*args)

    return jnp.swapaxes(out[:, :, :P], 1, 2)                   # (B, P, 33)


# ----------------------------- reference (plain JAX) --------------------------
def implicitnet_reference(x, cond_smpl, params):
    HP = lax.Precision.HIGHEST
    B, P, _ = x.shape
    x_flat = x.reshape(B * P, D_IN)
    emb = positional_embed(x_flat)
    cond_emb = jnp.repeat(
        jnp.dot(cond_smpl, params["wp0"].T, precision=HP) + params["bp0"], P, axis=0)

    # l = 0 (cond layer)
    h = jnp.concatenate([emb, cond_emb], axis=-1)
    h = _softplus_beta100(jnp.dot(h, params["w0"].T, precision=HP) + params["b0"])
    # l = 1
    h = _softplus_beta100(jnp.dot(h, params["w1"].T, precision=HP) + params["b1"])
    # l = 2
    h = _softplus_beta100(jnp.dot(h, params["w2"].T, precision=HP) + params["b2"])
    # l = 3 (skip)
    h = jnp.concatenate([h, emb], axis=1) / math.sqrt(2)
    h = _softplus_beta100(jnp.dot(h, params["w3"].T, precision=HP) + params["b3"])
    # l = 4 (last)
    h = jnp.dot(h, params["w4"].T, precision=HP) + params["b4"]
    return h.reshape(B, P, OUT_DIM)


# ----------------------------- init ('geometry') ------------------------------
def init_params(key):
    ks = iter(jax.random.split(key, 16))
    p = {}

    # lin_p0: torch.nn.Linear default init (uniform +- 1/sqrt(fan_in))
    bnd = 1.0 / math.sqrt(COND_DIM_RAW)
    p["wp0"] = jax.random.uniform(next(ks), (DIM_POSE_EMBED, COND_DIM_RAW),
                                  minval=-bnd, maxval=bnd, dtype=jnp.float32)
    p["bp0"] = jax.random.uniform(next(ks), (DIM_POSE_EMBED,),
                                  minval=-bnd, maxval=bnd, dtype=jnp.float32)

    # layer 0: in = 39 + 32 = 71, out = 64   (multires>0, l==0 branch)
    out0 = DIMS[1]
    w0 = jnp.zeros((out0, INPUT_CH + DIM_POSE_EMBED), jnp.float32)
    w0 = w0.at[:, :3].set(
        jax.random.normal(next(ks), (out0, 3)) * (math.sqrt(2.0) / math.sqrt(out0)))
    p["w0"], p["b0"] = w0, jnp.zeros((out0,), jnp.float32)

    # layer 1: 64 -> 64
    out1 = DIMS[2]
    p["w1"] = jax.random.normal(next(ks), (out1, DIMS[1])) * (math.sqrt(2.0) / math.sqrt(out1))
    p["b1"] = jnp.zeros((out1,), jnp.float32)

    # layer 2: 64 -> 25 (next layer is a skip layer)
    out2 = SKIP_OUT
    p["w2"] = jax.random.normal(next(ks), (out2, DIMS[2])) * (math.sqrt(2.0) / math.sqrt(out2))
    p["b2"] = jnp.zeros((out2,), jnp.float32)

    # layer 3: in = 25 + 39 = 64, out = 64   (skip layer: zero last dims[0]-3 cols)
    out3 = DIMS[4]
    w3 = jax.random.normal(next(ks), (out3, DIMS[3])) * (math.sqrt(2.0) / math.sqrt(out3))
    w3 = w3.at[:, -(INPUT_CH - 3):].set(0.0)
    p["w3"], p["b3"] = w3, jnp.zeros((out3,), jnp.float32)

    # layer 4 (last): geometric init
    out4 = OUT_DIM
    mean = math.sqrt(math.pi) / math.sqrt(DIMS[4])
    sign = -1.0 if INSIDE_OUTSIDE else 1.0
    p["w4"] = sign * mean + 1e-4 * jax.random.normal(next(ks), (out4, DIMS[4]))
    p["b4"] = jnp.full((out4,), (BIAS_INIT if INSIDE_OUTSIDE else -BIAS_INIT), jnp.float32)

    return jax.tree_util.tree_map(lambda a: a.astype(jnp.float32), p)


# ----------------------------- main -------------------------------------------
if __name__ == "__main__":
    key = jax.random.PRNGKey(0)
    k_param, k_x, k_c = jax.random.split(key, 3)

    B, P = 2, 777                                   # P not a multiple of 128 -> exercises padding
    x = jax.random.normal(k_x, (B, P, D_IN), dtype=jnp.float32)
    cond_smpl = 0.1 * jax.random.normal(k_c, (B, COND_DIM_RAW), dtype=jnp.float32)
    params = init_params(k_param)

    ref = jax.block_until_ready(implicitnet_reference(x, cond_smpl, params))

    # f32 path (tight check; tolerance bounded by Mosaic-vs-XLA MXU f32 rounding, not 1e-2)
    out_f32 = jax.block_until_ready(
        implicitnet_forward(x, cond_smpl, params, compute_dtype=jnp.float32))
    assert out_f32.shape == (B, P, OUT_DIM)
    assert bool(jnp.all(jnp.isfinite(out_f32)))
    err32 = float(jnp.max(jnp.abs(out_f32 - ref)))
    assert bool(jnp.allclose(out_f32, ref, rtol=1e-4, atol=1e-5)), \
        f"f32 kernel != reference (max abs err {err32:.3e})"

    # bf16-operand / f32-accumulate path (v6e/v7x MXU-native)
    out_bf16 = jax.block_until_ready(
        implicitnet_forward(x, cond_smpl, params, compute_dtype=jnp.bfloat16))
    assert out_bf16.shape == (B, P, OUT_DIM)
    assert bool(jnp.all(jnp.isfinite(out_bf16)))
    errbf = float(jnp.max(jnp.abs(out_bf16 - ref)))
    assert bool(jnp.allclose(out_bf16, ref, rtol=2e-2, atol=2e-2)), \
        f"bf16 kernel != reference (max abs err {errbf:.3e})"

    # TODO(synk): gradient()/get_outputs()/get_sdf_vals() use torch.autograd + bounding-sphere
    # clamping; on the JAX side they are jax.grad / jnp.minimum over this forward, not a kernel.
    print("KERNEL_OK")
</pallas_src>

<mosaic_0001>
module attributes {stable_mosaic.version = 11 : i64} {
  func.func @probe(%arg0: memref<8x128xf32, #tpu.memory_space<vmem>>, %arg1: memref<8x128xf32, #tpu.memory_space<vmem>>) attributes {dimension_semantics = [], scalar_prefetch = 0 : i64, scratch_operands = 0 : i64, tpu.core_type = #tpu.core_type<tc>} {
    %c0 = arith.constant 0 : index
    %c0_0 = arith.constant 0 : index
    %0 = vector.load %arg0[%c0, %c0_0] : memref<8x128xf32, #tpu.memory_space<vmem>>, vector<8x128xf32>
    %1 = math.sin %0 : vector<8x128xf32>
    %c0_1 = arith.constant 0 : index
    %c0_2 = arith.constant 0 : index
    %2 = vector.load %arg1[%c0_1, %c0_2] : memref<8x128xf32, #tpu.memory_space<vmem>>, vector<8x128xf32>
    tpu.vector_store %arg1[%c0_1, %c0_2], %1 {strides = array<i32>} : memref<8x128xf32, #tpu.memory_space<vmem>>, vector<8x128xf32>,
    return
  }
}

module attributes {stable_mosaic.version = 11 : i64} {
  func.func @kernel(%arg0: i32, %arg1: i32, %arg2: memref<1x39x896xf32, #tpu.memory_space<vmem>>, %arg3: memref<1x64x1xf32, #tpu.memory_space<vmem>>, %arg4: memref<128x39xf32, #tpu.memory_space<vmem>>, %arg5: memref<64x64xf32, #tpu.memory_space<vmem>>, %arg6: memref<32x64xf32, #tpu.memory_space<vmem>>, %arg7: memref<64x32xf32, #tpu.memory_space<vmem>>, %arg8: memref<33x64xf32, #tpu.memory_space<vmem>>, %arg9: memref<193x1xf32, #tpu.memory_space<vmem>>, %arg10: memref<1x33x896xf32, #tpu.memory_space<vmem>>) attributes {dimension_semantics = [#tpu.dimension_semantics<parallel>, #tpu.dimension_semantics<parallel>], iteration_bounds = array<i64: 2, 1>, scalar_prefetch = 0 : i64, scratch_operands = 0 : i64, tpu.core_type = #tpu.core_type<tc>, window_params = [{transform_indices = @transform_0, window_bounds = array<i64: 1, 39, 896>}, {transform_indices = @transform_1, window_bounds = array<i64: 1, 64, 1>}, {pipeline_mode = #tpu.pipeline_mode<synchronous>, transform_indices = @transform_2, window_bounds = array<i64: 128, 39>}, {pipeline_mode = #tpu.pipeline_mode<synchronous>, transform_indices = @transform_3, window_bounds = array<i64: 64, 64>}, {pipeline_mode = #tpu.pipeline_mode<synchronous>, transform_indices = @transform_4, window_bounds = array<i64: 32, 64>}, {pipeline_mode = #tpu.pipeline_mode<synchronous>, transform_indices = @transform_5, window_bounds = array<i64: 64, 32>}, {pipeline_mode = #tpu.pipeline_mode<synchronous>, transform_indices = @transform_6, window_bounds = array<i64: 33, 64>}, {pipeline_mode = #tpu.pipeline_mode<synchronous>, transform_indices = @transform_7, window_bounds = array<i64: 193, 1>}, {transform_indices = @transform_8, window_bounds = array<i64: 1, 33, 896>}]} {
    %c0 = arith.constant 0 : index
    %c0_0 = arith.constant 0 : index
    %0 = vector.load %arg4[%c0, %c0_0] : memref<128x39xf32, #tpu.memory_space<vmem>>, vector<128x39xf32>
    %c0_1 = arith.constant 0 : index
    %c0_2 = arith.constant 0 : index
    %c0_3 = arith.constant 0 : index
    %1 = vector.load %arg2[%c0_1, %c0_2, %c0_3] : memref<1x39x896xf32, #tpu.memory_space<vmem>>, vector<1x39x896xf32>
    %2 = vector.shape_cast %1 : vector<1x39x896xf32> to vector<39x896xf32>
    %cst = arith.constant dense<0.000000e+00> : vector<128x896xf32>
    %3 = tpu.matmul %0, %2, %cst {dimension_numbers = #tpu.dot_dimension_numbers<[1], [0], [0], [1], [0, 0, 1, 1], [], []>} : vector<128x39xf32>, vector<39x896xf32>, vector<128x896xf32> -> vector<128x896xf32>
    %c0_4 = arith.constant 0 : index
    %c0_5 = arith.constant 0 : index
    %4 = vector.load %arg9[%c0_4, %c0_5] : memref<193x1xf32, #tpu.memory_space<vmem>>, vector<193x1xf32>
    %5 = vector.extract_strided_slice %4 {offsets = [0, 0], sizes = [64, 1], strides = [1, 1]} : vector<193x1xf32> to vector<64x1xf32>
    %6 = vector.extract_strided_slice %4 {offsets = [64, 0], sizes = [32, 1], strides = [1, 1]} : vector<193x1xf32> to vector<32x1xf32>
    %7 = vector.extract_strided_slice %4 {offsets = [96, 0], sizes = [64, 1], strides = [1, 1]} : vector<193x1xf32> to vector<64x1xf32>
    %8 = vector.extract_strided_slice %4 {offsets = [160, 0], sizes = [33, 1], strides = [1, 1]} : vector<193x1xf32> to vector<33x1xf32>
    %9 = vector.extract_strided_slice %3 {offsets = [64, 0], sizes = [64, 896], strides = [1, 1]} : vector<128x896xf32> to vector<64x896xf32>
    %10 = vector.extract_strided_slice %3 {offsets = [0, 0], sizes = [64, 896], strides = [1, 1]} : vector<128x896xf32> to vector<64x896xf32>
    %c0_6 = arith.constant 0 : index
    %c0_7 = arith.constant 0 : index
    %c0_8 = arith.constant 0 : index
    %11 = vector.load %arg3[%c0_6, %c0_7, %c0_8] : memref<1x64x1xf32, #tpu.memory_space<vmem>>, vector<1x64x1xf32>
    %12 = vector.shape_cast %11 : vector<1x64x1xf32> to vector<64x1xf32>
    %13 = vector.broadcast %12 : vector<64x1xf32> to vector<64x896xf32>
    %14 = arith.addf %10, %13 : vector<64x896xf32>
    %cst_9 = arith.constant 1.000000e+02 : f32
    %15 = vector.broadcast %cst_9 : f32 to vector<64x896xf32>
    %16 = arith.mulf %15, %14 : vector<64x896xf32>
    %cst_10 = arith.constant 2.000000e+01 : f32
    %17 = vector.broadcast %cst_10 : f32 to vector<64x896xf32>
    %18 = arith.minimumf %16, %17 : vector<64x896xf32>
    %19 = math.exp %18 : vector<64x896xf32>
    %20 = math.log1p %19 : vector<64x896xf32>
    %cst_11 = arith.constant 0.00999999977 : f32
    %21 = vector.broadcast %cst_11 : f32 to vector<64x896xf32>
    %22 = arith.mulf %20, %21 : vector<64x896xf32>
    %cst_12 = arith.constant 2.000000e+01 : f32
    %23 = vector.broadcast %cst_12 : f32 to vector<64x896xf32>
    %24 = arith.cmpf ogt, %16, %23 : vector<64x896xf32>
    %25 = arith.select %24, %14, %22 : vector<64x896xi1>, vector<64x896xf32>
    %c0_13 = arith.constant 0 : index
    %c0_14 = arith.constant 0 : index
    %26 = vector.load %arg5[%c0_13, %c0_14] : memref<64x64xf32, #tpu.memory_space<vmem>>, vector<64x64xf32>
    %cst_15 = arith.constant dense<0.000000e+00> : vector<64x896xf32>
    %27 = tpu.matmul %26, %25, %cst_15 {dimension_numbers = #tpu.dot_dimension_numbers<[1], [0], [0], [1], [0, 0, 1, 1], [], []>} : vector<64x64xf32>, vector<64x896xf32>, vector<64x896xf32> -> vector<64x896xf32>
    %28 = vector.broadcast %5 : vector<64x1xf32> to vector<64x896xf32>
    %29 = arith.addf %27, %28 : vector<64x896xf32>
    %cst_16 = arith.constant 1.000000e+02 : f32
    %30 = vector.broadcast %cst_16 : f32 to vector<64x896xf32>
    %31 = arith.mulf %30, %29 : vector<64x896xf32>
    %cst_17 = arith.constant 2.000000e+01 : f32
    %32 = vector.broadcast %cst_17 : f32 to vector<64x896xf32>
    %33 = arith.minimumf %31, %32 : vector<64x896xf32>
    %34 = math.exp %33 : vector<64x896xf32>
    %35 = math.log1p %34 : vector<64x896xf32>
    %cst_18 = arith.constant 0.00999999977 : f32
    %36 = vector.broadcast %cst_18 : f32 to vector<64x896xf32>
    %37 = arith.mulf %35, %36 : vector<64x896xf32>
    %cst_19 = arith.constant 2.000000e+01 : f32
    %38 = vector.broadcast %cst_19 : f32 to vector<64x896xf32>
    %39 = arith.cmpf ogt, %31, %38 : vector<64x896xf32>
    %40 = arith.select %39, %29, %37 : vector<64x896xi1>, vector<64x896xf32>
    %c0_20 = arith.constant 0 : index
    %c0_21 = arith.constant 0 : index
    %41 = vector.load %arg6[%c0_20, %c0_21] : memref<32x64xf32, #tpu.memory_space<vmem>>, vector<32x64xf32>
    %cst_22 = arith.constant dense<0.000000e+00> : vector<32x896xf32>
    %42 = tpu.matmul %41, %40, %cst_22 {dimension_numbers = #tpu.dot_dimension_numbers<[1], [0], [0], [1], [0, 0, 1, 1], [], []>} : vector<32x64xf32>, vector<64x896xf32>, vector<32x896xf32> -> vector<32x896xf32>
    %43 = vector.broadcast %6 : vector<32x1xf32> to vector<32x896xf32>
    %44 = arith.addf %42, %43 : vector<32x896xf32>
    %cst_23 = arith.constant 1.000000e+02 : f32
    %45 = vector.broadcast %cst_23 : f32 to vector<32x896xf32>
    %46 = arith.mulf %45, %44 : vector<32x896xf32>
    %cst_24 = arith.constant 2.000000e+01 : f32
    %47 = vector.broadcast %cst_24 : f32 to vector<32x896xf32>
    %48 = arith.minimumf %46, %47 : vector<32x896xf32>
    %49 = math.exp %48 : vector<32x896xf32>
    %50 = math.log1p %49 : vector<32x896xf32>
    %cst_25 = arith.constant 0.00999999977 : f32
    %51 = vector.broadcast %cst_25 : f32 to vector<32x896xf32>
    %52 = arith.mulf %50, %51 : vector<32x896xf32>
    %cst_26 = arith.constant 2.000000e+01 : f32
    %53 = vector.broadcast %cst_26 : f32 to vector<32x896xf32>
    %54 = arith.cmpf ogt, %46, %53 : vector<32x896xf32>
    %55 = arith.select %54, %44, %52 : vector<32x896xi1>, vector<32x896xf32>
    %c0_27 = arith.constant 0 : index
    %c0_28 = arith.constant 0 : index
    %56 = vector.load %arg7[%c0_27, %c0_28] : memref<64x32xf32, #tpu.memory_space<vmem>>, vector<64x32xf32>
    %cst_29 = arith.constant dense<0.000000e+00> : vector<64x896xf32>
    %57 = tpu.matmul %56, %55, %cst_29 {dimension_numbers = #tpu.dot_dimension_numbers<[1], [0], [0], [1], [0, 0, 1, 1], [], []>} : vector<64x32xf32>, vector<32x896xf32>, vector<64x896xf32> -> vector<64x896xf32>
    %58 = arith.addf %57, %9 : vector<64x896xf32>
    %59 = vector.broadcast %7 : vector<64x1xf32> to vector<64x896xf32>
    %60 = arith.addf %58, %59 : vector<64x896xf32>
    %cst_30 = arith.constant 1.000000e+02 : f32
    %61 = vector.broadcast %cst_30 : f32 to vector<64x896xf32>
    %62 = arith.mulf %61, %60 : vector<64x896xf32>
    %cst_31 = arith.constant 2.000000e+01 : f32
    %63 = vector.broadcast %cst_31 : f32 to vector<64x896xf32>
    %64 = arith.minimumf %62, %63 : vector<64x896xf32>
    %65 = math.exp %64 : vector<64x896xf32>
    %66 = math.log1p %65 : vector<64x896xf32>
    %cst_32 = arith.constant 0.00999999977 : f32
    %67 = vector.broadcast %cst_32 : f32 to vector<64x896xf32>
    %68 = arith.mulf %66, %67 : vector<64x896xf32>
    %cst_33 = arith.constant 2.000000e+01 : f32
    %69 = vector.broadcast %cst_33 : f32 to vector<64x896xf32>
    %70 = arith.cmpf ogt, %62, %69 : vector<64x896xf32>
    %71 = arith.select %70, %60, %68 : vector<64x896xi1>, vector<64x896xf32>
    %c0_34 = arith.constant 0 : index
    %c0_35 = arith.constant 0 : index
    %72 = vector.load %arg8[%c0_34, %c0_35] : memref<33x64xf32, #tpu.memory_space<vmem>>, vector<33x64xf32>
    %cst_36 = arith.constant dense<0.000000e+00> : vector<33x896xf32>
    %73 = tpu.matmul %72, %71, %cst_36 {dimension_numbers = #tpu.dot_dimension_numbers<[1], [0], [0], [1], [0, 0, 1, 1], [], []>} : vector<33x64xf32>, vector<64x896xf32>, vector<33x896xf32> -> vector<33x896xf32>
    %74 = vector.broadcast %8 : vector<33x1xf32> to vector<33x896xf32>
    %75 = arith.addf %73, %74 : vector<33x896xf32>
    %c0_37 = arith.constant 0 : index
    %c0_38 = arith.constant 0 : index
    %c0_39 = arith.constant 0 : index
    %76 = vector.load %arg10[%c0_37, %c0_38, %c0_39] : memref<1x33x896xf32, #tpu.memory_space<vmem>>, vector<1x33x896xf32>
    %77 = vector.shape_cast %76 : vector<1x33x896xf32> to vector<33x896xf32>
    %78 = vector.shape_cast %75 : vector<33x896xf32> to vector<1x33x896xf32>
    tpu.vector_store %arg10[%c0_37, %c0_38, %c0_39], %78 {strides = array<i32>} : memref<1x33x896xf32, #tpu.memory_space<vmem>>, vector<1x33x896xf32>,
    return
  }
  func.func @transform_0(%arg0: i32, %arg1: i32) -> (i32, i32, i32) {
    %c0_i32 = arith.constant 0 : i32
    %c0_i32_0 = arith.constant 0 : i32
    return %arg0, %c0_i32, %arg1 : i32, i32, i32
  }
  func.func @transform_1(%arg0: i32, %arg1: i32) -> (i32, i32, i32) {
    %c0_i32 = arith.constant 0 : i32
    %c0_i32_0 = arith.constant 0 : i32
    %c0_i32_1 = arith.constant 0 : i32
    return %arg0, %c0_i32, %c0_i32_0 : i32, i32, i32
  }
  func.func @transform_2(%arg0: i32, %arg1: i32) -> (i32, i32) {
    %c0_i32 = arith.constant 0 : i32
    %c0_i32_0 = arith.constant 0 : i32
    %c0_i32_1 = arith.constant 0 : i32
    return %c0_i32, %c0_i32_0 : i32, i32
  }
  func.func @transform_3(%arg0: i32, %arg1: i32) -> (i32, i32) {
    %c0_i32 = arith.constant 0 : i32
    %c0_i32_0 = arith.constant 0 : i32
    %c0_i32_1 = arith.constant 0 : i32
    return %c0_i32, %c0_i32_0 : i32, i32
  }
  func.func @transform_4(%arg0: i32, %arg1: i32) -> (i32, i32) {
    %c0_i32 = arith.constant 0 : i32
    %c0_i32_0 = arith.constant 0 : i32
    %c0_i32_1 = arith.constant 0 : i32
    return %c0_i32, %c0_i32_0 : i32, i32
  }
  func.func @transform_5(%arg0: i32, %arg1: i32) -> (i32, i32) {
    %c0_i32 = arith.constant 0 : i32
    %c0_i32_0 = arith.constant 0 : i32
    %c0_i32_1 = arith.constant 0 : i32
    return %c0_i32, %c0_i32_0 : i32, i32
  }
  func.func @transform_6(%arg0: i32, %arg1: i32) -> (i32, i32) {
    %c0_i32 = arith.constant 0 : i32
    %c0_i32_0 = arith.constant 0 : i32
    %c0_i32_1 = arith.constant 0 : i32
    return %c0_i32, %c0_i32_0 : i32, i32
  }
  func.func @transform_7(%arg0: i32, %arg1: i32) -> (i32, i32) {
    %c0_i32 = arith.constant 0 : i32
    %c0_i32_0 = arith.constant 0 : i32
    %c0_i32_1 = arith.constant 0 : i32
    return %c0_i32, %c0_i32_0 : i32, i32
  }
  func.func @transform_8(%arg0: i32, %arg1: i32) -> (i32, i32, i32) {
    %c0_i32 = arith.constant 0 : i32
    %c0_i32_0 = arith.constant 0 : i32
    return %arg0, %c0_i32, %arg1 : i32, i32, i32
  }
}

</mosaic_0001>

<llo_original>
// kernel: tpu_custom_call.1
$region0: #{tpu_custom_call.1}
  #allocation0 [shape = 'u32[]', space=smem, size = 0x4, offset = 0x4, fixed_abs, tag = 'smem constant byte address 0x4 - core index']
  #allocation1 [shape = 'u32[72,128]{1,0:T(1,128)}', space=vmem, size = 0x9000, scoped, tag = 'internal scratch']
  %s0 = inlined_call_operand.hbm [shape: f32[8,128], index: 0, kind: input, shape index: {}]
  %s1 = inlined_call_operand.hbm [shape: f32[8,128], index: 1, kind: output, shape index: {}]
  %s2 = sld [smem:[#allocation0]]
  $region18: #{tpu_custom_call.1} parent=0
    _
  %s4 = ssub.s32 1, %s2
  %s5 = scalar_select 0, %s4, %s2
  $region1: #{tpu_custom_call.1} parent=0
    #allocation2 [shape = 'u8[4096]{0}', space=vmem, size = 0x1000, scoped, tag = 'input window, operand 0, single buffered']
    #allocation3 [shape = 's32[1]{0}', space=sflag, size = 0x4, scoped, tag = 'scoped memory for tpu_custom_call.1']
    #allocation4 [shape = 's32[1]{0}', space=sflag, size = 0x4, scoped, tag = 'scoped memory for tpu_custom_call.1']
    #allocation5 [shape = 'u8[4096]{0}', space=vmem, size = 0x1000, scoped, tag = 'output window, operand 0, single buffered']
    %6 = vsyncpa [#allocation3], 0
    %7 = vsyncpa [#allocation4], 0
    // Predicated region
    $region2: #{tpu_custom_call.1} parent=1 // pred_check
      _
    $region3: #{tpu_custom_call.1} parent=1 // pred_check_branch
      %9 = sbr.rel (0) target = $region5
    $region4: #{tpu_custom_call.1} parent=1 // pred_region
      %11 = vsyncadd [#allocation3], 0
      %s13 = sshll.u32 %s0, 4
      %s14 = int_to_ptr.hbm [resolvable:$true] %s13
      %s15 = sshll.u32 [#allocation2], 4
      %s16 = int_to_ptr.vmem [resolvable:$true] %s15
      %18 = dma.hbm_to_vmem [thread:$0]  %s14, 128, %s16, [#allocation3]
    $region5: #{tpu_custom_call.1} parent=1 // pred_fallthru
      _
    // Predicated region
    $region6: #{tpu_custom_call.1} parent=1 // pred_check
      _
    $region7: #{tpu_custom_call.1} parent=1 // pred_check_branch
      %20 = sbr.rel (0) target = $region9
    $region8: #{tpu_custom_call.1} parent=1 // pred_region
      %22 = dma.done [#allocation3], 128
    $region9: #{tpu_custom_call.1} parent=1 // pred_fallthru
      _
    %v23 = vld [vmem:[#allocation2] sm:$0xff]
    %v24 = vand.u32 2147483647, %v23
    %vm25 = vcmp.le.f32.partialorder %v24, 0.7853982
    %vm26 = vcmp.lt.s32.totalorder %v23, 0
    %v27 = vand.u32 %v23, 2139095040
    %v28 = vshrl.u32 %v27, 23
    %v29 = vsub.s32 %v28, 127
    %v30 = vand.u32 2147483647, %v23
    %v31 = vand.u32 %v30, 8388607
    %v32 = vor.u32 %v31, 8388608
    %v33 = vsub.s32 0, %v32
    %v34 = vadd.s32 %v29, 1
    %vm35 = vcmp.gt.s32.totalorder %v34, 0
    %v36 = vsel %vm35, %v34, 0
    %v37 = vshrl.u32 %v36, 5
    %v38 = vand.u32 %v36, 31
    %v39 = vsub.s32 32, %v38
    %v40 = vshrl.u32 683565275, %v39
    %v41 = vshll.u32 683565275, %v38
    %v42 = vshrl.u32 2475754826, %v39
    %v43 = vor.u32 %v41, %v42
    %v44 = vshll.u32 2475754826, %v38
    %v45 = vshrl.u32 2131351028, %v39
    %v46 = vor.u32 %v44, %v45
    %v47 = vshll.u32 2131351028, %v38
    %v48 = vshrl.u32 2102212464, %v39
    %v49 = vor.u32 %v47, %v48
    %v50 = vshll.u32 2102212464, %v38
    %v51 = vshrl.u32 920167782, %v39
    %v52 = vor.u32 %v50, %v51
    %v53 = vshll.u32 920167782, %v38
    %v54 = vshrl.u32 1326507024, %v39
    %v55 = vor.u32 %v53, %v54
    %vm56 = vcmp.lt.s32.totalorder %v37, 1
    %vm57 = vcmp.lt.s32.totalorder %v37, 2
    %vm58 = vcmp.lt.s32.totalorder %v37, 3
    %vm59 = vcmp.lt.s32.totalorder %v37, 4
    %v60 = vsel %vm56, %v40, %v43
    %v61 = vsel %vm59, %v49, 2102212464
    %v62 = vsel %vm58, %v46, %v61
    %v63 = vsel %vm57, %v60, %v62
    %v64 = vsel %vm56, %v43, %v46
    %v65 = vsel %vm59, %v52, 920167782
    %v66 = vsel %vm58, %v49, %v65
    %v67 = vsel %vm57, %v64, %v66
    %v68 = vsel %vm56, %v46, %v49
    %v69 = vsel %vm59, %v55, 1326507024
    %v70 = vsel %vm58, %v52, %v69
    %v71 = vsel %vm57, %v68, %v70
    %v72 = vshll.u32 %v32, 8
    %v73 = vand.u32 %v72, 65535
    %v74 = vshrl.u32 %v72, 16
    %v75 = vand.u32 %v71, 65535
    %v76 = vshrl.u32 %v71, 16
    %v77 = vmul.u32 %v73, %v75
    %v78 = vmul.u32 %v73, %v76
    %v79 = vmul.u32 %v74, %v75
    %v80 = vmul.u32 %v74, %v76
    %v81 = vshll.u32 %v78, 16
    %v82 = vshrl.u32 %v78, 16
    %v83 = vshll.u32 %v79, 16
    %v84 = vshrl.u32 %v79, 16
    %vm85 = vc.u32 %v77, %v81
    %v86 = vsel %vm85, 1, 0
    %v87 = vadd.s32 %v77, %v81
    %v88 = vadd.s32 %v80, %v86
    %vm89 = vc.u32 %v87, %v83
    %v90 = vsel %vm89, 1, 0
    %v91 = vadd.s32 %v87, %v83
    %v92 = vadd.s32 %v88, %v90
    %v93 = vadd.s32 %v92, %v82
    %v94 = vadd.s32 %v93, %v84
    %v95 = vand.u32 %v72, 65535
    %v96 = vshrl.u32 %v72, 16
    %v97 = vand.u32 %v67, 65535
    %v98 = vshrl.u32 %v67, 16
    %v99 = vmul.u32 %v95, %v97
    %v100 = vmul.u32 %v95, %v98
    %v101 = vmul.u32 %v96, %v97
    %v102 = vmul.u32 %v96, %v98
    %v103 = vshll.u32 %v100, 16
    %v104 = vshrl.u32 %v100, 16
    %v105 = vshll.u32 %v101, 16
    %v106 = vshrl.u32 %v101, 16
    %vm107 = vc.u32 %v99, %v103
    %v108 = vsel %vm107, 1, 0
    %v109 = vadd.s32 %v99, %v103
    %v110 = vadd.s32 %v102, %v108
    %vm111 = vc.u32 %v109, %v105
    %v112 = vsel %vm111, 1, 0
    %v113 = vadd.s32 %v109, %v105
    %v114 = vadd.s32 %v110, %v112
    %v115 = vadd.s32 %v114, %v104
    %v116 = vadd.s32 %v115, %v106
    %v117 = vmul.u32 %v72, %v63
    %v118 = vadd.s32 %v94, %v113
    %vm119 = vc.u32 %v94, %v113
    %v120 = vadd.s32 %v116, 1
    %v121 = vsel %vm119, %v120, %v116
    %v122 = vadd.s32 %v117, %v121
    %v123 = vadd.s32 %v122, 536870912
    %v124 = vshrl.u32 %v123, 30
    %v125 = vshll.u32 %v124, 30
    %v126 = vsub.s32 %v122, %v125
    %vm127 = vcmp.lt.s32.totalorder %v126, 0
    %v128 = vsub.s32 0, %v126
    %v129 = vsel %vm127, %v128, %v126
    %v130 = vclz %v129
    %v131 = vsub.s32 %v130, 2
    %vm132 = vcmp.gt.s32.totalorder 0, %v131
    %v133 = vsel %vm132, 0, %v131
    %v134 = vsub.s32 32, %v133
    %v135 = vshll.u32 %v126, %v133
    %v136 = vshrl.u32 %v118, %v134
    %v137 = vor.u32 %v135, %v136
    %v138 = vsub.s32 4294967266, %v133
    %v139 = vadd.s32 %v138, 127
    %v140 = vshll.u32 %v139, 23
    %v141 = vor.u32 4788187, %v140
    %v142 = vand.u32 2147483647, %v141
    %v144 = vcvt.s32.f32 %v137
    %v145 = vmul.f32 %v144, %v142
    %v146 = vxor.u32 %v145, 2147483648
    %v147 = vsel %vm26, %v146, %v145
    %v148 = vsub.s32 4, %v124
    %v149 = vsel %vm26, %v148, %v124
    %v150 = vsel %vm25, %v23, %v147
    %v151 = vsel %vm25, 0, %v149
    %v152 = vmul.f32 %v150, %v150
    %v153 = vmul.f32 %v152, -0.001358992
    %v154 = vadd.f32 %v153, 0.041655596
    %v155 = vmul.f32 %v152, %v154
    %v156 = vadd.f32 %v155, -0.4999988
    %v157 = vmul.f32 %v152, %v156
    %v158 = vadd.f32 1.0, %v157
    %v159 = vmul.f32 %v150, %v150
    %v160 = vmul.f32 %v159, -0.00019511016
    %v161 = vadd.f32 %v160, 0.008332121
    %v162 = vmul.f32 %v159, %v161
    %v163 = vadd.f32 %v162, -0.16666654
    %v164 = vmul.f32 %v159, %v163
    %v165 = vadd.f32 %v164, 1.0
    %v166 = vmul.f32 %v165, %v150
    %vm167 = vweird.f32 %v23
    %v168 = vadd.s32 %v151, 3
    %v169 = vand.u32 %v168, 3
    %vm170 = vcmp.lt.s32.totalorder %v169, 2
    %vm171 = vcmp.eq.s32.totalorder %v169, 0
    %v172 = vxor.u32 %v166, 2147483648
    %v173 = vsel %vm171, %v158, %v172
    %vm174 = vcmp.eq.s32.totalorder %v169, 2
    %v175 = vxor.u32 %v158, 2147483648
    %v176 = vsel %vm174, %v175, %v166
    %v177 = vsel %vm170, %v173, %v176
    %v178 = vsel %vm167, nan, %v177
    %179 = vst [vmem:[#allocation5] sm:$0xff] %v178
    // Predicated region
    $region10: #{tpu_custom_call.1} parent=1 // pred_check
      _
    $region11: #{tpu_custom_call.1} parent=1 // pred_check_branch
      %181 = sbr.rel (0) target = $region13
    $region12: #{tpu_custom_call.1} parent=1 // pred_region
      %183 = vsyncadd [#allocation4], 0
      %s185 = sshll.u32 [#allocation5], 4
      %s186 = int_to_ptr.vmem [resolvable:$true] %s185
      %s187 = sshll.u32 %s1, 4
      %s188 = int_to_ptr.hbm [resolvable:$true] %s187
      %190 = dma.vmem_to_hbm [thread:$0]  %s186, 128, %s188, [#allocation4]
    $region13: #{tpu_custom_call.1} parent=1 // pred_fallthru
      _
    // Predicated region
    $region14: #{tpu_custom_call.1} parent=1 // pred_check
      _
    $region15: #{tpu_custom_call.1} parent=1 // pred_check_branch
      %192 = sbr.rel (0) target = $region17
    $region16: #{tpu_custom_call.1} parent=1 // pred_region
      %194 = dma.done [#allocation4], 128
    $region17: #{tpu_custom_call.1} parent=1 // pred_fallthru
      _
    %195 = vsyncpa [#allocation3], 1
    %196 = vsyncpa [#allocation4], 1

// kernel: tpu_custom_call.1
$region0: #{tpu_custom_call.1}
  #allocation0 [shape = 'u32[]', space=smem, size = 0x4, offset = 0x4, fixed_abs, tag = 'smem constant byte address 0x4 - core index']
  #allocation1 [shape = 'u32[72,128]{1,0:T(1,128)}', space=vmem, size = 0x9000, scoped, tag = 'internal scratch']
  %s0 = inlined_call_operand.vmem [shape: f32[2,39,896], index: 0, kind: input, shape index: {}]
  %s1 = inlined_call_operand.vmem [shape: f32[2,64,1], index: 1, kind: input, shape index: {}]
  %s2 = inlined_call_operand.vmem [shape: f32[128,39], index: 2, kind: input, shape index: {}]
  %s3 = inlined_call_operand.vmem [shape: f32[64,64], index: 3, kind: input, shape index: {}]
  %s4 = inlined_call_operand.vmem [shape: f32[32,64], index: 4, kind: input, shape index: {}]
  %s5 = inlined_call_operand.vmem [shape: f32[64,32], index: 5, kind: input, shape index: {}]
  %s6 = inlined_call_operand.vmem [shape: f32[33,64], index: 6, kind: input, shape index: {}]
  %s7 = inlined_call_operand.vmem [shape: f32[193,1], index: 7, kind: input, shape index: {}]
  %s8 = inlined_call_operand.vmem [shape: f32[2,33,896], index: 8, kind: output, shape index: {}]
  %s9 = sld [smem:[#allocation0]]
  $region65: #{tpu_custom_call.1} parent=0
    _
  %s11 = ssub.s32 1, %s9
  %s12 = scalar_select 0, %s11, %s9
  loop: start=0, step=1, limit=4
  $region2: #{tpu_custom_call.1} parent=0 // loop_pre_header
    _
  $region3: #{tpu_custom_call.1} parent=0 // loop_header
    %s14 = sphi 0, %s18
    %p15 = scmp.ge.s32.totalorder %s14, 4
    %s21 = sphi 0, %s33
    %s22 = sphi 0, %s29
    %s23 = sphi 0, %s21
    %s24 = sphi 0, %s22
    %s25 = sphi 0, %s23
    %s26 = sphi 0, %s24
    %s38 = sphi 0, %s40
    %s41 = sphi 0, %s38
    %s42 = sphi 0, %s41
    %s58 = sphi 0, %s42
    %s64 = sphi 0, %s66
    %s67 = sphi 0, %s64
    %s68 = sphi 0, %s67
    %s84 = sphi 0, %s68
    %s88 = sphi 0, %s88
    %s90 = sphi 0, %s88
    %s91 = sphi 0, %s90
    %s105 = sphi 0, %s91
    %s109 = sphi 0, %s109
    %s111 = sphi 0, %s109
    %s112 = sphi 0, %s111
    %s126 = sphi 0, %s112
    %s130 = sphi 0, %s130
    %s132 = sphi 0, %s130
    %s133 = sphi 0, %s132
    %s147 = sphi 0, %s133
    %s151 = sphi 0, %s151
    %s153 = sphi 0, %s151
    %s154 = sphi 0, %s153
    %s168 = sphi 0, %s154
    %s172 = sphi 0, %s172
    %s174 = sphi 0, %s172
    %s175 = sphi 0, %s174
    %s189 = sphi 0, %s175
    %s193 = sphi 0, %s193
    %s195 = sphi 0, %s193
    %s196 = sphi 0, %s195
    %s210 = sphi 0, %s196
    %s218 = sphi 0, %s220
    %s221 = sphi 0, %s218
    %s222 = sphi 0, %s221
    %s238 = sphi 0, %s222
  $region4: #{tpu_custom_call.1} parent=0 // loop_header_branch
    %17 = sbr.rel (%p15) target = $region8
  $region5: #{tpu_custom_call.1} parent=0 // loop_body
    %s19 = ssub.s32 %s14, 1
    %s20 = ssub.s32 %s14, 2
    %s27 = sadd.s32 1, %s22
    %p28 = scmp.ge.s32.totalorder %s27, 1
    %s29 = scalar_select %p28, 0, %s27
    %s30 = sadd.s32 1, %s21
    %s31 = scalar_select %p28, %s30, %s21
    %p32 = scmp.ge.s32.totalorder %s31, 2
    %s33 = scalar_select %p32, 0, %s31
    %s34 = ssub.s32 %s21, %s33
    %s35 = ssub.s32 %s22, %s29
    %s36 = sor.u32 %s34, %s35
    %p37 = scmp.eq.s32.totalorder %s36, 0
    %s39 = sadd.s32 %s38, 1
    %s40 = scalar_select %p37, %s38, %s39
    %p43 = pneg %p37
    %p44 = scmp.eq.s32.totalorder %s14, 1
    %p45 = por %p43, %p44
    %p46 = scmp.ne.s32.totalorder %s38, %s41
    %p47 = scmp.eq.s32.totalorder %s14, 0
    %p48 = por %p46, %p47
    %p49 = scmp.ne.s32.totalorder %s38, %s41
    %p50 = scmp.eq.s32.totalorder %s19, 1
    %p51 = por %p49, %p50
    %p52 = scmp.ne.s32.totalorder %s41, %s42
    %p53 = scmp.eq.s32.totalorder %s19, 0
    %p54 = por %p52, %p53
    %p55 = scmp.ne.s32.totalorder %s41, %s42
    %p56 = scmp.eq.s32.totalorder %s20, 1
    %p57 = por %p55, %p56
    %p59 = scmp.ne.s32.totalorder %s42, %s58
    %p60 = scmp.eq.s32.totalorder %s20, 0
    %p61 = por %p59, %p60
    %s62 = ssub.s32 %s21, %s33
    %p63 = scmp.eq.s32.totalorder %s62, 0
    %s65 = sadd.s32 %s64, 1
    %s66 = scalar_select %p63, %s64, %s65
    %p69 = pneg %p63
    %p70 = scmp.eq.s32.totalorder %s14, 1
    %p71 = por %p69, %p70
    %p72 = scmp.ne.s32.totalorder %s64, %s67
    %p73 = scmp.eq.s32.totalorder %s14, 0
    %p74 = por %p72, %p73
    %p75 = scmp.ne.s32.totalorder %s64, %s67
    %p76 = scmp.eq.s32.totalorder %s19, 1
    %p77 = por %p75, %p76
    %p78 = scmp.ne.s32.totalorder %s67, %s68
    %p79 = scmp.eq.s32.totalorder %s19, 0
    %p80 = por %p78, %p79
    %p81 = scmp.ne.s32.totalorder %s67, %s68
    %p82 = scmp.eq.s32.totalorder %s20, 1
    %p83 = por %p81, %p82
    %p85 = scmp.ne.s32.totalorder %s68, %s84
    %p86 = scmp.eq.s32.totalorder %s20, 0
    %p87 = por %p85, %p86
    %s89 = sadd.s32 %s88, 1
    %p92 = scmp.eq.s32.totalorder %s14, 1
    %p93 = scmp.ne.s32.totalorder %s88, %s90
    %p94 = scmp.eq.s32.totalorder %s14, 0
    %p95 = por %p93, %p94
    %p96 = scmp.ne.s32.totalorder %s88, %s90
    %p97 = scmp.eq.s32.totalorder %s19, 1
    %p98 = por %p96, %p97
    %p99 = scmp.ne.s32.totalorder %s90, %s91
    %p100 = scmp.eq.s32.totalorder %s19, 0
    %p101 = por %p99, %p100
    %p102 = scmp.ne.s32.totalorder %s90, %s91
    %p103 = scmp.eq.s32.totalorder %s20, 1
    %p104 = por %p102, %p103
    %p106 = scmp.ne.s32.totalorder %s91, %s105
    %p107 = scmp.eq.s32.totalorder %s20, 0
    %p108 = por %p106, %p107
    %s110 = sadd.s32 %s109, 1
    %p113 = scmp.eq.s32.totalorder %s14, 1
    %p114 = scmp.ne.s32.totalorder %s109, %s111
    %p115 = scmp.eq.s32.totalorder %s14, 0
    %p116 = por %p114, %p115
    %p117 = scmp.ne.s32.totalorder %s109, %s111
    %p118 = scmp.eq.s32.totalorder %s19, 1
    %p119 = por %p117, %p118
    %p120 = scmp.ne.s32.totalorder %s111, %s112
    %p121 = scmp.eq.s32.totalorder %s19, 0
    %p122 = por %p120, %p121
    %p123 = scmp.ne.s32.totalorder %s111, %s112
    %p124 = scmp.eq.s32.totalorder %s20, 1
    %p125 = por %p123, %p124
    %p127 = scmp.ne.s32.totalorder %s112, %s126
    %p128 = scmp.eq.s32.totalorder %s20, 0
    %p129 = por %p127, %p128
    %s131 = sadd.s32 %s130, 1
    %p134 = scmp.eq.s32.totalorder %s14, 1
    %p135 = scmp.ne.s32.totalorder %s130, %s132
    %p136 = scmp.eq.s32.totalorder %s14, 0
    %p137 = por %p135, %p136
    %p138 = scmp.ne.s32.totalorder %s130, %s132
    %p139 = scmp.eq.s32.totalorder %s19, 1
    %p140 = por %p138, %p139
    %p141 = scmp.ne.s32.totalorder %s132, %s133
    %p142 = scmp.eq.s32.totalorder %s19, 0
    %p143 = por %p141, %p142
    %p144 = scmp.ne.s32.totalorder %s132, %s133
    %p145 = scmp.eq.s32.totalorder %s20, 1
    %p146 = por %p144, %p145
    %p148 = scmp.ne.s32.totalorder %s133, %s147
    %p149 = scmp.eq.s32.totalorder %s20, 0
    %p150 = por %p148, %p149
    %s152 = sadd.s32 %s151, 1
    %p155 = scmp.eq.s32.totalorder %s14, 1
    %p156 = scmp.ne.s32.totalorder %s151, %s153
    %p157 = scmp.eq.s32.totalorder %s14, 0
    %p158 = por %p156, %p157
    %p159 = scmp.ne.s32.totalorder %s151, %s153
    %p160 = scmp.eq.s32.totalorder %s19, 1
    %p161 = por %p159, %p160
    %p162 = scmp.ne.s32.totalorder %s153, %s154
    %p163 = scmp.eq.s32.totalorder %s19, 0
    %p164 = por %p162, %p163
    %p165 = scmp.ne.s32.totalorder %s153, %s154
    %p166 = scmp.eq.s32.totalorder %s20, 1
    %p167 = por %p165, %p166
    %p169 = scmp.ne.s32.totalorder %s154, %s168
    %p170 = scmp.eq.s32.totalorder %s20, 0
    %p171 = por %p169, %p170
    %s173 = sadd.s32 %s172, 1
    %p176 = scmp.eq.s32.totalorder %s14, 1
    %p177 = scmp.ne.s32.totalorder %s172, %s174
    %p178 = scmp.eq.s32.totalorder %s14, 0
    %p179 = por %p177, %p178
    %p180 = scmp.ne.s32.totalorder %s172, %s174
    %p181 = scmp.eq.s32.totalorder %s19, 1
    %p182 = por %p180, %p181
    %p183 = scmp.ne.s32.totalorder %s174, %s175
    %p184 = scmp.eq.s32.totalorder %s19, 0
    %p185 = por %p183, %p184
    %p186 = scmp.ne.s32.totalorder %s174, %s175
    %p187 = scmp.eq.s32.totalorder %s20, 1
    %p188 = por %p186, %p187
    %p190 = scmp.ne.s32.totalorder %s175, %s189
    %p191 = scmp.eq.s32.totalorder %s20, 0
    %p192 = por %p190, %p191
    %s194 = sadd.s32 %s193, 1
    %p197 = scmp.eq.s32.totalorder %s14, 1
    %p198 = scmp.ne.s32.totalorder %s193, %s195
    %p199 = scmp.eq.s32.totalorder %s14, 0
    %p200 = por %p198, %p199
    %p201 = scmp.ne.s32.totalorder %s193, %s195
    %p202 = scmp.eq.s32.totalorder %s19, 1
    %p203 = por %p201, %p202
    %p204 = scmp.ne.s32.totalorder %s195, %s196
    %p205 = scmp.eq.s32.totalorder %s19, 0
    %p206 = por %p204, %p205
    %p207 = scmp.ne.s32.totalorder %s195, %s196
    %p208 = scmp.eq.s32.totalorder %s20, 1
    %p209 = por %p207, %p208
    %p211 = scmp.ne.s32.totalorder %s196, %s210
    %p212 = scmp.eq.s32.totalorder %s20, 0
    %p213 = por %p211, %p212
    %s214 = ssub.s32 %s21, %s33
    %s215 = ssub.s32 %s22, %s29
    %s216 = sor.u32 %s214, %s215
    %p217 = scmp.eq.s32.totalorder %s216, 0
    %s219 = sadd.s32 %s218, 1
    %s220 = scalar_select %p217, %s218, %s219
    %p223 = pneg %p217
    %p224 = scmp.eq.s32.totalorder %s14, 1
    %p225 = por %p223, %p224
    %p226 = scmp.ne.s32.totalorder %s218, %s221
    %p227 = scmp.eq.s32.totalorder %s14, 0
    %p228 = por %p226, %p227
    %p229 = scmp.ne.s32.totalorder %s218, %s221
    %p230 = scmp.eq.s32.totalorder %s19, 1
    %p231 = por %p229, %p230
    %p232 = scmp.ne.s32.totalorder %s221, %s222
    %p233 = scmp.eq.s32.totalorder %s19, 0
    %p234 = por %p232, %p233
    %p235 = scmp.ne.s32.totalorder %s221, %s222
    %p236 = scmp.eq.s32.totalorder %s20, 1
    %p237 = por %p235, %p236
    %p239 = scmp.ne.s32.totalorder %s222, %s238
    %p240 = scmp.eq.s32.totalorder %s20, 0
    %p241 = por %p239, %p240
    %p242 = scmp.le.s32.totalorder 1, %s14
    %p243 = scmp.lt.s32.totalorder %s14, 3
    %p244 = pnand %p242, %p243
    %p245 = pneg %p244
    // Predicated region
    $region9: #{tpu_custom_call.1} parent=5 // pred_check
      _
    $region10: #{tpu_custom_call.1} parent=5 // pred_check_branch
      %247 = sbr.rel (%p244) target = $region12
    $region11: #{tpu_custom_call.1} parent=5 // pred_region
      %s248 = ssub.s32 %s14, 1
      // Predicated region
      $region13: #{tpu_custom_call.1} parent=11 // pred_check
        %p249 = pneg %p101
      $region14: #{tpu_custom_call.1} parent=11 // pred_check_branch
        %251 = sbr.rel (%p249) target = $region16
      $region15: #{tpu_custom_call.1} parent=11 // pred_region
        _
      $region16: #{tpu_custom_call.1} parent=11 // pred_fallthru
        _
      // Predicated region
      $region17: #{tpu_custom_call.1} parent=11 // pred_check
        %p252 = pneg %p122
      $region18: #{tpu_custom_call.1} parent=11 // pred_check_branch
        %254 = sbr.rel (%p252) target = $region20
      $region19: #{tpu_custom_call.1} parent=11 // pred_region
        _
      $region20: #{tpu_custom_call.1} parent=11 // pred_fallthru
        _
      // Predicated region
      $region21: #{tpu_custom_call.1} parent=11 // pred_check
        %p255 = pneg %p143
      $region22: #{tpu_custom_call.1} parent=11 // pred_check_branch
        %257 = sbr.rel (%p255) target = $region24
      $region23: #{tpu_custom_call.1} parent=11 // pred_region
        _
      $region24: #{tpu_custom_call.1} parent=11 // pred_fallthru
        _
      // Predicated region
      $region25: #{tpu_custom_call.1} parent=11 // pred_check
        %p258 = pneg %p164
      $region26: #{tpu_custom_call.1} parent=11 // pred_check_branch
        %260 = sbr.rel (%p258) target = $region28
      $region27: #{tpu_custom_call.1} parent=11 // pred_region
        _
      $region28: #{tpu_custom_call.1} parent=11 // pred_fallthru
        _
      // Predicated region
      $region29: #{tpu_custom_call.1} parent=11 // pred_check
        %p261 = pneg %p185
      $region30: #{tpu_custom_call.1} parent=11 // pred_check_branch
        %263 = sbr.rel (%p261) target = $region32
      $region31: #{tpu_custom_call.1} parent=11 // pred_region
        _
      $region32: #{tpu_custom_call.1} parent=11 // pred_fallthru
        _
      // Predicated region
      $region33: #{tpu_custom_call.1} parent=11 // pred_check
        %p264 = pneg %p206
      $region34: #{tpu_custom_call.1} parent=11 // pred_check_branch
        %266 = sbr.rel (%p264) target = $region36
      $region35: #{tpu_custom_call.1} parent=11 // pred_region
        _
      $region36: #{tpu_custom_call.1} parent=11 // pred_fallthru
        _
    $region12: #{tpu_custom_call.1} parent=5 // pred_fallthru
      _
    %p267 = scmp.lt.s32.totalorder %s14, 2
    // Predicated region
    $region37: #{tpu_custom_call.1} parent=5 // pred_check
      %p268 = pneg %p267
    $region38: #{tpu_custom_call.1} parent=5 // pred_check_branch
      %270 = sbr.rel (%p268) target = $region40
    $region39: #{tpu_custom_call.1} parent=5 // pred_region
      // Predicated region
      $region41: #{tpu_custom_call.1} parent=39 // pred_check
        %p271 = pneg %p48
      $region42: #{tpu_custom_call.1} parent=39 // pred_check_branch
        %273 = sbr.rel (%p271) target = $region44
      $region43: #{tpu_custom_call.1} parent=39 // pred_region
        %s274 = smul.u32 7, %s22
        %p275 = scmp.lt.s32.totalorder %s21, 1
        %s276 = scalar_select %p275, %s21, 1
        %p277 = scmp.lt.s32.totalorder %s274, 6
        %s278 = scalar_select %p277, %s274, 6
        %s279 = smul.addr %s276, 35
        %s280 = sadd.s32 %s278, %s279
        %s281 = smul.addr %s280, 8
        %s282 = scalar_lea.vmem %s0, %s281
        %s283 = smul.u32 7, %s22
      $region44: #{tpu_custom_call.1} parent=39 // pred_fallthru
        _
      // Predicated region
      $region45: #{tpu_custom_call.1} parent=39 // pred_check
        %p284 = pneg %p74
      $region46: #{tpu_custom_call.1} parent=39 // pred_check_branch
        %286 = sbr.rel (%p284) target = $region48
      $region47: #{tpu_custom_call.1} parent=39 // pred_region
        %p287 = scmp.lt.s32.totalorder %s21, 1
        %s288 = scalar_select %p287, %s21, 1
        %s289 = smul.addr %s288, 8
        %s290 = smul.addr %s289, 8
        %s291 = scalar_lea.vmem %s1, %s290
      $region48: #{tpu_custom_call.1} parent=39 // pred_fallthru
        _
    $region40: #{tpu_custom_call.1} parent=5 // pred_fallthru
      _
    %p292 = scmp.le.s32.totalorder 1, %s14
    %p293 = scmp.lt.s32.totalorder %s14, 3
    %p294 = pnand %p292, %p293
    %p295 = pneg %p294
    // Predicated region
    $region49: #{tpu_custom_call.1} parent=5 // pred_check
      _
    $region50: #{tpu_custom_call.1} parent=5 // pred_check_branch
      %297 = sbr.rel (%p294) target = $region52
    $region51: #{tpu_custom_call.1} parent=5 // pred_region
      %s298 = ssub.s32 %s14, 1
      %s299 = smul.u32 7, %s24
      %p300 = scmp.lt.s32.totalorder %s23, 1
      %s301 = scalar_select %p300, %s23, 1
      %p302 = scmp.lt.s32.totalorder %s299, 6
      %s303 = scalar_select %p302, %s299, 6
      %s304 = smul.addr %s301, 35
      %s305 = sadd.s32 %s303, %s304
      %s306 = smul.addr %s305, 8
      %s307 = scalar_lea.vmem %s0, %s306
      %p308 = pneg %p54
      %p309 = pneg %p51
      %p310 = scmp.lt.s32.totalorder %s23, 1
      %s311 = scalar_select %p310, %s23, 1
      %s312 = smul.addr %s311, 8
      %s313 = smul.addr %s312, 8
      %s314 = scalar_lea.vmem %s1, %s313
      %p315 = pneg %p80
      %p316 = pneg %p77
      %p317 = pneg %p101
      %p318 = pneg %p98
      %p319 = pneg %p122
      %p320 = pneg %p119
      %p321 = pneg %p143
      %p322 = pneg %p140
      %p323 = pneg %p164
      %p324 = pneg %p161
      %p325 = pneg %p185
      %p326 = pneg %p182
      %p327 = pneg %p206
      %p328 = pneg %p203
      %p329 = pneg %p234
      %p330 = pneg %p231
      %s331 = smul.u32 7, %s24
      %p332 = scmp.lt.s32.totalorder %s23, 1
      %s333 = scalar_select %p332, %s23, 1
      %p334 = scmp.lt.s32.totalorder %s331, 6
      %s335 = scalar_select %p334, %s331, 6
      %s336 = smul.addr %s333, 35
      %s337 = sadd.s32 %s335, %s336
      %s338 = smul.addr %s337, 8
      %s339 = scalar_lea.vmem %s8, %s338
      %s340 = smul.u32 7, %s24
      %p341 = scmp.lt.s32.totalorder %s23, 1
      %s342 = scalar_select %p341, %s23, 1
      %p343 = scmp.lt.s32.totalorder %s340, 6
      %s344 = scalar_select %p343, %s340, 6
      %s345 = smul.addr %s342, 35
      %s346 = sadd.s32 %s344, %s345
      %s347 = smul.addr %s346, 8
      %s348 = scalar_lea.vmem %s0, %s347
      %s349 = smul.u32 7, %s24
      %p350 = scmp.lt.s32.totalorder %s23, 1
      %s351 = scalar_select %p350, %s23, 1
      %s352 = smul.addr %s351, 8
      %s353 = smul.addr %s352, 8
      %s354 = scalar_lea.vmem %s1, %s353
      %s355 = smul.u32 7, %s24
      %p356 = scmp.lt.s32.totalorder %s23, 1
      %s357 = scalar_select %p356, %s23, 1
      %p358 = scmp.lt.s32.totalorder %s355, 6
      %s359 = scalar_select %p358, %s355, 6
      %s360 = smul.addr %s357, 35
      %s361 = sadd.s32 %s359, %s360
      %s362 = smul.addr %s361, 8
      %s363 = scalar_lea.vmem %s8, %s362
      %s364 = smul.u32 7, %s24
      %v365 = vld [vmem:[%s2] sm:$0xff]
      %v366 = vld [vmem:[%s2 + $0x8] sm:$0xff]
      %v367 = vld [vmem:[%s2 + $0x10] sm:$0xff]
      %v368 = vld [vmem:[%s2 + $0x18] sm:$0xff]
      %v369 = vld [vmem:[%s2 + $0x20] sm:$0xff]
      %v370 = vld [vmem:[%s2 + $0x28] sm:$0xff]
      %v371 = vld [vmem:[%s2 + $0x30] sm:$0xff]
      %v372 = vld [vmem:[%s2 + $0x38] sm:$0xff]
      %v373 = vld [vmem:[%s2 + $0x40] sm:$0xff]
      %v374 = vld [vmem:[%s2 + $0x48] sm:$0xff]
      %v375 = vld [vmem:[%s2 + $0x50] sm:$0xff]
      %v376 = vld [vmem:[%s2 + $0x58] sm:$0xff]
      %v377 = vld [vmem:[%s2 + $0x60] sm:$0xff]
      %v378 = vld [vmem:[%s2 + $0x68] sm:$0xff]
      %v379 = vld [vmem:[%s2 + $0x70] sm:$0xff]
      %v380 = vld [vmem:[%s2 + $0x78] sm:$0xff]
      %v381 = vld [vmem:[%s348] sm:$0xff]
      %v382 = vld [vmem:[%s348 + $0x8] sm:$0xff]
      %v383 = vld [vmem:[%s348 + $0x10] sm:$0xff]
      %v384 = vld [vmem:[%s348 + $0x18] sm:$0xff]
      %v385 = vld [vmem:[%s348 + $0x20] sm:$0xff]
      %v386 = vld [vmem:[%s348 + $0x28] sm:$0xff]
      %v387 = vld [vmem:[%s348 + $0x30] sm:$0xff]
      %v388 = vld [vmem:[%s348 + $0x38] sm:$0xff]
      %v389 = vld [vmem:[%s348 + $0x40] sm:$0xff]
      %v390 = vld [vmem:[%s348 + $0x48] sm:$0xff]
      %v391 = vld [vmem:[%s348 + $0x50] sm:$0xff]
      %v392 = vld [vmem:[%s348 + $0x58] sm:$0xff]
      %v393 = vld [vmem:[%s348 + $0x60] sm:$0xff]
      %v394 = vld [vmem:[%s348 + $0x68] sm:$0xff]
      %v395 = vld [vmem:[%s348 + $0x70] sm:$0xff]
      %v396 = vld [vmem:[%s348 + $0x78] sm:$0xff]
      %v397 = vld [vmem:[%s348 + $0x80] sm:$0xff]
      %v398 = vld [vmem:[%s348 + $0x88] sm:$0xff]
      %v399 = vld [vmem:[%s348 + $0x90] sm:$0xff]
      %v400 = vld [vmem:[%s348 + $0x98] sm:$0xff]
      %v401 = vld [vmem:[%s348 + $0xa0] sm:$0xff]
      %v402 = vld [vmem:[%s348 + $0xa8] sm:$0xff]
      %v403 = vld [vmem:[%s348 + $0xb0] sm:$0xff]
      %v404 = vld [vmem:[%s348 + $0xb8] sm:$0xff]
      %v405 = vld [vmem:[%s348 + $0xc0] sm:$0xff]
      %v406 = vld [vmem:[%s348 + $0xc8] sm:$0xff]
      %v407 = vld [vmem:[%s348 + $0xd0] sm:$0xff]
      %v408 = vld [vmem:[%s348 + $0xd8] sm:$0xff]
      %v409 = vld [vmem:[%s348 + $0xe0] sm:$0x7f]
      %v410 = vld [vmem:[%s348 + $0xe8] sm:$0x7f]
      %v411 = vld [vmem:[%s348 + $0xf0] sm:$0x7f]
      %v412 = vld [vmem:[%s348 + $0xf8] sm:$0x7f]
      %v413 = vld [vmem:[%s348 + $0x100] sm:$0x7f]
      %v414 = vld [vmem:[%s348 + $0x108] sm:$0x7f]
      %v415 = vld [vmem:[%s348 + $0x110] sm:$0x7f]
      %vm416 = vcmask 318464
      %v418 = vsel %vm416, %v365, 0
      %v421 = vsel %vm416, %v366, 0
      %v424 = vsel %vm416, %v367, 0
      %v427 = vsel %vm416, %v368, 0
      %v430 = vsel %vm416, %v369, 0
      %v433 = vsel %vm416, %v370, 0
      %v436 = vsel %vm416, %v371, 0
      %v439 = vsel %vm416, %v372, 0
      %v442 = vsel %vm416, %v373, 0
      %v445 = vsel %vm416, %v374, 0
      %v448 = vsel %vm416, %v375, 0
      %v451 = vsel %vm416, %v376, 0
      %v454 = vsel %vm416, %v377, 0
      %v457 = vsel %vm416, %v378, 0
      %v460 = vsel %vm416, %v379, 0
      %v463 = vsel %vm416, %v380, 0
      %vm465 = vcmask 1046528
      %v467 = vsel %vm465, %v409, 0
      %v470 = vsel %vm465, %v410, 0
      %v473 = vsel %vm465, %v411, 0
      %v476 = vsel %vm465, %v412, 0
      %v479 = vsel %vm465, %v413, 0
      %v482 = vsel %vm465, %v414, 0
      %v485 = vsel %vm465, %v415, 0
      %487 = vmatpush.msra.mxu0 0.0
      %488 = vmatpush.msra.mxu0 0.0
      %489 = vmatpush.msra.mxu0 0.0
      %490 = vmatpush.msra.mxu0 0.0
      %491 = vmatpush.msra.mxu0 0.0
      %492 = vmatpush.msra.mxu0 0.0
      %493 = vmatpush.msra.mxu0 0.0
      %494 = vmatpush.msra.mxu0 0.0
      %495 = vmatpush.msra.mxu0 0.0
      %496 = vmatpush.msra.mxu0 0.0
      %497 = vmatpush.msra.mxu0 0.0
      %498 = vmatpush.msra.mxu0 %v467
      %499 = vmatpush.msra.mxu0 %v402
      %500 = vmatpush.msra.mxu0 %v395
      %501 = vmatpush.msra.mxu0 %v388
      %502 = vmatpush.msra.mxu0 %v381
      %503 = vmatmul.f32.gmra.mxu0 %v418
      %v504 = vpop.f32.mrf.mxu0
      %v505 = vadd.f32 0.0, %v504
      %506 = vmatmul.f32.gmra.mxu0 %v421
      %v507 = vpop.f32.mrf.mxu0
      %v508 = vadd.f32 0.0, %v507
      %509 = vmatmul.f32.gmra.mxu0 %v424
      %v510 = vpop.f32.mrf.mxu0
      %v511 = vadd.f32 0.0, %v510
      %512 = vmatmul.f32.gmra.mxu0 %v427
      %v513 = vpop.f32.mrf.mxu0
      %v514 = vadd.f32 0.0, %v513
      %515 = vmatmul.f32.gmra.mxu0 %v430
      %v516 = vpop.f32.mrf.mxu0
      %v517 = vadd.f32 0.0, %v516
      %518 = vmatmul.f32.gmra.mxu0 %v433
      %v519 = vpop.f32.mrf.mxu0
      %v520 = vadd.f32 0.0, %v519
      %521 = vmatmul.f32.gmra.mxu0 %v436
      %v522 = vpop.f32.mrf.mxu0
      %v523 = vadd.f32 0.0, %v522
      %524 = vmatmul.f32.gmra.mxu0 %v439
      %v525 = vpop.f32.mrf.mxu0
      %v526 = vadd.f32 0.0, %v525
      %527 = vmatmul.f32.gmra.mxu0 %v442
      %v528 = vpop.f32.mrf.mxu0
      %v529 = vadd.f32 0.0, %v528
      %530 = vmatmul.f32.gmra.mxu0 %v445
      %v531 = vpop.f32.mrf.mxu0
      %v532 = vadd.f32 0.0, %v531
      %533 = vmatmul.f32.gmra.mxu0 %v448
      %v534 = vpop.f32.mrf.mxu0
      %v535 = vadd.f32 0.0, %v534
      %536 = vmatmul.f32.gmra.mxu0 %v451
      %v537 = vpop.f32.mrf.mxu0
      %v538 = vadd.f32 0.0, %v537
      %539 = vmatmul.f32.gmra.mxu0 %v454
      %v540 = vpop.f32.mrf.mxu0
      %v541 = vadd.f32 0.0, %v540
      %542 = vmatmul.f32.gmra.mxu0 %v457
      %v543 = vpop.f32.mrf.mxu0
      %v544 = vadd.f32 0.0, %v543
      %545 = vmatmul.f32.gmra.mxu0 %v460
      %v546 = vpop.f32.mrf.mxu0
      %v547 = vadd.f32 0.0, %v546
      %548 = vmatmul.f32.gmra.mxu0 %v463
      %v549 = vpop.f32.mrf.mxu0
      %v550 = vadd.f32 0.0, %v549
      %551 = vdwg.mxu0
      %552 = vmatpush.msra.mxu0 0.0
      %553 = vmatpush.msra.mxu0 0.0
      %554 = vmatpush.msra.mxu0 0.0
      %555 = vmatpush.msra.mxu0 0.0
      %556 = vmatpush.msra.mxu0 0.0
      %557 = vmatpush.msra.mxu0 0.0
      %558 = vmatpush.msra.mxu0 0.0
      %559 = vmatpush.msra.mxu0 0.0
      %560 = vmatpush.msra.mxu0 0.0
      %561 = vmatpush.msra.mxu0 0.0
      %562 = vmatpush.msra.mxu0 0.0
      %563 = vmatpush.msra.mxu0 %v470
      %564 = vmatpush.msra.mxu0 %v403
      %565 = vmatpush.msra.mxu0 %v396
      %566 = vmatpush.msra.mxu0 %v389
      %567 = vmatpush.msra.mxu0 %v382
      %568 = vmatmul.f32.gmra.mxu0 %v418
      %v569 = vpop.f32.mrf.mxu0
      %v570 = vadd.f32 0.0, %v569
      %571 = vmatmul.f32.gmra.mxu0 %v421
      %v572 = vpop.f32.mrf.mxu0
      %v573 = vadd.f32 0.0, %v572
      %574 = vmatmul.f32.gmra.mxu0 %v424
      %v575 = vpop.f32.mrf.mxu0
      %v576 = vadd.f32 0.0, %v575
      %577 = vmatmul.f32.gmra.mxu0 %v427
      %v578 = vpop.f32.mrf.mxu0
      %v579 = vadd.f32 0.0, %v578
      %580 = vmatmul.f32.gmra.mxu0 %v430
      %v581 = vpop.f32.mrf.mxu0
      %v582 = vadd.f32 0.0, %v581
      %583 = vmatmul.f32.gmra.mxu0 %v433
      %v584 = vpop.f32.mrf.mxu0
      %v585 = vadd.f32 0.0, %v584
      %586 = vmatmul.f32.gmra.mxu0 %v436
      %v587 = vpop.f32.mrf.mxu0
      %v588 = vadd.f32 0.0, %v587
      %589 = vmatmul.f32.gmra.mxu0 %v439
      %v590 = vpop.f32.mrf.mxu0
      %v591 = vadd.f32 0.0, %v590
      %592 = vmatmul.f32.gmra.mxu0 %v442
      %v593 = vpop.f32.mrf.mxu0
      %v594 = vadd.f32 0.0, %v593
      %595 = vmatmul.f32.gmra.mxu0 %v445
      %v596 = vpop.f32.mrf.mxu0
      %v597 = vadd.f32 0.0, %v596
      %598 = vmatmul.f32.gmra.mxu0 %v448
      %v599 = vpop.f32.mrf.mxu0
      %v600 = vadd.f32 0.0, %v599
      %601 = vmatmul.f32.gmra.mxu0 %v451
      %v602 = vpop.f32.mrf.mxu0
      %v603 = vadd.f32 0.0, %v602
      %604 = vmatmul.f32.gmra.mxu0 %v454
      %v605 = vpop.f32.mrf.mxu0
      %v606 = vadd.f32 0.0, %v605
      %607 = vmatmul.f32.gmra.mxu0 %v457
      %v608 = vpop.f32.mrf.mxu0
      %v609 = vadd.f32 0.0, %v608
      %610 = vmatmul.f32.gmra.mxu0 %v460
      %v611 = vpop.f32.mrf.mxu0
      %v612 = vadd.f32 0.0, %v611
      %613 = vmatmul.f32.gmra.mxu0 %v463
      %v614 = vpop.f32.mrf.mxu0
      %v615 = vadd.f32 0.0, %v614
      %616 = vdwg.mxu0
      %617 = vmatpush.msra.mxu0 0.0
      %618 = vmatpush.msra.mxu0 0.0
      %619 = vmatpush.msra.mxu0 0.0
      %620 = vmatpush.msra.mxu0 0.0
      %621 = vmatpush.msra.mxu0 0.0
      %622 = vmatpush.msra.mxu0 0.0
      %623 = vmatpush.msra.mxu0 0.0
      %624 = vmatpush.msra.mxu0 0.0
      %625 = vmatpush.msra.mxu0 0.0
      %626 = vmatpush.msra.mxu0 0.0
      %627 = vmatpush.msra.mxu0 0.0
      %628 = vmatpush.msra.mxu0 %v473
      %629 = vmatpush.msra.mxu0 %v404
      %630 = vmatpush.msra.mxu0 %v397
      %631 = vmatpush.msra.mxu0 %v390
      %632 = vmatpush.msra.mxu0 %v383
      %633 = vmatmul.f32.gmra.mxu0 %v418
      %v634 = vpop.f32.mrf.mxu0
      %v635 = vadd.f32 0.0, %v634
      %636 = vmatmul.f32.gmra.mxu0 %v421
      %v637 = vpop.f32.mrf.mxu0
      %v638 = vadd.f32 0.0, %v637
      %639 = vmatmul.f32.gmra.mxu0 %v424
      %v640 = vpop.f32.mrf.mxu0
      %v641 = vadd.f32 0.0, %v640
      %642 = vmatmul.f32.gmra.mxu0 %v427
      %v643 = vpop.f32.mrf.mxu0
      %v644 = vadd.f32 0.0, %v643
      %645 = vmatmul.f32.gmra.mxu0 %v430
      %v646 = vpop.f32.mrf.mxu0
      %v647 = vadd.f32 0.0, %v646
      %648 = vmatmul.f32.gmra.mxu0 %v433
      %v649 = vpop.f32.mrf.mxu0
      %v650 = vadd.f32 0.0, %v649
      %651 = vmatmul.f32.gmra.mxu0 %v436
      %v652 = vpop.f32.mrf.mxu0
      %v653 = vadd.f32 0.0, %v652
      %654 = vmatmul.f32.gmra.mxu0 %v439
      %v655 = vpop.f32.mrf.mxu0
      %v656 = vadd.f32 0.0, %v655
      %657 = vmatmul.f32.gmra.mxu0 %v442
      %v658 = vpop.f32.mrf.mxu0
      %v659 = vadd.f32 0.0, %v658
      %660 = vmatmul.f32.gmra.mxu0 %v445
      %v661 = vpop.f32.mrf.mxu0
      %v662 = vadd.f32 0.0, %v661
      %663 = vmatmul.f32.gmra.mxu0 %v448
      %v664 = vpop.f32.mrf.mxu0
      %v665 = vadd.f32 0.0, %v664
      %666 = vmatmul.f32.gmra.mxu0 %v451
      %v667 = vpop.f32.mrf.mxu0
      %v668 = vadd.f32 0.0, %v667
      %669 = vmatmul.f32.gmra.mxu0 %v454
      %v670 = vpop.f32.mrf.mxu0
      %v671 = vadd.f32 0.0, %v670
      %672 = vmatmul.f32.gmra.mxu0 %v457
      %v673 = vpop.f32.mrf.mxu0
      %v674 = vadd.f32 0.0, %v673
      %675 = vmatmul.f32.gmra.mxu0 %v460
      %v676 = vpop.f32.mrf.mxu0
      %v677 = vadd.f32 0.0, %v676
      %678 = vmatmul.f32.gmra.mxu0 %v463
      %v679 = vpop.f32.mrf.mxu0
      %v680 = vadd.f32 0.0, %v679
      %681 = vdwg.mxu0
      %682 = vmatpush.msra.mxu0 0.0
      %683 = vmatpush.msra.mxu0 0.0
      %684 = vmatpush.msra.mxu0 0.0
      %685 = vmatpush.msra.mxu0 0.0
      %686 = vmatpush.msra.mxu0 0.0
      %687 = vmatpush.msra.mxu0 0.0
      %688 = vmatpush.msra.mxu0 0.0
      %689 = vmatpush.msra.mxu0 0.0
      %690 = vmatpush.msra.mxu0 0.0
      %691 = vmatpush.msra.mxu0 0.0
      %692 = vmatpush.msra.mxu0 0.0
      %693 = vmatpush.msra.mxu0 %v476
      %694 = vmatpush.msra.mxu0 %v405
      %695 = vmatpush.msra.mxu0 %v398
      %696 = vmatpush.msra.mxu0 %v391
      %697 = vmatpush.msra.mxu0 %v384
      %698 = vmatmul.f32.gmra.mxu0 %v418
      %v699 = vpop.f32.mrf.mxu0
      %v700 = vadd.f32 0.0, %v699
      %701 = vmatmul.f32.gmra.mxu0 %v421
      %v702 = vpop.f32.mrf.mxu0
      %v703 = vadd.f32 0.0, %v702
      %704 = vmatmul.f32.gmra.mxu0 %v424
      %v705 = vpop.f32.mrf.mxu0
      %v706 = vadd.f32 0.0, %v705
      %707 = vmatmul.f32.gmra.mxu0 %v427
      %v708 = vpop.f32.mrf.mxu0
      %v709 = vadd.f32 0.0, %v708
      %710 = vmatmul.f32.gmra.mxu0 %v430
      %v711 = vpop.f32.mrf.mxu0
      %v712 = vadd.f32 0.0, %v711
      %713 = vmatmul.f32.gmra.mxu0 %v433
      %v714 = vpop.f32.mrf.mxu0
      %v715 = vadd.f32 0.0, %v714
      %716 = vmatmul.f32.gmra.mxu0 %v436
      %v717 = vpop.f32.mrf.mxu0
      %v718 = vadd.f32 0.0, %v717
      %719 = vmatmul.f32.gmra.mxu0 %v439
      %v720 = vpop.f32.mrf.mxu0
      %v721 = vadd.f32 0.0, %v720
      %722 = vmatmul.f32.gmra.mxu0 %v442
      %v723 = vpop.f32.mrf.mxu0
      %v724 = vadd.f32 0.0, %v723
      %725 = vmatmul.f32.gmra.mxu0 %v445
      %v726 = vpop.f32.mrf.mxu0
      %v727 = vadd.f32 0.0, %v726
      %728 = vmatmul.f32.gmra.mxu0 %v448
      %v729 = vpop.f32.mrf.mxu0
      %v730 = vadd.f32 0.0, %v729
      %731 = vmatmul.f32.gmra.mxu0 %v451
      %v732 = vpop.f32.mrf.mxu0
      %v733 = vadd.f32 0.0, %v732
      %734 = vmatmul.f32.gmra.mxu0 %v454
      %v735 = vpop.f32.mrf.mxu0
      %v736 = vadd.f32 0.0, %v735
      %737 = vmatmul.f32.gmra.mxu0 %v457
      %v738 = vpop.f32.mrf.mxu0
      %v739 = vadd.f32 0.0, %v738
      %740 = vmatmul.f32.gmra.mxu0 %v460
      %v741 = vpop.f32.mrf.mxu0
      %v742 = vadd.f32 0.0, %v741
      %743 = vmatmul.f32.gmra.mxu0 %v463
      %v744 = vpop.f32.mrf.mxu0
      %v745 = vadd.f32 0.0, %v744
      %746 = vdwg.mxu0
      %747 = vmatpush.msra.mxu0 0.0
      %748 = vmatpush.msra.mxu0 0.0
      %749 = vmatpush.msra.mxu0 0.0
      %750 = vmatpush.msra.mxu0 0.0
      %751 = vmatpush.msra.mxu0 0.0
      %752 = vmatpush.msra.mxu0 0.0
      %753 = vmatpush.msra.mxu0 0.0
      %754 = vmatpush.msra.mxu0 0.0
      %755 = vmatpush.msra.mxu0 0.0
      %756 = vmatpush.msra.mxu0 0.0
      %757 = vmatpush.msra.mxu0 0.0
      %758 = vmatpush.msra.mxu0 %v479
      %759 = vmatpush.msra.mxu0 %v406
      %760 = vmatpush.msra.mxu0 %v399
      %761 = vmatpush.msra.mxu0 %v392
      %762 = vmatpush.msra.mxu0 %v385
      %763 = vmatmul.f32.gmra.mxu0 %v418
      %v764 = vpop.f32.mrf.mxu0
      %v765 = vadd.f32 0.0, %v764
      %766 = vmatmul.f32.gmra.mxu0 %v421
      %v767 = vpop.f32.mrf.mxu0
      %v768 = vadd.f32 0.0, %v767
      %769 = vmatmul.f32.gmra.mxu0 %v424
      %v770 = vpop.f32.mrf.mxu0
      %v771 = vadd.f32 0.0, %v770
      %772 = vmatmul.f32.gmra.mxu0 %v427
      %v773 = vpop.f32.mrf.mxu0
      %v774 = vadd.f32 0.0, %v773
      %775 = vmatmul.f32.gmra.mxu0 %v430
      %v776 = vpop.f32.mrf.mxu0
      %v777 = vadd.f32 0.0, %v776
      %778 = vmatmul.f32.gmra.mxu0 %v433
      %v779 = vpop.f32.mrf.mxu0
      %v780 = vadd.f32 0.0, %v779
      %781 = vmatmul.f32.gmra.mxu0 %v436
      %v782 = vpop.f32.mrf.mxu0
      %v783 = vadd.f32 0.0, %v782
      %784 = vmatmul.f32.gmra.mxu0 %v439
      %v785 = vpop.f32.mrf.mxu0
      %v786 = vadd.f32 0.0, %v785
      %787 = vmatmul.f32.gmra.mxu0 %v442
      %v788 = vpop.f32.mrf.mxu0
      %v789 = vadd.f32 0.0, %v788
      %790 = vmatmul.f32.gmra.mxu0 %v445
      %v791 = vpop.f32.mrf.mxu0
      %v792 = vadd.f32 0.0, %v791
      %793 = vmatmul.f32.gmra.mxu0 %v448
      %v794 = vpop.f32.mrf.mxu0
      %v795 = vadd.f32 0.0, %v794
      %796 = vmatmul.f32.gmra.mxu0 %v451
      %v797 = vpop.f32.mrf.mxu0
      %v798 = vadd.f32 0.0, %v797
      %799 = vmatmul.f32.gmra.mxu0 %v454
      %v800 = vpop.f32.mrf.mxu0
      %v801 = vadd.f32 0.0, %v800
      %802 = vmatmul.f32.gmra.mxu0 %v457
      %v803 = vpop.f32.mrf.mxu0
      %v804 = vadd.f32 0.0, %v803
      %805 = vmatmul.f32.gmra.mxu0 %v460
      %v806 = vpop.f32.mrf.mxu0
      %v807 = vadd.f32 0.0, %v806
      %808 = vmatmul.f32.gmra.mxu0 %v463
      %v809 = vpop.f32.mrf.mxu0
      %v810 = vadd.f32 0.0, %v809
      %811 = vdwg.mxu0
      %812 = vmatpush.msra.mxu0 0.0
      %813 = vmatpush.msra.mxu0 0.0
      %814 = vmatpush.msra.mxu0 0.0
      %815 = vmatpush.msra.mxu0 0.0
      %816 = vmatpush.msra.mxu0 0.0
      %817 = vmatpush.msra.mxu0 0.0
      %818 = vmatpush.msra.mxu0 0.0
      %819 = vmatpush.msra.mxu0 0.0
      %820 = vmatpush.msra.mxu0 0.0
      %821 = vmatpush.msra.mxu0 0.0
      %822 = vmatpush.msra.mxu0 0.0
      %823 = vmatpush.msra.mxu0 %v482
      %824 = vmatpush.msra.mxu0 %v407
      %825 = vmatpush.msra.mxu0 %v400
      %826 = vmatpush.msra.mxu0 %v393
      %827 = vmatpush.msra.mxu0 %v386
      %828 = vmatmul.f32.gmra.mxu0 %v418
      %v829 = vpop.f32.mrf.mxu0
      %v830 = vadd.f32 0.0, %v829
      %831 = vmatmul.f32.gmra.mxu0 %v421
      %v832 = vpop.f32.mrf.mxu0
      %v833 = vadd.f32 0.0, %v832
      %834 = vmatmul.f32.gmra.mxu0 %v424
      %v835 = vpop.f32.mrf.mxu0
      %v836 = vadd.f32 0.0, %v835
      %837 = vmatmul.f32.gmra.mxu0 %v427
      %v838 = vpop.f32.mrf.mxu0
      %v839 = vadd.f32 0.0, %v838
      %840 = vmatmul.f32.gmra.mxu0 %v430
      %v841 = vpop.f32.mrf.mxu0
      %v842 = vadd.f32 0.0, %v841
      %843 = vmatmul.f32.gmra.mxu0 %v433
      %v844 = vpop.f32.mrf.mxu0
      %v845 = vadd.f32 0.0, %v844
      %846 = vmatmul.f32.gmra.mxu0 %v436
      %v847 = vpop.f32.mrf.mxu0
      %v848 = vadd.f32 0.0, %v847
      %849 = vmatmul.f32.gmra.mxu0 %v439
      %v850 = vpop.f32.mrf.mxu0
      %v851 = vadd.f32 0.0, %v850
      %852 = vmatmul.f32.gmra.mxu0 %v442
      %v853 = vpop.f32.mrf.mxu0
      %v854 = vadd.f32 0.0, %v853
      %855 = vmatmul.f32.gmra.mxu0 %v445
      %v856 = vpop.f32.mrf.mxu0
      %v857 = vadd.f32 0.0, %v856
      %858 = vmatmul.f32.gmra.mxu0 %v448
      %v859 = vpop.f32.mrf.mxu0
      %v860 = vadd.f32 0.0, %v859
      %861 = vmatmul.f32.gmra.mxu0 %v451
      %v862 = vpop.f32.mrf.mxu0
      %v863 = vadd.f32 0.0, %v862
      %864 = vmatmul.f32.gmra.mxu0 %v454
      %v865 = vpop.f32.mrf.mxu0
      %v866 = vadd.f32 0.0, %v865
      %867 = vmatmul.f32.gmra.mxu0 %v457
      %v868 = vpop.f32.mrf.mxu0
      %v869 = vadd.f32 0.0, %v868
      %870 = vmatmul.f32.gmra.mxu0 %v460
      %v871 = vpop.f32.mrf.mxu0
      %v872 = vadd.f32 0.0, %v871
      %873 = vmatmul.f32.gmra.mxu0 %v463
      %v874 = vpop.f32.mrf.mxu0
      %v875 = vadd.f32 0.0, %v874
      %876 = vdwg.mxu0
      %877 = vmatpush.msra.mxu0 0.0
      %878 = vmatpush.msra.mxu0 0.0
      %879 = vmatpush.msra.mxu0 0.0
      %880 = vmatpush.msra.mxu0 0.0
      %881 = vmatpush.msra.mxu0 0.0
      %882 = vmatpush.msra.mxu0 0.0
      %883 = vmatpush.msra.mxu0 0.0
      %884 = vmatpush.msra.mxu0 0.0
      %885 = vmatpush.msra.mxu0 0.0
      %886 = vmatpush.msra.mxu0 0.0
      %887 = vmatpush.msra.mxu0 0.0
      %888 = vmatpush.msra.mxu0 %v485
      %889 = vmatpush.msra.mxu0 %v408
      %890 = vmatpush.msra.mxu0 %v401
      %891 = vmatpush.msra.mxu0 %v394
      %892 = vmatpush.msra.mxu0 %v387
      %893 = vmatmul.f32.gmra.mxu0 %v418
      %v894 = vpop.f32.mrf.mxu0
      %v895 = vadd.f32 0.0, %v894
      %896 = vmatmul.f32.gmra.mxu0 %v421
      %v897 = vpop.f32.mrf.mxu0
      %v898 = vadd.f32 0.0, %v897
      %899 = vmatmul.f32.gmra.mxu0 %v424
      %v900 = vpop.f32.mrf.mxu0
      %v901 = vadd.f32 0.0, %v900
      %902 = vmatmul.f32.gmra.mxu0 %v427
      %v903 = vpop.f32.mrf.mxu0
      %v904 = vadd.f32 0.0, %v903
      %905 = vmatmul.f32.gmra.mxu0 %v430
      %v906 = vpop.f32.mrf.mxu0
      %v907 = vadd.f32 0.0, %v906
      %908 = vmatmul.f32.gmra.mxu0 %v433
      %v909 = vpop.f32.mrf.mxu0
      %v910 = vadd.f32 0.0, %v909
      %911 = vmatmul.f32.gmra.mxu0 %v436
      %v912 = vpop.f32.mrf.mxu0
      %v913 = vadd.f32 0.0, %v912
      %914 = vmatmul.f32.gmra.mxu0 %v439
      %v915 = vpop.f32.mrf.mxu0
      %v916 = vadd.f32 0.0, %v915
      %917 = vmatmul.f32.gmra.mxu0 %v442
      %v918 = vpop.f32.mrf.mxu0
      %v919 = vadd.f32 0.0, %v918
      %920 = vmatmul.f32.gmra.mxu0 %v445
      %v921 = vpop.f32.mrf.mxu0
      %v922 = vadd.f32 0.0, %v921
      %923 = vmatmul.f32.gmra.mxu0 %v448
      %v924 = vpop.f32.mrf.mxu0
      %v925 = vadd.f32 0.0, %v924
      %926 = vmatmul.f32.gmra.mxu0 %v451
      %v927 = vpop.f32.mrf.mxu0
      %v928 = vadd.f32 0.0, %v927
      %929 = vmatmul.f32.gmra.mxu0 %v454
      %v930 = vpop.f32.mrf.mxu0
      %v931 = vadd.f32 0.0, %v930
      %932 = vmatmul.f32.gmra.mxu0 %v457
      %v933 = vpop.f32.mrf.mxu0
      %v934 = vadd.f32 0.0, %v933
      %935 = vmatmul.f32.gmra.mxu0 %v460
      %v936 = vpop.f32.mrf.mxu0
      %v937 = vadd.f32 0.0, %v936
      %938 = vmatmul.f32.gmra.mxu0 %v463
      %v939 = vpop.f32.mrf.mxu0
      %v940 = vadd.f32 0.0, %v939
      %941 = vdwg.mxu0
      %v942 = vld [vmem:[%s7] sm:$0xff]
      %v943 = vld [vmem:[%s7 + $0x8] sm:$0xff]
      %v944 = vld [vmem:[%s7 + $0x10] sm:$0xff]
      %v945 = vld [vmem:[%s7 + $0x18] sm:$0xff]
      %v946 = vld [vmem:[%s7 + $0x20] sm:$0xff]
      %v947 = vld [vmem:[%s7 + $0x28] sm:$0xff]
      %v948 = vld [vmem:[%s7 + $0x30] sm:$0xff]
      %v949 = vld [vmem:[%s7 + $0x38] sm:$0xff]
      %v950 = vld [vmem:[%s7 + $0x40] sm:$0xff]
      %v951 = vld [vmem:[%s7 + $0x48] sm:$0xff]
      %v952 = vld [vmem:[%s7 + $0x50] sm:$0xff]
      %v953 = vld [vmem:[%s7 + $0x58] sm:$0xff]
      %v954 = vld [vmem:[%s7 + $0x60] sm:$0xff]
      %v955 = vld [vmem:[%s7 + $0x68] sm:$0xff]
      %v956 = vld [vmem:[%s7 + $0x70] sm:$0xff]
      %v957 = vld [vmem:[%s7 + $0x78] sm:$0xff]
      %v958 = vld [vmem:[%s7 + $0x80] sm:$0xff]
      %v959 = vld [vmem:[%s7 + $0x88] sm:$0xff]
      %v960 = vld [vmem:[%s7 + $0x90] sm:$0xff]
      %v961 = vld [vmem:[%s7 + $0x98] sm:$0xff]
      %v962 = vld [vmem:[%s7 + $0xa0] sm:$0xff]
      %v963 = vld [vmem:[%s7 + $0xa8] sm:$0xff]
      %v964 = vld [vmem:[%s7 + $0xb0] sm:$0xff]
      %v965 = vld [vmem:[%s7 + $0xb8] sm:$0xff]
      %v966 = vld [vmem:[%s7 + $0xc0] sm:$0x1]
      %v967 = vld [vmem:[%s354] sm:$0xff]
      %v968 = vld [vmem:[%s354 + $0x8] sm:$0xff]
      %v969 = vld [vmem:[%s354 + $0x10] sm:$0xff]
      %v970 = vld [vmem:[%s354 + $0x18] sm:$0xff]
      %v971 = vld [vmem:[%s354 + $0x20] sm:$0xff]
      %v972 = vld [vmem:[%s354 + $0x28] sm:$0xff]
      %v973 = vld [vmem:[%s354 + $0x30] sm:$0xff]
      %v974 = vld [vmem:[%s354 + $0x38] sm:$0xff]
      %976 = vset.pattern.permute.xlu0 0
      %977 = vperm.xlu0 %976, %v967
      %v978 = vpop.permute.xlu0 %977
      %981 = vset.pattern.permute.xlu0 0
      %982 = vperm.xlu0 %981, %v968
      %v983 = vpop.permute.xlu0 %982
      %986 = vset.pattern.permute.xlu0 0
      %987 = vperm.xlu0 %986, %v969
      %v988 = vpop.permute.xlu0 %987
      %991 = vset.pattern.permute.xlu0 0
      %992 = vperm.xlu0 %991, %v970
      %v993 = vpop.permute.xlu0 %992
      %996 = vset.pattern.permute.xlu0 0
      %997 = vperm.xlu0 %996, %v971
      %v998 = vpop.permute.xlu0 %997
      %1001 = vset.pattern.permute.xlu0 0
      %1002 = vperm.xlu0 %1001, %v972
      %v1003 = vpop.permute.xlu0 %1002
      %1006 = vset.pattern.permute.xlu0 0
      %1007 = vperm.xlu0 %1006, %v973
      %v1008 = vpop.permute.xlu0 %1007
      %1011 = vset.pattern.permute.xlu0 0
      %1012 = vperm.xlu0 %1011, %v974
      %v1013 = vpop.permute.xlu0 %1012
      %v1015 = vadd.f32 %v505, %v978
      %v1016 = vadd.f32 %v570, %v978
      %v1017 = vadd.f32 %v635, %v978
      %v1018 = vadd.f32 %v700, %v978
      %v1019 = vadd.f32 %v765, %v978
      %v1020 = vadd.f32 %v830, %v978
      %v1021 = vadd.f32 %v895, %v978
      %v1022 = vadd.f32 %v508, %v983
      %v1023 = vadd.f32 %v573, %v983
      %v1024 = vadd.f32 %v638, %v983
      %v1025 = vadd.f32 %v703, %v983
      %v1026 = vadd.f32 %v768, %v983
      %v1027 = vadd.f32 %v833, %v983
      %v1028 = vadd.f32 %v898, %v983
      %v1029 = vadd.f32 %v511, %v988
      %v1030 = vadd.f32 %v576, %v988
      %v1031 = vadd.f32 %v641, %v988
      %v1032 = vadd.f32 %v706, %v988
      %v1033 = vadd.f32 %v771, %v988
      %v1034 = vadd.f32 %v836, %v988
      %v1035 = vadd.f32 %v901, %v988
      %v1036 = vadd.f32 %v514, %v993
      %v1037 = vadd.f32 %v579, %v993
      %v1038 = vadd.f32 %v644, %v993
      %v1039 = vadd.f32 %v709, %v993
      %v1040 = vadd.f32 %v774, %v993
      %v1041 = vadd.f32 %v839, %v993
      %v1042 = vadd.f32 %v904, %v993
      %v1043 = vadd.f32 %v517, %v998
      %v1044 = vadd.f32 %v582, %v998
      %v1045 = vadd.f32 %v647, %v998
      %v1046 = vadd.f32 %v712, %v998
      %v1047 = vadd.f32 %v777, %v998
      %v1048 = vadd.f32 %v842, %v998
      %v1049 = vadd.f32 %v907, %v998
      %v1050 = vadd.f32 %v520, %v1003
      %v1051 = vadd.f32 %v585, %v1003
      %v1052 = vadd.f32 %v650, %v1003
      %v1053 = vadd.f32 %v715, %v1003
      %v1054 = vadd.f32 %v780, %v1003
      %v1055 = vadd.f32 %v845, %v1003
      %v1056 = vadd.f32 %v910, %v1003
      %v1057 = vadd.f32 %v523, %v1008
      %v1058 = vadd.f32 %v588, %v1008
      %v1059 = vadd.f32 %v653, %v1008
      %v1060 = vadd.f32 %v718, %v1008
      %v1061 = vadd.f32 %v783, %v1008
      %v1062 = vadd.f32 %v848, %v1008
      %v1063 = vadd.f32 %v913, %v1008
      %v1064 = vadd.f32 %v526, %v1013
      %v1065 = vadd.f32 %v591, %v1013
      %v1066 = vadd.f32 %v656, %v1013
      %v1067 = vadd.f32 %v721, %v1013
      %v1068 = vadd.f32 %v786, %v1013
      %v1069 = vadd.f32 %v851, %v1013
      %v1070 = vadd.f32 %v916, %v1013
      %v1071 = vmul.f32 %v1015, 100.0
      %v1072 = vmul.f32 %v1016, 100.0
      %v1073 = vmul.f32 %v1017, 100.0
      %v1074 = vmul.f32 %v1018, 100.0
      %v1075 = vmul.f32 %v1019, 100.0
      %v1076 = vmul.f32 %v1020, 100.0
      %v1077 = vmul.f32 %v1021, 100.0
      %v1078 = vmul.f32 %v1022, 100.0
      %v1079 = vmul.f32 %v1023, 100.0
      %v1080 = vmul.f32 %v1024, 100.0
      %v1081 = vmul.f32 %v1025, 100.0
      %v1082 = vmul.f32 %v1026, 100.0
      %v1083 = vmul.f32 %v1027, 100.0
      %v1084 = vmul.f32 %v1028, 100.0
      %v1085 = vmul.f32 %v1029, 100.0
      %v1086 = vmul.f32 %v1030, 100.0
      %v1087 = vmul.f32 %v1031, 100.0
      %v1088 = vmul.f32 %v1032, 100.0
      %v1089 = vmul.f32 %v1033, 100.0
      %v1090 = vmul.f32 %v1034, 100.0
      %v1091 = vmul.f32 %v1035, 100.0
      %v1092 = vmul.f32 %v1036, 100.0
      %v1093 = vmul.f32 %v1037, 100.0
      %v1094 = vmul.f32 %v1038, 100.0
      %v1095 = vmul.f32 %v1039, 100.0
      %v1096 = vmul.f32 %v1040, 100.0
      %v1097 = vmul.f32 %v1041, 100.0
      %v1098 = vmul.f32 %v1042, 100.0
      %v1099 = vmul.f32 %v1043, 100.0
      %v1100 = vmul.f32 %v1044, 100.0
      %v1101 = vmul.f32 %v1045, 100.0
      %v1102 = vmul.f32 %v1046, 100.0
      %v1103 = vmul.f32 %v1047, 100.0
      %v1104 = vmul.f32 %v1048, 100.0
      %v1105 = vmul.f32 %v1049, 100.0
      %v1106 = vmul.f32 %v1050, 100.0
      %v1107 = vmul.f32 %v1051, 100.0
      %v1108 = vmul.f32 %v1052, 100.0
      %v1109 = vmul.f32 %v1053, 100.0
      %v1110 = vmul.f32 %v1054, 100.0
      %v1111 = vmul.f32 %v1055, 100.0
      %v1112 = vmul.f32 %v1056, 100.0
      %v1113 = vmul.f32 %v1057, 100.0
      %v1114 = vmul.f32 %v1058, 100.0
      %v1115 = vmul.f32 %v1059, 100.0
      %v1116 = vmul.f32 %v1060, 100.0
      %v1117 = vmul.f32 %v1061, 100.0
      %v1118 = vmul.f32 %v1062, 100.0
      %v1119 = vmul.f32 %v1063, 100.0
      %v1120 = vmul.f32 %v1064, 100.0
      %v1121 = vmul.f32 %v1065, 100.0
      %v1122 = vmul.f32 %v1066, 100.0
      %v1123 = vmul.f32 %v1067, 100.0
      %v1124 = vmul.f32 %v1068, 100.0
      %v1125 = vmul.f32 %v1069, 100.0
      %v1126 = vmul.f32 %v1070, 100.0
      %v1127 = vmin.f32 %v1071, 20.0
      %v1128 = vmin.f32 %v1072, 20.0
      %v1129 = vmin.f32 %v1073, 20.0
      %v1130 = vmin.f32 %v1074, 20.0
      %v1131 = vmin.f32 %v1075, 20.0
      %v1132 = vmin.f32 %v1076, 20.0
      %v1133 = vmin.f32 %v1077, 20.0
      %v1134 = vmin.f32 %v1078, 20.0
      %v1135 = vmin.f32 %v1079, 20.0
      %v1136 = vmin.f32 %v1080, 20.0
      %v1137 = vmin.f32 %v1081, 20.0
      %v1138 = vmin.f32 %v1082, 20.0
      %v1139 = vmin.f32 %v1083, 20.0
      %v1140 = vmin.f32 %v1084, 20.0
      %v1141 = vmin.f32 %v1085, 20.0
      %v1142 = vmin.f32 %v1086, 20.0
      %v1143 = vmin.f32 %v1087, 20.0
      %v1144 = vmin.f32 %v1088, 20.0
      %v1145 = vmin.f32 %v1089, 20.0
      %v1146 = vmin.f32 %v1090, 20.0
      %v1147 = vmin.f32 %v1091, 20.0
      %v1148 = vmin.f32 %v1092, 20.0
      %v1149 = vmin.f32 %v1093, 20.0
      %v1150 = vmin.f32 %v1094, 20.0
      %v1151 = vmin.f32 %v1095, 20.0
      %v1152 = vmin.f32 %v1096, 20.0
      %v1153 = vmin.f32 %v1097, 20.0
      %v1154 = vmin.f32 %v1098, 20.0
      %v1155 = vmin.f32 %v1099, 20.0
      %v1156 = vmin.f32 %v1100, 20.0
      %v1157 = vmin.f32 %v1101, 20.0
      %v1158 = vmin.f32 %v1102, 20.0
      %v1159 = vmin.f32 %v1103, 20.0
      %v1160 = vmin.f32 %v1104, 20.0
      %v1161 = vmin.f32 %v1105, 20.0
      %v1162 = vmin.f32 %v1106, 20.0
      %v1163 = vmin.f32 %v1107, 20.0
      %v1164 = vmin.f32 %v1108, 20.0
      %v1165 = vmin.f32 %v1109, 20.0
      %v1166 = vmin.f32 %v1110, 20.0
      %v1167 = vmin.f32 %v1111, 20.0
      %v1168 = vmin.f32 %v1112, 20.0
      %v1169 = vmin.f32 %v1113, 20.0
      %v1170 = vmin.f32 %v1114, 20.0
      %v1171 = vmin.f32 %v1115, 20.0
      %v1172 = vmin.f32 %v1116, 20.0
      %v1173 = vmin.f32 %v1117, 20.0
      %v1174 = vmin.f32 %v1118, 20.0
      %v1175 = vmin.f32 %v1119, 20.0
      %v1176 = vmin.f32 %v1120, 20.0
      %v1177 = vmin.f32 %v1121, 20.0
      %v1178 = vmin.f32 %v1122, 20.0
      %v1179 = vmin.f32 %v1123, 20.0
      %v1180 = vmin.f32 %v1124, 20.0
      %v1181 = vmin.f32 %v1125, 20.0
      %v1182 = vmin.f32 %v1126, 20.0
      %v1183 = vmul.f32 %v1127, 1.442695
      %v1184 = vpow.pop %v1183
      %v1185 = vmul.f32 %v1128, 1.442695
      %v1186 = vpow.pop %v1185
      %v1187 = vmul.f32 %v1129, 1.442695
      %v1188 = vpow.pop %v1187
      %v1189 = vmul.f32 %v1130, 1.442695
      %v1190 = vpow.pop %v1189
      %v1191 = vmul.f32 %v1131, 1.442695
      %v1192 = vpow.pop %v1191
      %v1193 = vmul.f32 %v1132, 1.442695
      %v1194 = vpow.pop %v1193
      %v1195 = vmul.f32 %v1133, 1.442695
      %v1196 = vpow.pop %v1195
      %v1197 = vmul.f32 %v1134, 1.442695
      %v1198 = vpow.pop %v1197
      %v1199 = vmul.f32 %v1135, 1.442695
      %v1200 = vpow.pop %v1199
      %v1201 = vmul.f32 %v1136, 1.442695
      %v1202 = vpow.pop %v1201
      %v1203 = vmul.f32 %v1137, 1.442695
      %v1204 = vpow.pop %v1203
      %v1205 = vmul.f32 %v1138, 1.442695
      %v1206 = vpow.pop %v1205
      %v1207 = vmul.f32 %v1139, 1.442695
      %v1208 = vpow.pop %v1207
      %v1209 = vmul.f32 %v1140, 1.442695
      %v1210 = vpow.pop %v1209
      %v1211 = vmul.f32 %v1141, 1.442695
      %v1212 = vpow.pop %v1211
      %v1213 = vmul.f32 %v1142, 1.442695
      %v1214 = vpow.pop %v1213
      %v1215 = vmul.f32 %v1143, 1.442695
      %v1216 = vpow.pop %v1215
      %v1217 = vmul.f32 %v1144, 1.442695
      %v1218 = vpow.pop %v1217
      %v1219 = vmul.f32 %v1145, 1.442695
      %v1220 = vpow.pop %v1219
      %v1221 = vmul.f32 %v1146, 1.442695
      %v1222 = vpow.pop %v1221
      %v1223 = vmul.f32 %v1147, 1.442695
      %v1224 = vpow.pop %v1223
      %v1225 = vmul.f32 %v1148, 1.442695
      %v1226 = vpow.pop %v1225
      %v1227 = vmul.f32 %v1149, 1.442695
      %v1228 = vpow.pop %v1227
      %v1229 = vmul.f32 %v1150, 1.442695
      %v1230 = vpow.pop %v1229
      %v1231 = vmul.f32 %v1151, 1.442695
      %v1232 = vpow.pop %v1231
      %v1233 = vmul.f32 %v1152, 1.442695
      %v1234 = vpow.pop %v1233
      %v1235 = vmul.f32 %v1153, 1.442695
      %v1236 = vpow.pop %v1235
      %v1237 = vmul.f32 %v1154, 1.442695
      %v1238 = vpow.pop %v1237
      %v1239 = vmul.f32 %v1155, 1.442695
      %v1240 = vpow.pop %v1239
      %v1241 = vmul.f32 %v1156, 1.442695
      %v1242 = vpow.pop %v1241
      %v1243 = vmul.f32 %v1157, 1.442695
      %v1244 = vpow.pop %v1243
      %v1245 = vmul.f32 %v1158, 1.442695
      %v1246 = vpow.pop %v1245
      %v1247 = vmul.f32 %v1159, 1.442695
      %v1248 = vpow.pop %v1247
      %v1249 = vmul.f32 %v1160, 1.442695
      %v1250 = vpow.pop %v1249
      %v1251 = vmul.f32 %v1161, 1.442695
      %v1252 = vpow.pop %v1251
      %v1253 = vmul.f32 %v1162, 1.442695
      %v1254 = vpow.pop %v1253
      %v1255 = vmul.f32 %v1163, 1.442695
      %v1256 = vpow.pop %v1255
      %v1257 = vmul.f32 %v1164, 1.442695
      %v1258 = vpow.pop %v1257
      %v1259 = vmul.f32 %v1165, 1.442695
      %v1260 = vpow.pop %v1259
      %v1261 = vmul.f32 %v1166, 1.442695
      %v1262 = vpow.pop %v1261
      %v1263 = vmul.f32 %v1167, 1.442695
      %v1264 = vpow.pop %v1263
      %v1265 = vmul.f32 %v1168, 1.442695
      %v1266 = vpow.pop %v1265
      %v1267 = vmul.f32 %v1169, 1.442695
      %v1268 = vpow.pop %v1267
      %v1269 = vmul.f32 %v1170, 1.442695
      %v1270 = vpow.pop %v1269
      %v1271 = vmul.f32 %v1171, 1.442695
      %v1272 = vpow.pop %v1271
      %v1273 = vmul.f32 %v1172, 1.442695
      %v1274 = vpow.pop %v1273
      %v1275 = vmul.f32 %v1173, 1.442695
      %v1276 = vpow.pop %v1275
      %v1277 = vmul.f32 %v1174, 1.442695
      %v1278 = vpow.pop %v1277
      %v1279 = vmul.f32 %v1175, 1.442695
      %v1280 = vpow.pop %v1279
      %v1281 = vmul.f32 %v1176, 1.442695
      %v1282 = vpow.pop %v1281
      %v1283 = vmul.f32 %v1177, 1.442695
      %v1284 = vpow.pop %v1283
      %v1285 = vmul.f32 %v1178, 1.442695
      %v1286 = vpow.pop %v1285
      %v1287 = vmul.f32 %v1179, 1.442695
      %v1288 = vpow.pop %v1287
      %v1289 = vmul.f32 %v1180, 1.442695
      %v1290 = vpow.pop %v1289
      %v1291 = vmul.f32 %v1181, 1.442695
      %v1292 = vpow.pop %v1291
      %v1293 = vmul.f32 %v1182, 1.442695
      %v1294 = vpow.pop %v1293
      %v1295 = vadd.f32 %v1184, 1.0
      %v1296 = vlog2.pop %v1295
      %v1297 = vmul.f32 %v1296, 0.6931472
      %v1298 = vmul.f32 -0.5, %v1184
      %v1299 = vadd.f32 %v1298, 1.0
      %v1300 = vmul.f32 %v1299, %v1184
      %v1301 = vand.u32 2147483647, %v1184
      %vm1302 = vcmp.lt.f32.partialorder %v1301, 0.0004427343
      %v1303 = vsel %vm1302, %v1300, %v1297
      %v1304 = vadd.f32 %v1186, 1.0
      %v1305 = vlog2.pop %v1304
      %v1306 = vmul.f32 %v1305, 0.6931472
      %v1307 = vmul.f32 -0.5, %v1186
      %v1308 = vadd.f32 %v1307, 1.0
      %v1309 = vmul.f32 %v1308, %v1186
      %v1310 = vand.u32 2147483647, %v1186
      %vm1311 = vcmp.lt.f32.partialorder %v1310, 0.0004427343
      %v1312 = vsel %vm1311, %v1309, %v1306
      %v1313 = vadd.f32 %v1188, 1.0
      %v1314 = vlog2.pop %v1313
      %v1315 = vmul.f32 %v1314, 0.6931472
      %v1316 = vmul.f32 -0.5, %v1188
      %v1317 = vadd.f32 %v1316, 1.0
      %v1318 = vmul.f32 %v1317, %v1188
      %v1319 = vand.u32 2147483647, %v1188
      %vm1320 = vcmp.lt.f32.partialorder %v1319, 0.0004427343
      %v1321 = vsel %vm1320, %v1318, %v1315
      %v1322 = vadd.f32 %v1190, 1.0
      %v1323 = vlog2.pop %v1322
      %v1324 = vmul.f32 %v1323, 0.6931472
      %v1325 = vmul.f32 -0.5, %v1190
      %v1326 = vadd.f32 %v1325, 1.0
      %v1327 = vmul.f32 %v1326, %v1190
      %v1328 = vand.u32 2147483647, %v1190
      %vm1329 = vcmp.lt.f32.partialorder %v1328, 0.0004427343
      %v1330 = vsel %vm1329, %v1327, %v1324
      %v1331 = vadd.f32 %v1192, 1.0
      %v1332 = vlog2.pop %v1331
      %v1333 = vmul.f32 %v1332, 0.6931472
      %v1334 = vmul.f32 -0.5, %v1192
      %v1335 = vadd.f32 %v1334, 1.0
      %v1336 = vmul.f32 %v1335, %v1192
      %v1337 = vand.u32 2147483647, %v1192
      %vm1338 = vcmp.lt.f32.partialorder %v1337, 0.0004427343
      %v1339 = vsel %vm1338, %v1336, %v1333
      %v1340 = vadd.f32 %v1194, 1.0
      %v1341 = vlog2.pop %v1340
      %v1342 = vmul.f32 %v1341, 0.6931472
      %v1343 = vmul.f32 -0.5, %v1194
      %v1344 = vadd.f32 %v1343, 1.0
      %v1345 = vmul.f32 %v1344, %v1194
      %v1346 = vand.u32 2147483647, %v1194
      %vm1347 = vcmp.lt.f32.partialorder %v1346, 0.0004427343
      %v1348 = vsel %vm1347, %v1345, %v1342
      %v1349 = vadd.f32 %v1196, 1.0
      %v1350 = vlog2.pop %v1349
      %v1351 = vmul.f32 %v1350, 0.6931472
      %v1352 = vmul.f32 -0.5, %v1196
      %v1353 = vadd.f32 %v1352, 1.0
      %v1354 = vmul.f32 %v1353, %v1196
      %v1355 = vand.u32 2147483647, %v1196
      %vm1356 = vcmp.lt.f32.partialorder %v1355, 0.0004427343
      %v1357 = vsel %vm1356, %v1354, %v1351
      %v1358 = vadd.f32 %v1198, 1.0
      %v1359 = vlog2.pop %v1358
      %v1360 = vmul.f32 %v1359, 0.6931472
      %v1361 = vmul.f32 -0.5, %v1198
      %v1362 = vadd.f32 %v1361, 1.0
      %v1363 = vmul.f32 %v1362, %v1198
      %v1364 = vand.u32 2147483647, %v1198
      %vm1365 = vcmp.lt.f32.partialorder %v1364, 0.0004427343
      %v1366 = vsel %vm1365, %v1363, %v1360
      %v1367 = vadd.f32 %v1200, 1.0
      %v1368 = vlog2.pop %v1367
      %v1369 = vmul.f32 %v1368, 0.6931472
      %v1370 = vmul.f32 -0.5, %v1200
      %v1371 = vadd.f32 %v1370, 1.0
      %v1372 = vmul.f32 %v1371, %v1200
      %v1373 = vand.u32 2147483647, %v1200
      %vm1374 = vcmp.lt.f32.partialorder %v1373, 0.0004427343
      %v1375 = vsel %vm1374, %v1372, %v1369
      %v1376 = vadd.f32 %v1202, 1.0
      %v1377 = vlog2.pop %v1376
      %v1378 = vmul.f32 %v1377, 0.6931472
      %v1379 = vmul.f32 -0.5, %v1202
      %v1380 = vadd.f32 %v1379, 1.0
      %v1381 = vmul.f32 %v1380, %v1202
      %v1382 = vand.u32 2147483647, %v1202
      %vm1383 = vcmp.lt.f32.partialorder %v1382, 0.0004427343
      %v1384 = vsel %vm1383, %v1381, %v1378
      %v1385 = vadd.f32 %v1204, 1.0
      %v1386 = vlog2.pop %v1385
      %v1387 = vmul.f32 %v1386, 0.6931472
      %v1388 = vmul.f32 -0.5, %v1204
      %v1389 = vadd.f32 %v1388, 1.0
      %v1390 = vmul.f32 %v1389, %v1204
      %v1391 = vand.u32 2147483647, %v1204
      %vm1392 = vcmp.lt.f32.partialorder %v1391, 0.0004427343
      %v1393 = vsel %vm1392, %v1390, %v1387
      %v1394 = vadd.f32 %v1206, 1.0
      %v1395 = vlog2.pop %v1394
      %v1396 = vmul.f32 %v1395, 0.6931472
      %v1397 = vmul.f32 -0.5, %v1206
      %v1398 = vadd.f32 %v1397, 1.0
      %v1399 = vmul.f32 %v1398, %v1206
      %v1400 = vand.u32 2147483647, %v1206
      %vm1401 = vcmp.lt.f32.partialorder %v1400, 0.0004427343
      %v1402 = vsel %vm1401, %v1399, %v1396
      %v1403 = vadd.f32 %v1208, 1.0
      %v1404 = vlog2.pop %v1403
      %v1405 = vmul.f32 %v1404, 0.6931472
      %v1406 = vmul.f32 -0.5, %v1208
      %v1407 = vadd.f32 %v1406, 1.0
      %v1408 = vmul.f32 %v1407, %v1208
      %v1409 = vand.u32 2147483647, %v1208
      %vm1410 = vcmp.lt.f32.partialorder %v1409, 0.0004427343
      %v1411 = vsel %vm1410, %v1408, %v1405
      %v1412 = vadd.f32 %v1210, 1.0
      %v1413 = vlog2.pop %v1412
      %v1414 = vmul.f32 %v1413, 0.6931472
      %v1415 = vmul.f32 -0.5, %v1210
      %v1416 = vadd.f32 %v1415, 1.0
      %v1417 = vmul.f32 %v1416, %v1210
      %v1418 = vand.u32 2147483647, %v1210
      %vm1419 = vcmp.lt.f32.partialorder %v1418, 0.0004427343
      %v1420 = vsel %vm1419, %v1417, %v1414
      %v1421 = vadd.f32 %v1212, 1.0
      %v1422 = vlog2.pop %v1421
      %v1423 = vmul.f32 %v1422, 0.6931472
      %v1424 = vmul.f32 -0.5, %v1212
      %v1425 = vadd.f32 %v1424, 1.0
      %v1426 = vmul.f32 %v1425, %v1212
      %v1427 = vand.u32 2147483647, %v1212
      %vm1428 = vcmp.lt.f32.partialorder %v1427, 0.0004427343
      %v1429 = vsel %vm1428, %v1426, %v1423
      %v1430 = vadd.f32 %v1214, 1.0
      %v1431 = vlog2.pop %v1430
      %v1432 = vmul.f32 %v1431, 0.6931472
      %v1433 = vmul.f32 -0.5, %v1214
      %v1434 = vadd.f32 %v1433, 1.0
      %v1435 = vmul.f32 %v1434, %v1214
      %v1436 = vand.u32 2147483647, %v1214
      %vm1437 = vcmp.lt.f32.partialorder %v1436, 0.0004427343
      %v1438 = vsel %vm1437, %v1435, %v1432
      %v1439 = vadd.f32 %v1216, 1.0
      %v1440 = vlog2.pop %v1439
      %v1441 = vmul.f32 %v1440, 0.6931472
      %v1442 = vmul.f32 -0.5, %v1216
      %v1443 = vadd.f32 %v1442, 1.0
      %v1444 = vmul.f32 %v1443, %v1216
      %v1445 = vand.u32 2147483647, %v1216
      %vm1446 = vcmp.lt.f32.partialorder %v1445, 0.0004427343
      %v1447 = vsel %vm1446, %v1444, %v1441
      %v1448 = vadd.f32 %v1218, 1.0
      %v1449 = vlog2.pop %v1448
      %v1450 = vmul.f32 %v1449, 0.6931472
      %v1451 = vmul.f32 -0.5, %v1218
      %v1452 = vadd.f32 %v1451, 1.0
      %v1453 = vmul.f32 %v1452, %v1218
      %v1454 = vand.u32 2147483647, %v1218
      %vm1455 = vcmp.lt.f32.partialorder %v1454, 0.0004427343
      %v1456 = vsel %vm1455, %v1453, %v1450
      %v1457 = vadd.f32 %v1220, 1.0
      %v1458 = vlog2.pop %v1457
      %v1459 = vmul.f32 %v1458, 0.6931472
      %v1460 = vmul.f32 -0.5, %v1220
      %v1461 = vadd.f32 %v1460, 1.0
      %v1462 = vmul.f32 %v1461, %v1220
      %v1463 = vand.u32 2147483647, %v1220
      %vm1464 = vcmp.lt.f32.partialorder %v1463, 0.0004427343
      %v1465 = vsel %vm1464, %v1462, %v1459
      %v1466 = vadd.f32 %v1222, 1.0
      %v1467 = vlog2.pop %v1466
      %v1468 = vmul.f32 %v1467, 0.6931472
      %v1469 = vmul.f32 -0.5, %v1222
      %v1470 = vadd.f32 %v1469, 1.0
      %v1471 = vmul.f32 %v1470, %v1222
      %v1472 = vand.u32 2147483647, %v1222
      %vm1473 = vcmp.lt.f32.partialorder %v1472, 0.0004427343
      %v1474 = vsel %vm1473, %v1471, %v1468
      %v1475 = vadd.f32 %v1224, 1.0
      %v1476 = vlog2.pop %v1475
      %v1477 = vmul.f32 %v1476, 0.6931472
      %v1478 = vmul.f32 -0.5, %v1224
      %v1479 = vadd.f32 %v1478, 1.0
      %v1480 = vmul.f32 %v1479, %v1224
      %v1481 = vand.u32 2147483647, %v1224
      %vm1482 = vcmp.lt.f32.partialorder %v1481, 0.0004427343
      %v1483 = vsel %vm1482, %v1480, %v1477
      %v1484 = vadd.f32 %v1226, 1.0
      %v1485 = vlog2.pop %v1484
      %v1486 = vmul.f32 %v1485, 0.6931472
      %v1487 = vmul.f32 -0.5, %v1226
      %v1488 = vadd.f32 %v1487, 1.0
      %v1489 = vmul.f32 %v1488, %v1226
      %v1490 = vand.u32 2147483647, %v1226
      %vm1491 = vcmp.lt.f32.partialorder %v1490, 0.0004427343
      %v1492 = vsel %vm1491, %v1489, %v1486
      %v1493 = vadd.f32 %v1228, 1.0
      %v1494 = vlog2.pop %v1493
      %v1495 = vmul.f32 %v1494, 0.6931472
      %v1496 = vmul.f32 -0.5, %v1228
      %v1497 = vadd.f32 %v1496, 1.0
      %v1498 = vmul.f32 %v1497, %v1228
      %v1499 = vand.u32 2147483647, %v1228
      %vm1500 = vcmp.lt.f32.partialorder %v1499, 0.0004427343
      %v1501 = vsel %vm1500, %v1498, %v1495
      %v1502 = vadd.f32 %v1230, 1.0
      %v1503 = vlog2.pop %v1502
      %v1504 = vmul.f32 %v1503, 0.6931472
      %v1505 = vmul.f32 -0.5, %v1230
      %v1506 = vadd.f32 %v1505, 1.0
      %v1507 = vmul.f32 %v1506, %v1230
      %v1508 = vand.u32 2147483647, %v1230
      %vm1509 = vcmp.lt.f32.partialorder %v1508, 0.0004427343
      %v1510 = vsel %vm1509, %v1507, %v1504
      %v1511 = vadd.f32 %v1232, 1.0
      %v1512 = vlog2.pop %v1511
      %v1513 = vmul.f32 %v1512, 0.6931472
      %v1514 = vmul.f32 -0.5, %v1232
      %v1515 = vadd.f32 %v1514, 1.0
      %v1516 = vmul.f32 %v1515, %v1232
      %v1517 = vand.u32 2147483647, %v1232
      %vm1518 = vcmp.lt.f32.partialorder %v1517, 0.0004427343
      %v1519 = vsel %vm1518, %v1516, %v1513
      %v1520 = vadd.f32 %v1234, 1.0
      %v1521 = vlog2.pop %v1520
      %v1522 = vmul.f32 %v1521, 0.6931472
      %v1523 = vmul.f32 -0.5, %v1234
      %v1524 = vadd.f32 %v1523, 1.0
      %v1525 = vmul.f32 %v1524, %v1234
      %v1526 = vand.u32 2147483647, %v1234
      %vm1527 = vcmp.lt.f32.partialorder %v1526, 0.0004427343
      %v1528 = vsel %vm1527, %v1525, %v1522
      %v1529 = vadd.f32 %v1236, 1.0
      %v1530 = vlog2.pop %v1529
      %v1531 = vmul.f32 %v1530, 0.6931472
      %v1532 = vmul.f32 -0.5, %v1236
      %v1533 = vadd.f32 %v1532, 1.0
      %v1534 = vmul.f32 %v1533, %v1236
      %v1535 = vand.u32 2147483647, %v1236
      %vm1536 = vcmp.lt.f32.partialorder %v1535, 0.0004427343
      %v1537 = vsel %vm1536, %v1534, %v1531
      %v1538 = vadd.f32 %v1238, 1.0
      %v1539 = vlog2.pop %v1538
      %v1540 = vmul.f32 %v1539, 0.6931472
      %v1541 = vmul.f32 -0.5, %v1238
      %v1542 = vadd.f32 %v1541, 1.0
      %v1543 = vmul.f32 %v1542, %v1238
      %v1544 = vand.u32 2147483647, %v1238
      %vm1545 = vcmp.lt.f32.partialorder %v1544, 0.0004427343
      %v1546 = vsel %vm1545, %v1543, %v1540
      %v1547 = vadd.f32 %v1240, 1.0
      %v1548 = vlog2.pop %v1547
      %v1549 = vmul.f32 %v1548, 0.6931472
      %v1550 = vmul.f32 -0.5, %v1240
      %v1551 = vadd.f32 %v1550, 1.0
      %v1552 = vmul.f32 %v1551, %v1240
      %v1553 = vand.u32 2147483647, %v1240
      %vm1554 = vcmp.lt.f32.partialorder %v1553, 0.0004427343
      %v1555 = vsel %vm1554, %v1552, %v1549
      %v1556 = vadd.f32 %v1242, 1.0
      %v1557 = vlog2.pop %v1556
      %v1558 = vmul.f32 %v1557, 0.6931472
      %v1559 = vmul.f32 -0.5, %v1242
      %v1560 = vadd.f32 %v1559, 1.0
      %v1561 = vmul.f32 %v1560, %v1242
      %v1562 = vand.u32 2147483647, %v1242
      %vm1563 = vcmp.lt.f32.partialorder %v1562, 0.0004427343
      %v1564 = vsel %vm1563, %v1561, %v1558
      %v1565 = vadd.f32 %v1244, 1.0
      %v1566 = vlog2.pop %v1565
      %v1567 = vmul.f32 %v1566, 0.6931472
      %v1568 = vmul.f32 -0.5, %v1244
      %v1569 = vadd.f32 %v1568, 1.0
      %v1570 = vmul.f32 %v1569, %v1244
      %v1571 = vand.u32 2147483647, %v1244
      %vm1572 = vcmp.lt.f32.partialorder %v1571, 0.0004427343
      %v1573 = vsel %vm1572, %v1570, %v1567
      %v1574 = vadd.f32 %v1246, 1.0
      %v1575 = vlog2.pop %v1574
      %v1576 = vmul.f32 %v1575, 0.6931472
      %v1577 = vmul.f32 -0.5, %v1246
      %v1578 = vadd.f32 %v1577, 1.0
      %v1579 = vmul.f32 %v1578, %v1246
      %v1580 = vand.u32 2147483647, %v1246
      %vm1581 = vcmp.lt.f32.partialorder %v1580, 0.0004427343
      %v1582 = vsel %vm1581, %v1579, %v1576
      %v1583 = vadd.f32 %v1248, 1.0
      %v1584 = vlog2.pop %v1583
      %v1585 = vmul.f32 %v1584, 0.6931472
      %v1586 = vmul.f32 -0.5, %v1248
      %v1587 = vadd.f32 %v1586, 1.0
      %v1588 = vmul.f32 %v1587, %v1248
      %v1589 = vand.u32 2147483647, %v1248
      %vm1590 = vcmp.lt.f32.partialorder %v1589, 0.0004427343
      %v1591 = vsel %vm1590, %v1588, %v1585
      %v1592 = vadd.f32 %v1250, 1.0
      %v1593 = vlog2.pop %v1592
      %v1594 = vmul.f32 %v1593, 0.6931472
      %v1595 = vmul.f32 -0.5, %v1250
      %v1596 = vadd.f32 %v1595, 1.0
      %v1597 = vmul.f32 %v1596, %v1250
      %v1598 = vand.u32 2147483647, %v1250
      %vm1599 = vcmp.lt.f32.partialorder %v1598, 0.0004427343
      %v1600 = vsel %vm1599, %v1597, %v1594
      %v1601 = vadd.f32 %v1252, 1.0
      %v1602 = vlog2.pop %v1601
      %v1603 = vmul.f32 %v1602, 0.6931472
      %v1604 = vmul.f32 -0.5, %v1252
      %v1605 = vadd.f32 %v1604, 1.0
      %v1606 = vmul.f32 %v1605, %v1252
      %v1607 = vand.u32 2147483647, %v1252
      %vm1608 = vcmp.lt.f32.partialorder %v1607, 0.0004427343
      %v1609 = vsel %vm1608, %v1606, %v1603
      %v1610 = vadd.f32 %v1254, 1.0
      %v1611 = vlog2.pop %v1610
      %v1612 = vmul.f32 %v1611, 0.6931472
      %v1613 = vmul.f32 -0.5, %v1254
      %v1614 = vadd.f32 %v1613, 1.0
      %v1615 = vmul.f32 %v1614, %v1254
      %v1616 = vand.u32 2147483647, %v1254
      %vm1617 = vcmp.lt.f32.partialorder %v1616, 0.0004427343
      %v1618 = vsel %vm1617, %v1615, %v1612
      %v1619 = vadd.f32 %v1256, 1.0
      %v1620 = vlog2.pop %v1619
      %v1621 = vmul.f32 %v1620, 0.6931472
      %v1622 = vmul.f32 -0.5, %v1256
      %v1623 = vadd.f32 %v1622, 1.0
      %v1624 = vmul.f32 %v1623, %v1256
      %v1625 = vand.u32 2147483647, %v1256
      %vm1626 = vcmp.lt.f32.partialorder %v1625, 0.0004427343
      %v1627 = vsel %vm1626, %v1624, %v1621
      %v1628 = vadd.f32 %v1258, 1.0
      %v1629 = vlog2.pop %v1628
      %v1630 = vmul.f32 %v1629, 0.6931472
      %v1631 = vmul.f32 -0.5, %v1258
      %v1632 = vadd.f32 %v1631, 1.0
      %v1633 = vmul.f32 %v1632, %v1258
      %v1634 = vand.u32 2147483647, %v1258
      %vm1635 = vcmp.lt.f32.partialorder %v1634, 0.0004427343
      %v1636 = vsel %vm1635, %v1633, %v1630
      %v1637 = vadd.f32 %v1260, 1.0
      %v1638 = vlog2.pop %v1637
      %v1639 = vmul.f32 %v1638, 0.6931472
      %v1640 = vmul.f32 -0.5, %v1260
      %v1641 = vadd.f32 %v1640, 1.0
      %v1642 = vmul.f32 %v1641, %v1260
      %v1643 = vand.u32 2147483647, %v1260
      %vm1644 = vcmp.lt.f32.partialorder %v1643, 0.0004427343
      %v1645 = vsel %vm1644, %v1642, %v1639
      %v1646 = vadd.f32 %v1262, 1.0
      %v1647 = vlog2.pop %v1646
      %v1648 = vmul.f32 %v1647, 0.6931472
      %v1649 = vmul.f32 -0.5, %v1262
      %v1650 = vadd.f32 %v1649, 1.0
      %v1651 = vmul.f32 %v1650, %v1262
      %v1652 = vand.u32 2147483647, %v1262
      %vm1653 = vcmp.lt.f32.partialorder %v1652, 0.0004427343
      %v1654 = vsel %vm1653, %v1651, %v1648
      %v1655 = vadd.f32 %v1264, 1.0
      %v1656 = vlog2.pop %v1655
      %v1657 = vmul.f32 %v1656, 0.6931472
      %v1658 = vmul.f32 -0.5, %v1264
      %v1659 = vadd.f32 %v1658, 1.0
      %v1660 = vmul.f32 %v1659, %v1264
      %v1661 = vand.u32 2147483647, %v1264
      %vm1662 = vcmp.lt.f32.partialorder %v1661, 0.0004427343
      %v1663 = vsel %vm1662, %v1660, %v1657
      %v1664 = vadd.f32 %v1266, 1.0
      %v1665 = vlog2.pop %v1664
      %v1666 = vmul.f32 %v1665, 0.6931472
      %v1667 = vmul.f32 -0.5, %v1266
      %v1668 = vadd.f32 %v1667, 1.0
      %v1669 = vmul.f32 %v1668, %v1266
      %v1670 = vand.u32 2147483647, %v1266
      %vm1671 = vcmp.lt.f32.partialorder %v1670, 0.0004427343
      %v1672 = vsel %vm1671, %v1669, %v1666
      %v1673 = vadd.f32 %v1268, 1.0
      %v1674 = vlog2.pop %v1673
      %v1675 = vmul.f32 %v1674, 0.6931472
      %v1676 = vmul.f32 -0.5, %v1268
      %v1677 = vadd.f32 %v1676, 1.0
      %v1678 = vmul.f32 %v1677, %v1268
      %v1679 = vand.u32 2147483647, %v1268
      %vm1680 = vcmp.lt.f32.partialorder %v1679, 0.0004427343
      %v1681 = vsel %vm1680, %v1678, %v1675
      %v1682 = vadd.f32 %v1270, 1.0
      %v1683 = vlog2.pop %v1682
      %v1684 = vmul.f32 %v1683, 0.6931472
      %v1685 = vmul.f32 -0.5, %v1270
      %v1686 = vadd.f32 %v1685, 1.0
      %v1687 = vmul.f32 %v1686, %v1270
      %v1688 = vand.u32 2147483647, %v1270
      %vm1689 = vcmp.lt.f32.partialorder %v1688, 0.0004427343
      %v1690 = vsel %vm1689, %v1687, %v1684
      %v1691 = vadd.f32 %v1272, 1.0
      %v1692 = vlog2.pop %v1691
      %v1693 = vmul.f32 %v1692, 0.6931472
      %v1694 = vmul.f32 -0.5, %v1272
      %v1695 = vadd.f32 %v1694, 1.0
      %v1696 = vmul.f32 %v1695, %v1272
      %v1697 = vand.u32 2147483647, %v1272
      %vm1698 = vcmp.lt.f32.partialorder %v1697, 0.0004427343
      %v1699 = vsel %vm1698, %v1696, %v1693
      %v1700 = vadd.f32 %v1274, 1.0
      %v1701 = vlog2.pop %v1700
      %v1702 = vmul.f32 %v1701, 0.6931472
      %v1703 = vmul.f32 -0.5, %v1274
      %v1704 = vadd.f32 %v1703, 1.0
      %v1705 = vmul.f32 %v1704, %v1274
      %v1706 = vand.u32 2147483647, %v1274
      %vm1707 = vcmp.lt.f32.partialorder %v1706, 0.0004427343
      %v1708 = vsel %vm1707, %v1705, %v1702
      %v1709 = vadd.f32 %v1276, 1.0
      %v1710 = vlog2.pop %v1709
      %v1711 = vmul.f32 %v1710, 0.6931472
      %v1712 = vmul.f32 -0.5, %v1276
      %v1713 = vadd.f32 %v1712, 1.0
      %v1714 = vmul.f32 %v1713, %v1276
      %v1715 = vand.u32 2147483647, %v1276
      %vm1716 = vcmp.lt.f32.partialorder %v1715, 0.0004427343
      %v1717 = vsel %vm1716, %v1714, %v1711
      %v1718 = vadd.f32 %v1278, 1.0
      %v1719 = vlog2.pop %v1718
      %v1720 = vmul.f32 %v1719, 0.6931472
      %v1721 = vmul.f32 -0.5, %v1278
      %v1722 = vadd.f32 %v1721, 1.0
      %v1723 = vmul.f32 %v1722, %v1278
      %v1724 = vand.u32 2147483647, %v1278
      %vm1725 = vcmp.lt.f32.partialorder %v1724, 0.0004427343
      %v1726 = vsel %vm1725, %v1723, %v1720
      %v1727 = vadd.f32 %v1280, 1.0
      %v1728 = vlog2.pop %v1727
      %v1729 = vmul.f32 %v1728, 0.6931472
      %v1730 = vmul.f32 -0.5, %v1280
      %v1731 = vadd.f32 %v1730, 1.0
      %v1732 = vmul.f32 %v1731, %v1280
      %v1733 = vand.u32 2147483647, %v1280
      %vm1734 = vcmp.lt.f32.partialorder %v1733, 0.0004427343
      %v1735 = vsel %vm1734, %v1732, %v1729
      %v1736 = vadd.f32 %v1282, 1.0
      %v1737 = vlog2.pop %v1736
      %v1738 = vmul.f32 %v1737, 0.6931472
      %v1739 = vmul.f32 -0.5, %v1282
      %v1740 = vadd.f32 %v1739, 1.0
      %v1741 = vmul.f32 %v1740, %v1282
      %v1742 = vand.u32 2147483647, %v1282
      %vm1743 = vcmp.lt.f32.partialorder %v1742, 0.0004427343
      %v1744 = vsel %vm1743, %v1741, %v1738
      %v1745 = vadd.f32 %v1284, 1.0
      %v1746 = vlog2.pop %v1745
      %v1747 = vmul.f32 %v1746, 0.6931472
      %v1748 = vmul.f32 -0.5, %v1284
      %v1749 = vadd.f32 %v1748, 1.0
      %v1750 = vmul.f32 %v1749, %v1284
      %v1751 = vand.u32 2147483647, %v1284
      %vm1752 = vcmp.lt.f32.partialorder %v1751, 0.0004427343
      %v1753 = vsel %vm1752, %v1750, %v1747
      %v1754 = vadd.f32 %v1286, 1.0
      %v1755 = vlog2.pop %v1754
      %v1756 = vmul.f32 %v1755, 0.6931472
      %v1757 = vmul.f32 -0.5, %v1286
      %v1758 = vadd.f32 %v1757, 1.0
      %v1759 = vmul.f32 %v1758, %v1286
      %v1760 = vand.u32 2147483647, %v1286
      %vm1761 = vcmp.lt.f32.partialorder %v1760, 0.0004427343
      %v1762 = vsel %vm1761, %v1759, %v1756
      %v1763 = vadd.f32 %v1288, 1.0
      %v1764 = vlog2.pop %v1763
      %v1765 = vmul.f32 %v1764, 0.6931472
      %v1766 = vmul.f32 -0.5, %v1288
      %v1767 = vadd.f32 %v1766, 1.0
      %v1768 = vmul.f32 %v1767, %v1288
      %v1769 = vand.u32 2147483647, %v1288
      %vm1770 = vcmp.lt.f32.partialorder %v1769, 0.0004427343
      %v1771 = vsel %vm1770, %v1768, %v1765
      %v1772 = vadd.f32 %v1290, 1.0
      %v1773 = vlog2.pop %v1772
      %v1774 = vmul.f32 %v1773, 0.6931472
      %v1775 = vmul.f32 -0.5, %v1290
      %v1776 = vadd.f32 %v1775, 1.0
      %v1777 = vmul.f32 %v1776, %v1290
      %v1778 = vand.u32 2147483647, %v1290
      %vm1779 = vcmp.lt.f32.partialorder %v1778, 0.0004427343
      %v1780 = vsel %vm1779, %v1777, %v1774
      %v1781 = vadd.f32 %v1292, 1.0
      %v1782 = vlog2.pop %v1781
      %v1783 = vmul.f32 %v1782, 0.6931472
      %v1784 = vmul.f32 -0.5, %v1292
      %v1785 = vadd.f32 %v1784, 1.0
      %v1786 = vmul.f32 %v1785, %v1292
      %v1787 = vand.u32 2147483647, %v1292
      %vm1788 = vcmp.lt.f32.partialorder %v1787, 0.0004427343
      %v1789 = vsel %vm1788, %v1786, %v1783
      %v1790 = vadd.f32 %v1294, 1.0
      %v1791 = vlog2.pop %v1790
      %v1792 = vmul.f32 %v1791, 0.6931472
      %v1793 = vmul.f32 -0.5, %v1294
      %v1794 = vadd.f32 %v1793, 1.0
      %v1795 = vmul.f32 %v1794, %v1294
      %v1796 = vand.u32 2147483647, %v1294
      %vm1797 = vcmp.lt.f32.partialorder %v1796, 0.0004427343
      %v1798 = vsel %vm1797, %v1795, %v1792
      %v1799 = vmul.f32 %v1303, 0.01
      %v1800 = vmul.f32 %v1312, 0.01
      %v1801 = vmul.f32 %v1321, 0.01
      %v1802 = vmul.f32 %v1330, 0.01
      %v1803 = vmul.f32 %v1339, 0.01
      %v1804 = vmul.f32 %v1348, 0.01
      %v1805 = vmul.f32 %v1357, 0.01
      %v1806 = vmul.f32 %v1366, 0.01
      %v1807 = vmul.f32 %v1375, 0.01
      %v1808 = vmul.f32 %v1384, 0.01
      %v1809 = vmul.f32 %v1393, 0.01
      %v1810 = vmul.f32 %v1402, 0.01
      %v1811 = vmul.f32 %v1411, 0.01
      %v1812 = vmul.f32 %v1420, 0.01
      %v1813 = vmul.f32 %v1429, 0.01
      %v1814 = vmul.f32 %v1438, 0.01
      %v1815 = vmul.f32 %v1447, 0.01
      %v1816 = vmul.f32 %v1456, 0.01
      %v1817 = vmul.f32 %v1465, 0.01
      %v1818 = vmul.f32 %v1474, 0.01
      %v1819 = vmul.f32 %v1483, 0.01
      %v1820 = vmul.f32 %v1492, 0.01
      %v1821 = vmul.f32 %v1501, 0.01
      %v1822 = vmul.f32 %v1510, 0.01
      %v1823 = vmul.f32 %v1519, 0.01
      %v1824 = vmul.f32 %v1528, 0.01
      %v1825 = vmul.f32 %v1537, 0.01
      %v1826 = vmul.f32 %v1546, 0.01
      %v1827 = vmul.f32 %v1555, 0.01
      %v1828 = vmul.f32 %v1564, 0.01
      %v1829 = vmul.f32 %v1573, 0.01
      %v1830 = vmul.f32 %v1582, 0.01
      %v1831 = vmul.f32 %v1591, 0.01
      %v1832 = vmul.f32 %v1600, 0.01
      %v1833 = vmul.f32 %v1609, 0.01
      %v1834 = vmul.f32 %v1618, 0.01
      %v1835 = vmul.f32 %v1627, 0.01
      %v1836 = vmul.f32 %v1636, 0.01
      %v1837 = vmul.f32 %v1645, 0.01
      %v1838 = vmul.f32 %v1654, 0.01
      %v1839 = vmul.f32 %v1663, 0.01
      %v1840 = vmul.f32 %v1672, 0.01
      %v1841 = vmul.f32 %v1681, 0.01
      %v1842 = vmul.f32 %v1690, 0.01
      %v1843 = vmul.f32 %v1699, 0.01
      %v1844 = vmul.f32 %v1708, 0.01
      %v1845 = vmul.f32 %v1717, 0.01
      %v1846 = vmul.f32 %v1726, 0.01
      %v1847 = vmul.f32 %v1735, 0.01
      %v1848 = vmul.f32 %v1744, 0.01
      %v1849 = vmul.f32 %v1753, 0.01
      %v1850 = vmul.f32 %v1762, 0.01
      %v1851 = vmul.f32 %v1771, 0.01
      %v1852 = vmul.f32 %v1780, 0.01
      %v1853 = vmul.f32 %v1789, 0.01
      %v1854 = vmul.f32 %v1798, 0.01
      %vm1855 = vcmp.gt.f32.partialorder %v1071, 20.0
      %vm1856 = vcmp.gt.f32.partialorder %v1072, 20.0
      %vm1857 = vcmp.gt.f32.partialorder %v1073, 20.0
      %vm1858 = vcmp.gt.f32.partialorder %v1074, 20.0
      %vm1859 = vcmp.gt.f32.partialorder %v1075, 20.0
      %vm1860 = vcmp.gt.f32.partialorder %v1076, 20.0
      %vm1861 = vcmp.gt.f32.partialorder %v1077, 20.0
      %vm1862 = vcmp.gt.f32.partialorder %v1078, 20.0
      %vm1863 = vcmp.gt.f32.partialorder %v1079, 20.0
      %vm1864 = vcmp.gt.f32.partialorder %v1080, 20.0
      %vm1865 = vcmp.gt.f32.partialorder %v1081, 20.0
      %vm1866 = vcmp.gt.f32.partialorder %v1082, 20.0
      %vm1867 = vcmp.gt.f32.partialorder %v1083, 20.0
      %vm1868 = vcmp.gt.f32.partialorder %v1084, 20.0
      %vm1869 = vcmp.gt.f32.partialorder %v1085, 20.0
      %vm1870 = vcmp.gt.f32.partialorder %v1086, 20.0
      %vm1871 = vcmp.gt.f32.partialorder %v1087, 20.0
      %vm1872 = vcmp.gt.f32.partialorder %v1088, 20.0
      %vm1873 = vcmp.gt.f32.partialorder %v1089, 20.0
      %vm1874 = vcmp.gt.f32.partialorder %v1090, 20.0
      %vm1875 = vcmp.gt.f32.partialorder %v1091, 20.0
      %vm1876 = vcmp.gt.f32.partialorder %v1092, 20.0
      %vm1877 = vcmp.gt.f32.partialorder %v1093, 20.0
      %vm1878 = vcmp.gt.f32.partialorder %v1094, 20.0
      %vm1879 = vcmp.gt.f32.partialorder %v1095, 20.0
      %vm1880 = vcmp.gt.f32.partialorder %v1096, 20.0
      %vm1881 = vcmp.gt.f32.partialorder %v1097, 20.0
      %vm1882 = vcmp.gt.f32.partialorder %v1098, 20.0
      %vm1883 = vcmp.gt.f32.partialorder %v1099, 20.0
      %vm1884 = vcmp.gt.f32.partialorder %v1100, 20.0
      %vm1885 = vcmp.gt.f32.partialorder %v1101, 20.0
      %vm1886 = vcmp.gt.f32.partialorder %v1102, 20.0
      %vm1887 = vcmp.gt.f32.partialorder %v1103, 20.0
      %vm1888 = vcmp.gt.f32.partialorder %v1104, 20.0
      %vm1889 = vcmp.gt.f32.partialorder %v1105, 20.0
      %vm1890 = vcmp.gt.f32.partialorder %v1106, 20.0
      %vm1891 = vcmp.gt.f32.partialorder %v1107, 20.0
      %vm1892 = vcmp.gt.f32.partialorder %v1108, 20.0
      %vm1893 = vcmp.gt.f32.partialorder %v1109, 20.0
      %vm1894 = vcmp.gt.f32.partialorder %v1110, 20.0
      %vm1895 = vcmp.gt.f32.partialorder %v1111, 20.0
      %vm1896 = vcmp.gt.f32.partialorder %v1112, 20.0
      %vm1897 = vcmp.gt.f32.partialorder %v1113, 20.0
      %vm1898 = vcmp.gt.f32.partialorder %v1114, 20.0
      %vm1899 = vcmp.gt.f32.partialorder %v1115, 20.0
      %vm1900 = vcmp.gt.f32.partialorder %v1116, 20.0
      %vm1901 = vcmp.gt.f32.partialorder %v1117, 20.0
      %vm1902 = vcmp.gt.f32.partialorder %v1118, 20.0
      %vm1903 = vcmp.gt.f32.partialorder %v1119, 20.0
      %vm1904 = vcmp.gt.f32.partialorder %v1120, 20.0
      %vm1905 = vcmp.gt.f32.partialorder %v1121, 20.0
      %vm1906 = vcmp.gt.f32.partialorder %v1122, 20.0
      %vm1907 = vcmp.gt.f32.partialorder %v1123, 20.0
      %vm1908 = vcmp.gt.f32.partialorder %v1124, 20.0
      %vm1909 = vcmp.gt.f32.partialorder %v1125, 20.0
      %vm1910 = vcmp.gt.f32.partialorder %v1126, 20.0
      %v1911 = vsel %vm1855, %v1015, %v1799
      %v1912 = vsel %vm1856, %v1016, %v1800
      %v1913 = vsel %vm1857, %v1017, %v1801
      %v1914 = vsel %vm1858, %v1018, %v1802
      %v1915 = vsel %vm1859, %v1019, %v1803
      %v1916 = vsel %vm1860, %v1020, %v1804
      %v1917 = vsel %vm1861, %v1021, %v1805
      %v1918 = vsel %vm1862, %v1022, %v1806
      %v1919 = vsel %vm1863, %v1023, %v1807
      %v1920 = vsel %vm1864, %v1024, %v1808
      %v1921 = vsel %vm1865, %v1025, %v1809
      %v1922 = vsel %vm1866, %v1026, %v1810
      %v1923 = vsel %vm1867, %v1027, %v1811
      %v1924 = vsel %vm1868, %v1028, %v1812
      %v1925 = vsel %vm1869, %v1029, %v1813
      %v1926 = vsel %vm1870, %v1030, %v1814
      %v1927 = vsel %vm1871, %v1031, %v1815
      %v1928 = vsel %vm1872, %v1032, %v1816
      %v1929 = vsel %vm1873, %v1033, %v1817
      %v1930 = vsel %vm1874, %v1034, %v1818
      %v1931 = vsel %vm1875, %v1035, %v1819
      %v1932 = vsel %vm1876, %v1036, %v1820
      %v1933 = vsel %vm1877, %v1037, %v1821
      %v1934 = vsel %vm1878, %v1038, %v1822
      %v1935 = vsel %vm1879, %v1039, %v1823
      %v1936 = vsel %vm1880, %v1040, %v1824
      %v1937 = vsel %vm1881, %v1041, %v1825
      %v1938 = vsel %vm1882, %v1042, %v1826
      %v1939 = vsel %vm1883, %v1043, %v1827
      %v1940 = vsel %vm1884, %v1044, %v1828
      %v1941 = vsel %vm1885, %v1045, %v1829
      %v1942 = vsel %vm1886, %v1046, %v1830
      %v1943 = vsel %vm1887, %v1047, %v1831
      %v1944 = vsel %vm1888, %v1048, %v1832
      %v1945 = vsel %vm1889, %v1049, %v1833
      %v1946 = vsel %vm1890, %v1050, %v1834
      %v1947 = vsel %vm1891, %v1051, %v1835
      %v1948 = vsel %vm1892, %v1052, %v1836
      %v1949 = vsel %vm1893, %v1053, %v1837
      %v1950 = vsel %vm1894, %v1054, %v1838
      %v1951 = vsel %vm1895, %v1055, %v1839
      %v1952 = vsel %vm1896, %v1056, %v1840
      %v1953 = vsel %vm1897, %v1057, %v1841
      %v1954 = vsel %vm1898, %v1058, %v1842
      %v1955 = vsel %vm1899, %v1059, %v1843
      %v1956 = vsel %vm1900, %v1060, %v1844
      %v1957 = vsel %vm1901, %v1061, %v1845
      %v1958 = vsel %vm1902, %v1062, %v1846
      %v1959 = vsel %vm1903, %v1063, %v1847
      %v1960 = vsel %vm1904, %v1064, %v1848
      %v1961 = vsel %vm1905, %v1065, %v1849
      %v1962 = vsel %vm1906, %v1066, %v1850
      %v1963 = vsel %vm1907, %v1067, %v1851
      %v1964 = vsel %vm1908, %v1068, %v1852
      %v1965 = vsel %vm1909, %v1069, %v1853
      %v1966 = vsel %vm1910, %v1070, %v1854
      %v1967 = vld [vmem:[%s3] sm:$0xff]
      %v1968 = vld [vmem:[%s3 + $0x8] sm:$0xff]
      %v1969 = vld [vmem:[%s3 + $0x10] sm:$0xff]
      %v1970 = vld [vmem:[%s3 + $0x18] sm:$0xff]
      %v1971 = vld [vmem:[%s3 + $0x20] sm:$0xff]
      %v1972 = vld [vmem:[%s3 + $0x28] sm:$0xff]
      %v1973 = vld [vmem:[%s3 + $0x30] sm:$0xff]
      %v1974 = vld [vmem:[%s3 + $0x38] sm:$0xff]
      %1976 = vset.pattern.permute.xlu0 0
      %1977 = vperm.xlu0 %1976, %v942
      %v1978 = vpop.permute.xlu0 %1977
      %1981 = vset.pattern.permute.xlu0 0
      %1982 = vperm.xlu0 %1981, %v943
      %v1983 = vpop.permute.xlu0 %1982
      %1986 = vset.pattern.permute.xlu0 0
      %1987 = vperm.xlu0 %1986, %v944
      %v1988 = vpop.permute.xlu0 %1987
      %1991 = vset.pattern.permute.xlu0 0
      %1992 = vperm.xlu0 %1991, %v945
      %v1993 = vpop.permute.xlu0 %1992
      %1996 = vset.pattern.permute.xlu0 0
      %1997 = vperm.xlu0 %1996, %v946
      %v1998 = vpop.permute.xlu0 %1997
      %2001 = vset.pattern.permute.xlu0 0
      %2002 = vperm.xlu0 %2001, %v947
      %v2003 = vpop.permute.xlu0 %2002
      %2006 = vset.pattern.permute.xlu0 0
      %2007 = vperm.xlu0 %2006, %v948
      %v2008 = vpop.permute.xlu0 %2007
      %2011 = vset.pattern.permute.xlu0 0
      %2012 = vperm.xlu0 %2011, %v949
      %v2013 = vpop.permute.xlu0 %2012
      %vm2015 = vcmask 523264
      %v2017 = vsel %vm2015, %v1967, 0
      %v2020 = vsel %vm2015, %v1968, 0
      %v2023 = vsel %vm2015, %v1969, 0
      %v2026 = vsel %vm2015, %v1970, 0
      %v2029 = vsel %vm2015, %v1971, 0
      %v2032 = vsel %vm2015, %v1972, 0
      %v2035 = vsel %vm2015, %v1973, 0
      %v2038 = vsel %vm2015, %v1974, 0
      %2040 = vmatpush.msra.mxu0 0.0
      %2041 = vmatpush.msra.mxu0 0.0
      %2042 = vmatpush.msra.mxu0 0.0
      %2043 = vmatpush.msra.mxu0 0.0
      %2044 = vmatpush.msra.mxu0 0.0
      %2045 = vmatpush.msra.mxu0 0.0
      %2046 = vmatpush.msra.mxu0 0.0
      %2047 = vmatpush.msra.mxu0 0.0
      %2048 = vmatpush.msra.mxu0 %v1960
      %2049 = vmatpush.msra.mxu0 %v1953
      %2050 = vmatpush.msra.mxu0 %v1946
      %2051 = vmatpush.msra.mxu0 %v1939
      %2052 = vmatpush.msra.mxu0 %v1932
      %2053 = vmatpush.msra.mxu0 %v1925
      %2054 = vmatpush.msra.mxu0 %v1918
      %2055 = vmatpush.msra.mxu0 %v1911
      %2056 = vmatmul.f32.gmra.mxu0 %v2017
      %v2057 = vpop.f32.mrf.mxu0
      %v2058 = vadd.f32 %v1978, %v2057
      %2059 = vmatmul.f32.gmra.mxu0 %v2020
      %v2060 = vpop.f32.mrf.mxu0
      %v2061 = vadd.f32 %v1983, %v2060
      %2062 = vmatmul.f32.gmra.mxu0 %v2023
      %v2063 = vpop.f32.mrf.mxu0
      %v2064 = vadd.f32 %v1988, %v2063
      %2065 = vmatmul.f32.gmra.mxu0 %v2026
      %v2066 = vpop.f32.mrf.mxu0
      %v2067 = vadd.f32 %v1993, %v2066
      %2068 = vmatmul.f32.gmra.mxu0 %v2029
      %v2069 = vpop.f32.mrf.mxu0
      %v2070 = vadd.f32 %v1998, %v2069
      %2071 = vmatmul.f32.gmra.mxu0 %v2032
      %v2072 = vpop.f32.mrf.mxu0
      %v2073 = vadd.f32 %v2003, %v2072
      %2074 = vmatmul.f32.gmra.mxu0 %v2035
      %v2075 = vpop.f32.mrf.mxu0
      %v2076 = vadd.f32 %v2008, %v2075
      %2077 = vmatmul.f32.gmra.mxu0 %v2038
      %v2078 = vpop.f32.mrf.mxu0
      %v2079 = vadd.f32 %v2013, %v2078
      %2080 = vdwg.mxu0
      %2081 = vmatpush.msra.mxu0 0.0
      %2082 = vmatpush.msra.mxu0 0.0
      %2083 = vmatpush.msra.mxu0 0.0
      %2084 = vmatpush.msra.mxu0 0.0
      %2085 = vmatpush.msra.mxu0 0.0
      %2086 = vmatpush.msra.mxu0 0.0
      %2087 = vmatpush.msra.mxu0 0.0
      %2088 = vmatpush.msra.mxu0 0.0
      %2089 = vmatpush.msra.mxu0 %v1961
      %2090 = vmatpush.msra.mxu0 %v1954
      %2091 = vmatpush.msra.mxu0 %v1947
      %2092 = vmatpush.msra.mxu0 %v1940
      %2093 = vmatpush.msra.mxu0 %v1933
      %2094 = vmatpush.msra.mxu0 %v1926
      %2095 = vmatpush.msra.mxu0 %v1919
      %2096 = vmatpush.msra.mxu0 %v1912
      %2097 = vmatmul.f32.gmra.mxu0 %v2017
      %v2098 = vpop.f32.mrf.mxu0
      %v2099 = vadd.f32 %v1978, %v2098
      %2100 = vmatmul.f32.gmra.mxu0 %v2020
      %v2101 = vpop.f32.mrf.mxu0
      %v2102 = vadd.f32 %v1983, %v2101
      %2103 = vmatmul.f32.gmra.mxu0 %v2023
      %v2104 = vpop.f32.mrf.mxu0
      %v2105 = vadd.f32 %v1988, %v2104
      %2106 = vmatmul.f32.gmra.mxu0 %v2026
      %v2107 = vpop.f32.mrf.mxu0
      %v2108 = vadd.f32 %v1993, %v2107
      %2109 = vmatmul.f32.gmra.mxu0 %v2029
      %v2110 = vpop.f32.mrf.mxu0
      %v2111 = vadd.f32 %v1998, %v2110
      %2112 = vmatmul.f32.gmra.mxu0 %v2032
      %v2113 = vpop.f32.mrf.mxu0
      %v2114 = vadd.f32 %v2003, %v2113
      %2115 = vmatmul.f32.gmra.mxu0 %v2035
      %v2116 = vpop.f32.mrf.mxu0
      %v2117 = vadd.f32 %v2008, %v2116
      %2118 = vmatmul.f32.gmra.mxu0 %v2038
      %v2119 = vpop.f32.mrf.mxu0
      %v2120 = vadd.f32 %v2013, %v2119
      %2121 = vdwg.mxu0
      %2122 = vmatpush.msra.mxu0 0.0
      %2123 = vmatpush.msra.mxu0 0.0
      %2124 = vmatpush.msra.mxu0 0.0
      %2125 = vmatpush.msra.mxu0 0.0
      %2126 = vmatpush.msra.mxu0 0.0
      %2127 = vmatpush.msra.mxu0 0.0
      %2128 = vmatpush.msra.mxu0 0.0
      %2129 = vmatpush.msra.mxu0 0.0
      %2130 = vmatpush.msra.mxu0 %v1962
      %2131 = vmatpush.msra.mxu0 %v1955
      %2132 = vmatpush.msra.mxu0 %v1948
      %2133 = vmatpush.msra.mxu0 %v1941
      %2134 = vmatpush.msra.mxu0 %v1934
      %2135 = vmatpush.msra.mxu0 %v1927
      %2136 = vmatpush.msra.mxu0 %v1920
      %2137 = vmatpush.msra.mxu0 %v1913
      %2138 = vmatmul.f32.gmra.mxu0 %v2017
      %v2139 = vpop.f32.mrf.mxu0
      %v2140 = vadd.f32 %v1978, %v2139
      %2141 = vmatmul.f32.gmra.mxu0 %v2020
      %v2142 = vpop.f32.mrf.mxu0
      %v2143 = vadd.f32 %v1983, %v2142
      %2144 = vmatmul.f32.gmra.mxu0 %v2023
      %v2145 = vpop.f32.mrf.mxu0
      %v2146 = vadd.f32 %v1988, %v2145
      %2147 = vmatmul.f32.gmra.mxu0 %v2026
      %v2148 = vpop.f32.mrf.mxu0
      %v2149 = vadd.f32 %v1993, %v2148
      %2150 = vmatmul.f32.gmra.mxu0 %v2029
      %v2151 = vpop.f32.mrf.mxu0
      %v2152 = vadd.f32 %v1998, %v2151
      %2153 = vmatmul.f32.gmra.mxu0 %v2032
      %v2154 = vpop.f32.mrf.mxu0
      %v2155 = vadd.f32 %v2003, %v2154
      %2156 = vmatmul.f32.gmra.mxu0 %v2035
      %v2157 = vpop.f32.mrf.mxu0
      %v2158 = vadd.f32 %v2008, %v2157
      %2159 = vmatmul.f32.gmra.mxu0 %v2038
      %v2160 = vpop.f32.mrf.mxu0
      %v2161 = vadd.f32 %v2013, %v2160
      %2162 = vdwg.mxu0
      %2163 = vmatpush.msra.mxu0 0.0
      %2164 = vmatpush.msra.mxu0 0.0
      %2165 = vmatpush.msra.mxu0 0.0
      %2166 = vmatpush.msra.mxu0 0.0
      %2167 = vmatpush.msra.mxu0 0.0
      %2168 = vmatpush.msra.mxu0 0.0
      %2169 = vmatpush.msra.mxu0 0.0
      %2170 = vmatpush.msra.mxu0 0.0
      %2171 = vmatpush.msra.mxu0 %v1963
      %2172 = vmatpush.msra.mxu0 %v1956
      %2173 = vmatpush.msra.mxu0 %v1949
      %2174 = vmatpush.msra.mxu0 %v1942
      %2175 = vmatpush.msra.mxu0 %v1935
      %2176 = vmatpush.msra.mxu0 %v1928
      %2177 = vmatpush.msra.mxu0 %v1921
      %2178 = vmatpush.msra.mxu0 %v1914
      %2179 = vmatmul.f32.gmra.mxu0 %v2017
      %v2180 = vpop.f32.mrf.mxu0
      %v2181 = vadd.f32 %v1978, %v2180
      %2182 = vmatmul.f32.gmra.mxu0 %v2020
      %v2183 = vpop.f32.mrf.mxu0
      %v2184 = vadd.f32 %v1983, %v2183
      %2185 = vmatmul.f32.gmra.mxu0 %v2023
      %v2186 = vpop.f32.mrf.mxu0
      %v2187 = vadd.f32 %v1988, %v2186
      %2188 = vmatmul.f32.gmra.mxu0 %v2026
      %v2189 = vpop.f32.mrf.mxu0
      %v2190 = vadd.f32 %v1993, %v2189
      %2191 = vmatmul.f32.gmra.mxu0 %v2029
      %v2192 = vpop.f32.mrf.mxu0
      %v2193 = vadd.f32 %v1998, %v2192
      %2194 = vmatmul.f32.gmra.mxu0 %v2032
      %v2195 = vpop.f32.mrf.mxu0
      %v2196 = vadd.f32 %v2003, %v2195
      %2197 = vmatmul.f32.gmra.mxu0 %v2035
      %v2198 = vpop.f32.mrf.mxu0
      %v2199 = vadd.f32 %v2008, %v2198
      %2200 = vmatmul.f32.gmra.mxu0 %v2038
      %v2201 = vpop.f32.mrf.mxu0
      %v2202 = vadd.f32 %v2013, %v2201
      %2203 = vdwg.mxu0
      %2204 = vmatpush.msra.mxu0 0.0
      %2205 = vmatpush.msra.mxu0 0.0
      %2206 = vmatpush.msra.mxu0 0.0
      %2207 = vmatpush.msra.mxu0 0.0
      %2208 = vmatpush.msra.mxu0 0.0
      %2209 = vmatpush.msra.mxu0 0.0
      %2210 = vmatpush.msra.mxu0 0.0
      %2211 = vmatpush.msra.mxu0 0.0
      %2212 = vmatpush.msra.mxu0 %v1964
      %2213 = vmatpush.msra.mxu0 %v1957
      %2214 = vmatpush.msra.mxu0 %v1950
      %2215 = vmatpush.msra.mxu0 %v1943
      %2216 = vmatpush.msra.mxu0 %v1936
      %2217 = vmatpush.msra.mxu0 %v1929
      %2218 = vmatpush.msra.mxu0 %v1922
      %2219 = vmatpush.msra.mxu0 %v1915
      %2220 = vmatmul.f32.gmra.mxu0 %v2017
      %v2221 = vpop.f32.mrf.mxu0
      %v2222 = vadd.f32 %v1978, %v2221
      %2223 = vmatmul.f32.gmra.mxu0 %v2020
      %v2224 = vpop.f32.mrf.mxu0
      %v2225 = vadd.f32 %v1983, %v2224
      %2226 = vmatmul.f32.gmra.mxu0 %v2023
      %v2227 = vpop.f32.mrf.mxu0
      %v2228 = vadd.f32 %v1988, %v2227
      %2229 = vmatmul.f32.gmra.mxu0 %v2026
      %v2230 = vpop.f32.mrf.mxu0
      %v2231 = vadd.f32 %v1993, %v2230
      %2232 = vmatmul.f32.gmra.mxu0 %v2029
      %v2233 = vpop.f32.mrf.mxu0
      %v2234 = vadd.f32 %v1998, %v2233
      %2235 = vmatmul.f32.gmra.mxu0 %v2032
      %v2236 = vpop.f32.mrf.mxu0
      %v2237 = vadd.f32 %v2003, %v2236
      %2238 = vmatmul.f32.gmra.mxu0 %v2035
      %v2239 = vpop.f32.mrf.mxu0
      %v2240 = vadd.f32 %v2008, %v2239
      %2241 = vmatmul.f32.gmra.mxu0 %v2038
      %v2242 = vpop.f32.mrf.mxu0
      %v2243 = vadd.f32 %v2013, %v2242
      %2244 = vdwg.mxu0
      %2245 = vmatpush.msra.mxu0 0.0
      %2246 = vmatpush.msra.mxu0 0.0
      %2247 = vmatpush.msra.mxu0 0.0
      %2248 = vmatpush.msra.mxu0 0.0
      %2249 = vmatpush.msra.mxu0 0.0
      %2250 = vmatpush.msra.mxu0 0.0
      %2251 = vmatpush.msra.mxu0 0.0
      %2252 = vmatpush.msra.mxu0 0.0
      %2253 = vmatpush.msra.mxu0 %v1965
      %2254 = vmatpush.msra.mxu0 %v1958
      %2255 = vmatpush.msra.mxu0 %v1951
      %2256 = vmatpush.msra.mxu0 %v1944
      %2257 = vmatpush.msra.mxu0 %v1937
      %2258 = vmatpush.msra.mxu0 %v1930
      %2259 = vmatpush.msra.mxu0 %v1923
      %2260 = vmatpush.msra.mxu0 %v1916
      %2261 = vmatmul.f32.gmra.mxu0 %v2017
      %v2262 = vpop.f32.mrf.mxu0
      %v2263 = vadd.f32 %v1978, %v2262
      %2264 = vmatmul.f32.gmra.mxu0 %v2020
      %v2265 = vpop.f32.mrf.mxu0
      %v2266 = vadd.f32 %v1983, %v2265
      %2267 = vmatmul.f32.gmra.mxu0 %v2023
      %v2268 = vpop.f32.mrf.mxu0
      %v2269 = vadd.f32 %v1988, %v2268
      %2270 = vmatmul.f32.gmra.mxu0 %v2026
      %v2271 = vpop.f32.mrf.mxu0
      %v2272 = vadd.f32 %v1993, %v2271
      %2273 = vmatmul.f32.gmra.mxu0 %v2029
      %v2274 = vpop.f32.mrf.mxu0
      %v2275 = vadd.f32 %v1998, %v2274
      %2276 = vmatmul.f32.gmra.mxu0 %v2032
      %v2277 = vpop.f32.mrf.mxu0
      %v2278 = vadd.f32 %v2003, %v2277
      %2279 = vmatmul.f32.gmra.mxu0 %v2035
      %v2280 = vpop.f32.mrf.mxu0
      %v2281 = vadd.f32 %v2008, %v2280
      %2282 = vmatmul.f32.gmra.mxu0 %v2038
      %v2283 = vpop.f32.mrf.mxu0
      %v2284 = vadd.f32 %v2013, %v2283
      %2285 = vdwg.mxu0
      %2286 = vmatpush.msra.mxu0 0.0
      %2287 = vmatpush.msra.mxu0 0.0
      %2288 = vmatpush.msra.mxu0 0.0
      %2289 = vmatpush.msra.mxu0 0.0
      %2290 = vmatpush.msra.mxu0 0.0
      %2291 = vmatpush.msra.mxu0 0.0
      %2292 = vmatpush.msra.mxu0 0.0
      %2293 = vmatpush.msra.mxu0 0.0
      %2294 = vmatpush.msra.mxu0 %v1966
      %2295 = vmatpush.msra.mxu0 %v1959
      %2296 = vmatpush.msra.mxu0 %v1952
      %2297 = vmatpush.msra.mxu0 %v1945
      %2298 = vmatpush.msra.mxu0 %v1938
      %2299 = vmatpush.msra.mxu0 %v1931
      %2300 = vmatpush.msra.mxu0 %v1924
      %2301 = vmatpush.msra.mxu0 %v1917
      %2302 = vmatmul.f32.gmra.mxu0 %v2017
      %v2303 = vpop.f32.mrf.mxu0
      %v2304 = vadd.f32 %v1978, %v2303
      %2305 = vmatmul.f32.gmra.mxu0 %v2020
      %v2306 = vpop.f32.mrf.mxu0
      %v2307 = vadd.f32 %v1983, %v2306
      %2308 = vmatmul.f32.gmra.mxu0 %v2023
      %v2309 = vpop.f32.mrf.mxu0
      %v2310 = vadd.f32 %v1988, %v2309
      %2311 = vmatmul.f32.gmra.mxu0 %v2026
      %v2312 = vpop.f32.mrf.mxu0
      %v2313 = vadd.f32 %v1993, %v2312
      %2314 = vmatmul.f32.gmra.mxu0 %v2029
      %v2315 = vpop.f32.mrf.mxu0
      %v2316 = vadd.f32 %v1998, %v2315
      %2317 = vmatmul.f32.gmra.mxu0 %v2032
      %v2318 = vpop.f32.mrf.mxu0
      %v2319 = vadd.f32 %v2003, %v2318
      %2320 = vmatmul.f32.gmra.mxu0 %v2035
      %v2321 = vpop.f32.mrf.mxu0
      %v2322 = vadd.f32 %v2008, %v2321
      %2323 = vmatmul.f32.gmra.mxu0 %v2038
      %v2324 = vpop.f32.mrf.mxu0
      %v2325 = vadd.f32 %v2013, %v2324
      %2326 = vdwg.mxu0
      %v2327 = vmul.f32 %v2058, 100.0
      %v2328 = vmul.f32 %v2099, 100.0
      %v2329 = vmul.f32 %v2140, 100.0
      %v2330 = vmul.f32 %v2181, 100.0
      %v2331 = vmul.f32 %v2222, 100.0
      %v2332 = vmul.f32 %v2263, 100.0
      %v2333 = vmul.f32 %v2304, 100.0
      %v2334 = vmul.f32 %v2061, 100.0
      %v2335 = vmul.f32 %v2102, 100.0
      %v2336 = vmul.f32 %v2143, 100.0
      %v2337 = vmul.f32 %v2184, 100.0
      %v2338 = vmul.f32 %v2225, 100.0
      %v2339 = vmul.f32 %v2266, 100.0
      %v2340 = vmul.f32 %v2307, 100.0
      %v2341 = vmul.f32 %v2064, 100.0
      %v2342 = vmul.f32 %v2105, 100.0
      %v2343 = vmul.f32 %v2146, 100.0
      %v2344 = vmul.f32 %v2187, 100.0
      %v2345 = vmul.f32 %v2228, 100.0
      %v2346 = vmul.f32 %v2269, 100.0
      %v2347 = vmul.f32 %v2310, 100.0
      %v2348 = vmul.f32 %v2067, 100.0
      %v2349 = vmul.f32 %v2108, 100.0
      %v2350 = vmul.f32 %v2149, 100.0
      %v2351 = vmul.f32 %v2190, 100.0
      %v2352 = vmul.f32 %v2231, 100.0
      %v2353 = vmul.f32 %v2272, 100.0
      %v2354 = vmul.f32 %v2313, 100.0
      %v2355 = vmul.f32 %v2070, 100.0
      %v2356 = vmul.f32 %v2111, 100.0
      %v2357 = vmul.f32 %v2152, 100.0
      %v2358 = vmul.f32 %v2193, 100.0
      %v2359 = vmul.f32 %v2234, 100.0
      %v2360 = vmul.f32 %v2275, 100.0
      %v2361 = vmul.f32 %v2316, 100.0
      %v2362 = vmul.f32 %v2073, 100.0
      %v2363 = vmul.f32 %v2114, 100.0
      %v2364 = vmul.f32 %v2155, 100.0
      %v2365 = vmul.f32 %v2196, 100.0
      %v2366 = vmul.f32 %v2237, 100.0
      %v2367 = vmul.f32 %v2278, 100.0
      %v2368 = vmul.f32 %v2319, 100.0
      %v2369 = vmul.f32 %v2076, 100.0
      %v2370 = vmul.f32 %v2117, 100.0
      %v2371 = vmul.f32 %v2158, 100.0
      %v2372 = vmul.f32 %v2199, 100.0
      %v2373 = vmul.f32 %v2240, 100.0
      %v2374 = vmul.f32 %v2281, 100.0
      %v2375 = vmul.f32 %v2322, 100.0
      %v2376 = vmul.f32 %v2079, 100.0
      %v2377 = vmul.f32 %v2120, 100.0
      %v2378 = vmul.f32 %v2161, 100.0
      %v2379 = vmul.f32 %v2202, 100.0
      %v2380 = vmul.f32 %v2243, 100.0
      %v2381 = vmul.f32 %v2284, 100.0
      %v2382 = vmul.f32 %v2325, 100.0
      %v2383 = vmin.f32 %v2327, 20.0
      %v2384 = vmin.f32 %v2328, 20.0
      %v2385 = vmin.f32 %v2329, 20.0
      %v2386 = vmin.f32 %v2330, 20.0
      %v2387 = vmin.f32 %v2331, 20.0
      %v2388 = vmin.f32 %v2332, 20.0
      %v2389 = vmin.f32 %v2333, 20.0
      %v2390 = vmin.f32 %v2334, 20.0
      %v2391 = vmin.f32 %v2335, 20.0
      %v2392 = vmin.f32 %v2336, 20.0
      %v2393 = vmin.f32 %v2337, 20.0
      %v2394 = vmin.f32 %v2338, 20.0
      %v2395 = vmin.f32 %v2339, 20.0
      %v2396 = vmin.f32 %v2340, 20.0
      %v2397 = vmin.f32 %v2341, 20.0
      %v2398 = vmin.f32 %v2342, 20.0
      %v2399 = vmin.f32 %v2343, 20.0
      %v2400 = vmin.f32 %v2344, 20.0
      %v2401 = vmin.f32 %v2345, 20.0
      %v2402 = vmin.f32 %v2346, 20.0
      %v2403 = vmin.f32 %v2347, 20.0
      %v2404 = vmin.f32 %v2348, 20.0
      %v2405 = vmin.f32 %v2349, 20.0
      %v2406 = vmin.f32 %v2350, 20.0
      %v2407 = vmin.f32 %v2351, 20.0
      %v2408 = vmin.f32 %v2352, 20.0
      %v2409 = vmin.f32 %v2353, 20.0
      %v2410 = vmin.f32 %v2354, 20.0
      %v2411 = vmin.f32 %v2355, 20.0
      %v2412 = vmin.f32 %v2356, 20.0
      %v2413 = vmin.f32 %v2357, 20.0
      %v2414 = vmin.f32 %v2358, 20.0
      %v2415 = vmin.f32 %v2359, 20.0
      %v2416 = vmin.f32 %v2360, 20.0
      %v2417 = vmin.f32 %v2361, 20.0
      %v2418 = vmin.f32 %v2362, 20.0
      %v2419 = vmin.f32 %v2363, 20.0
      %v2420 = vmin.f32 %v2364, 20.0
      %v2421 = vmin.f32 %v2365, 20.0
      %v2422 = vmin.f32 %v2366, 20.0
      %v2423 = vmin.f32 %v2367, 20.0
      %v2424 = vmin.f32 %v2368, 20.0
      %v2425 = vmin.f32 %v2369, 20.0
      %v2426 = vmin.f32 %v2370, 20.0
      %v2427 = vmin.f32 %v2371, 20.0
      %v2428 = vmin.f32 %v2372, 20.0
      %v2429 = vmin.f32 %v2373, 20.0
      %v2430 = vmin.f32 %v2374, 20.0
      %v2431 = vmin.f32 %v2375, 20.0
      %v2432 = vmin.f32 %v2376, 20.0
      %v2433 = vmin.f32 %v2377, 20.0
      %v2434 = vmin.f32 %v2378, 20.0
      %v2435 = vmin.f32 %v2379, 20.0
      %v2436 = vmin.f32 %v2380, 20.0
      %v2437 = vmin.f32 %v2381, 20.0
      %v2438 = vmin.f32 %v2382, 20.0
      %v2439 = vmul.f32 %v2383, 1.442695
      %v2440 = vpow.pop %v2439
      %v2441 = vmul.f32 %v2384, 1.442695
      %v2442 = vpow.pop %v2441
      %v2443 = vmul.f32 %v2385, 1.442695
      %v2444 = vpow.pop %v2443
      %v2445 = vmul.f32 %v2386, 1.442695
      %v2446 = vpow.pop %v2445
      %v2447 = vmul.f32 %v2387, 1.442695
      %v2448 = vpow.pop %v2447
      %v2449 = vmul.f32 %v2388, 1.442695
      %v2450 = vpow.pop %v2449
      %v2451 = vmul.f32 %v2389, 1.442695
      %v2452 = vpow.pop %v2451
      %v2453 = vmul.f32 %v2390, 1.442695
      %v2454 = vpow.pop %v2453
      %v2455 = vmul.f32 %v2391, 1.442695
      %v2456 = vpow.pop %v2455
      %v2457 = vmul.f32 %v2392, 1.442695
      %v2458 = vpow.pop %v2457
      %v2459 = vmul.f32 %v2393, 1.442695
      %v2460 = vpow.pop %v2459
      %v2461 = vmul.f32 %v2394, 1.442695
      %v2462 = vpow.pop %v2461
      %v2463 = vmul.f32 %v2395, 1.442695
      %v2464 = vpow.pop %v2463
      %v2465 = vmul.f32 %v2396, 1.442695
      %v2466 = vpow.pop %v2465
      %v2467 = vmul.f32 %v2397, 1.442695
      %v2468 = vpow.pop %v2467
      %v2469 = vmul.f32 %v2398, 1.442695
      %v2470 = vpow.pop %v2469
      %v2471 = vmul.f32 %v2399, 1.442695
      %v2472 = vpow.pop %v2471
      %v2473 = vmul.f32 %v2400, 1.442695
      %v2474 = vpow.pop %v2473
      %v2475 = vmul.f32 %v2401, 1.442695
      %v2476 = vpow.pop %v2475
      %v2477 = vmul.f32 %v2402, 1.442695
      %v2478 = vpow.pop %v2477
      %v2479 = vmul.f32 %v2403, 1.442695
      %v2480 = vpow.pop %v2479
      %v2481 = vmul.f32 %v2404, 1.442695
      %v2482 = vpow.pop %v2481
      %v2483 = vmul.f32 %v2405, 1.442695
      %v2484 = vpow.pop %v2483
      %v2485 = vmul.f32 %v2406, 1.442695
      %v2486 = vpow.pop %v2485
      %v2487 = vmul.f32 %v2407, 1.442695
      %v2488 = vpow.pop %v2487
      %v2489 = vmul.f32 %v2408, 1.442695
      %v2490 = vpow.pop %v2489
      %v2491 = vmul.f32 %v2409, 1.442695
      %v2492 = vpow.pop %v2491
      %v2493 = vmul.f32 %v2410, 1.442695
      %v2494 = vpow.pop %v2493
      %v2495 = vmul.f32 %v2411, 1.442695
      %v2496 = vpow.pop %v2495
      %v2497 = vmul.f32 %v2412, 1.442695
      %v2498 = vpow.pop %v2497
      %v2499 = vmul.f32 %v2413, 1.442695
      %v2500 = vpow.pop %v2499
      %v2501 = vmul.f32 %v2414, 1.442695
      %v2502 = vpow.pop %v2501
      %v2503 = vmul.f32 %v2415, 1.442695
      %v2504 = vpow.pop %v2503
      %v2505 = vmul.f32 %v2416, 1.442695
      %v2506 = vpow.pop %v2505
      %v2507 = vmul.f32 %v2417, 1.442695
      %v2508 = vpow.pop %v2507
      %v2509 = vmul.f32 %v2418, 1.442695
      %v2510 = vpow.pop %v2509
      %v2511 = vmul.f32 %v2419, 1.442695
      %v2512 = vpow.pop %v2511
      %v2513 = vmul.f32 %v2420, 1.442695
      %v2514 = vpow.pop %v2513
      %v2515 = vmul.f32 %v2421, 1.442695
      %v2516 = vpow.pop %v2515
      %v2517 = vmul.f32 %v2422, 1.442695
      %v2518 = vpow.pop %v2517
      %v2519 = vmul.f32 %v2423, 1.442695
      %v2520 = vpow.pop %v2519
      %v2521 = vmul.f32 %v2424, 1.442695
      %v2522 = vpow.pop %v2521
      %v2523 = vmul.f32 %v2425, 1.442695
      %v2524 = vpow.pop %v2523
      %v2525 = vmul.f32 %v2426, 1.442695
      %v2526 = vpow.pop %v2525
      %v2527 = vmul.f32 %v2427, 1.442695
      %v2528 = vpow.pop %v2527
      %v2529 = vmul.f32 %v2428, 1.442695
      %v2530 = vpow.pop %v2529
      %v2531 = vmul.f32 %v2429, 1.442695
      %v2532 = vpow.pop %v2531
      %v2533 = vmul.f32 %v2430, 1.442695
      %v2534 = vpow.pop %v2533
      %v2535 = vmul.f32 %v2431, 1.442695
      %v2536 = vpow.pop %v2535
      %v2537 = vmul.f32 %v2432, 1.442695
      %v2538 = vpow.pop %v2537
      %v2539 = vmul.f32 %v2433, 1.442695
      %v2540 = vpow.pop %v2539
      %v2541 = vmul.f32 %v2434, 1.442695
      %v2542 = vpow.pop %v2541
      %v2543 = vmul.f32 %v2435, 1.442695
      %v2544 = vpow.pop %v2543
      %v2545 = vmul.f32 %v2436, 1.442695
      %v2546 = vpow.pop %v2545
      %v2547 = vmul.f32 %v2437, 1.442695
      %v2548 = vpow.pop %v2547
      %v2549 = vmul.f32 %v2438, 1.442695
      %v2550 = vpow.pop %v2549
      %v2551 = vadd.f32 %v2440, 1.0
      %v2552 = vlog2.pop %v2551
      %v2553 = vmul.f32 %v2552, 0.6931472
      %v2554 = vmul.f32 -0.5, %v2440
      %v2555 = vadd.f32 %v2554, 1.0
      %v2556 = vmul.f32 %v2555, %v2440
      %v2557 = vand.u32 2147483647, %v2440
      %vm2558 = vcmp.lt.f32.partialorder %v2557, 0.0004427343
      %v2559 = vsel %vm2558, %v2556, %v2553
      %v2560 = vadd.f32 %v2442, 1.0
      %v2561 = vlog2.pop %v2560
      %v2562 = vmul.f32 %v2561, 0.6931472
      %v2563 = vmul.f32 -0.5, %v2442
      %v2564 = vadd.f32 %v2563, 1.0
      %v2565 = vmul.f32 %v2564, %v2442
      %v2566 = vand.u32 2147483647, %v2442
      %vm2567 = vcmp.lt.f32.partialorder %v2566, 0.0004427343
      %v2568 = vsel %vm2567, %v2565, %v2562
      %v2569 = vadd.f32 %v2444, 1.0
      %v2570 = vlog2.pop %v2569
      %v2571 = vmul.f32 %v2570, 0.6931472
      %v2572 = vmul.f32 -0.5, %v2444
      %v2573 = vadd.f32 %v2572, 1.0
      %v2574 = vmul.f32 %v2573, %v2444
      %v2575 = vand.u32 2147483647, %v2444
      %vm2576 = vcmp.lt.f32.partialorder %v2575, 0.0004427343
      %v2577 = vsel %vm2576, %v2574, %v2571
      %v2578 = vadd.f32 %v2446, 1.0
      %v2579 = vlog2.pop %v2578
      %v2580 = vmul.f32 %v2579, 0.6931472
      %v2581 = vmul.f32 -0.5, %v2446
      %v2582 = vadd.f32 %v2581, 1.0
      %v2583 = vmul.f32 %v2582, %v2446
      %v2584 = vand.u32 2147483647, %v2446
      %vm2585 = vcmp.lt.f32.partialorder %v2584, 0.0004427343
      %v2586 = vsel %vm2585, %v2583, %v2580
      %v2587 = vadd.f32 %v2448, 1.0
      %v2588 = vlog2.pop %v2587
      %v2589 = vmul.f32 %v2588, 0.6931472
      %v2590 = vmul.f32 -0.5, %v2448
      %v2591 = vadd.f32 %v2590, 1.0
      %v2592 = vmul.f32 %v2591, %v2448
      %v2593 = vand.u32 2147483647, %v2448
      %vm2594 = vcmp.lt.f32.partialorder %v2593, 0.0004427343
      %v2595 = vsel %vm2594, %v2592, %v2589
      %v2596 = vadd.f32 %v2450, 1.0
      %v2597 = vlog2.pop %v2596
      %v2598 = vmul.f32 %v2597, 0.6931472
      %v2599 = vmul.f32 -0.5, %v2450
      %v2600 = vadd.f32 %v2599, 1.0
      %v2601 = vmul.f32 %v2600, %v2450
      %v2602 = vand.u32 2147483647, %v2450
      %vm2603 = vcmp.lt.f32.partialorder %v2602, 0.0004427343
      %v2604 = vsel %vm2603, %v2601, %v2598
      %v2605 = vadd.f32 %v2452, 1.0
      %v2606 = vlog2.pop %v2605
      %v2607 = vmul.f32 %v2606, 0.6931472
      %v2608 = vmul.f32 -0.5, %v2452
      %v2609 = vadd.f32 %v2608, 1.0
      %v2610 = vmul.f32 %v2609, %v2452
      %v2611 = vand.u32 2147483647, %v2452
      %vm2612 = vcmp.lt.f32.partialorder %v2611, 0.0004427343
      %v2613 = vsel %vm2612, %v2610, %v2607
      %v2614 = vadd.f32 %v2454, 1.0
      %v2615 = vlog2.pop %v2614
      %v2616 = vmul.f32 %v2615, 0.6931472
      %v2617 = vmul.f32 -0.5, %v2454
      %v2618 = vadd.f32 %v2617, 1.0
      %v2619 = vmul.f32 %v2618, %v2454
      %v2620 = vand.u32 2147483647, %v2454
      %vm2621 = vcmp.lt.f32.partialorder %v2620, 0.0004427343
      %v2622 = vsel %vm2621, %v2619, %v2616
      %v2623 = vadd.f32 %v2456, 1.0
      %v2624 = vlog2.pop %v2623
      %v2625 = vmul.f32 %v2624, 0.6931472
      %v2626 = vmul.f32 -0.5, %v2456
      %v2627 = vadd.f32 %v2626, 1.0
      %v2628 = vmul.f32 %v2627, %v2456
      %v2629 = vand.u32 2147483647, %v2456
      %vm2630 = vcmp.lt.f32.partialorder %v2629, 0.0004427343
      %v2631 = vsel %vm2630, %v2628, %v2625
      %v2632 = vadd.f32 %v2458, 1.0
      %v2633 = vlog2.pop %v2632
      %v2634 = vmul.f32 %v2633, 0.6931472
      %v2635 = vmul.f32 -0.5, %v2458
      %v2636 = vadd.f32 %v2635, 1.0
      %v2637 = vmul.f32 %v2636, %v2458
      %v2638 = vand.u32 2147483647, %v2458
      %vm2639 = vcmp.lt.f32.partialorder %v2638, 0.0004427343
      %v2640 = vsel %vm2639, %v2637, %v2634
      %v2641 = vadd.f32 %v2460, 1.0
      %v2642 = vlog2.pop %v2641
      %v2643 = vmul.f32 %v2642, 0.6931472
      %v2644 = vmul.f32 -0.5, %v2460
      %v2645 = vadd.f32 %v2644, 1.0
      %v2646 = vmul.f32 %v2645, %v2460
      %v2647 = vand.u32 2147483647, %v2460
      %vm2648 = vcmp.lt.f32.partialorder %v2647, 0.0004427343
      %v2649 = vsel %vm2648, %v2646, %v2643
      %v2650 = vadd.f32 %v2462, 1.0
      %v2651 = vlog2.pop %v2650
      %v2652 = vmul.f32 %v2651, 0.6931472
      %v2653 = vmul.f32 -0.5, %v2462
      %v2654 = vadd.f32 %v2653, 1.0
      %v2655 = vmul.f32 %v2654, %v2462
      %v2656 = vand.u32 2147483647, %v2462
      %vm2657 = vcmp.lt.f32.partialorder %v2656, 0.0004427343
      %v2658 = vsel %vm2657, %v2655, %v2652
      %v2659 = vadd.f32 %v2464, 1.0
      %v2660 = vlog2.pop %v2659
      %v2661 = vmul.f32 %v2660, 0.6931472
      %v2662 = vmul.f32 -0.5, %v2464
      %v2663 = vadd.f32 %v2662, 1.0
      %v2664 = vmul.f32 %v2663, %v2464
      %v2665 = vand.u32 2147483647, %v2464
      %vm2666 = vcmp.lt.f32.partialorder %v2665, 0.0004427343
      %v2667 = vsel %vm2666, %v2664, %v2661
      %v2668 = vadd.f32 %v2466, 1.0
      %v2669 = vlog2.pop %v2668
      %v2670 = vmul.f32 %v2669, 0.6931472
      %v2671 = vmul.f32 -0.5, %v2466
      %v2672 = vadd.f32 %v2671, 1.0
      %v2673 = vmul.f32 %v2672, %v2466
      %v2674 = vand.u32 2147483647, %v2466
      %vm2675 = vcmp.lt.f32.partialorder %v2674, 0.0004427343
      %v2676 = vsel %vm2675, %v2673, %v2670
      %v2677 = vadd.f32 %v2468, 1.0
      %v2678 = vlog2.pop %v2677
      %v2679 = vmul.f32 %v2678, 0.6931472
      %v2680 = vmul.f32 -0.5, %v2468
      %v2681 = vadd.f32 %v2680, 1.0
      %v2682 = vmul.f32 %v2681, %v2468
      %v2683 = vand.u32 2147483647, %v2468
      %vm2684 = vcmp.lt.f32.partialorder %v2683, 0.0004427343
      %v2685 = vsel %vm2684, %v2682, %v2679
      %v2686 = vadd.f32 %v2470, 1.0
      %v2687 = vlog2.pop %v2686
      %v2688 = vmul.f32 %v2687, 0.6931472
      %v2689 = vmul.f32 -0.5, %v2470
      %v2690 = vadd.f32 %v2689, 1.0
      %v2691 = vmul.f32 %v2690, %v2470
      %v2692 = vand.u32 2147483647, %v2470
      %vm2693 = vcmp.lt.f32.partialorder %v2692, 0.0004427343
      %v2694 = vsel %vm2693, %v2691, %v2688
      %v2695 = vadd.f32 %v2472, 1.0
      %v2696 = vlog2.pop %v2695
      %v2697 = vmul.f32 %v2696, 0.6931472
      %v2698 = vmul.f32 -0.5, %v2472
      %v2699 = vadd.f32 %v2698, 1.0
      %v2700 = vmul.f32 %v2699, %v2472
      %v2701 = vand.u32 2147483647, %v2472
      %vm2702 = vcmp.lt.f32.partialorder %v2701, 0.0004427343
      %v2703 = vsel %vm2702, %v2700, %v2697
      %v2704 = vadd.f32 %v2474, 1.0
      %v2705 = vlog2.pop %v2704
      %v2706 = vmul.f32 %v2705, 0.6931472
      %v2707 = vmul.f32 -0.5, %v2474
      %v2708 = vadd.f32 %v2707, 1.0
      %v2709 = vmul.f32 %v2708, %v2474
      %v2710 = vand.u32 2147483647, %v2474
      %vm2711 = vcmp.lt.f32.partialorder %v2710, 0.0004427343
      %v2712 = vsel %vm2711, %v2709, %v2706
      %v2713 = vadd.f32 %v2476, 1.0
      %v2714 = vlog2.pop %v2713
      %v2715 = vmul.f32 %v2714, 0.6931472
      %v2716 = vmul.f32 -0.5, %v2476
      %v2717 = vadd.f32 %v2716, 1.0
      %v2718 = vmul.f32 %v2717, %v2476
      %v2719 = vand.u32 2147483647, %v2476
      %vm2720 = vcmp.lt.f32.partialorder %v2719, 0.0004427343
      %v2721 = vsel %vm2720, %v2718, %v2715
      %v2722 = vadd.f32 %v2478, 1.0
      %v2723 = vlog2.pop %v2722
      %v2724 = vmul.f32 %v2723, 0.6931472
      %v2725 = vmul.f32 -0.5, %v2478
      %v2726 = vadd.f32 %v2725, 1.0
      %v2727 = vmul.f32 %v2726, %v2478
      %v2728 = vand.u32 2147483647, %v2478
      %vm2729 = vcmp.lt.f32.partialorder %v2728, 0.0004427343
      %v2730 = vsel %vm2729, %v2727, %v2724
      %v2731 = vadd.f32 %v2480, 1.0
      %v2732 = vlog2.pop %v2731
      %v2733 = vmul.f32 %v2732, 0.6931472
      %v2734 = vmul.f32 -0.5, %v2480
      %v2735 = vadd.f32 %v2734, 1.0
      %v2736 = vmul.f32 %v2735, %v2480
      %v2737 = vand.u32 2147483647, %v2480
      %vm2738 = vcmp.lt.f32.partialorder %v2737, 0.0004427343
      %v2739 = vsel %vm2738, %v2736, %v2733
      %v2740 = vadd.f32 %v2482, 1.0
      %v2741 = vlog2.pop %v2740
      %v2742 = vmul.f32 %v2741, 0.6931472
      %v2743 = vmul.f32 -0.5, %v2482
      %v2744 = vadd.f32 %v2743, 1.0
      %v2745 = vmul.f32 %v2744, %v2482
      %v2746 = vand.u32 2147483647, %v2482
      %vm2747 = vcmp.lt.f32.partialorder %v2746, 0.0004427343
      %v2748 = vsel %vm2747, %v2745, %v2742
      %v2749 = vadd.f32 %v2484, 1.0
      %v2750 = vlog2.pop %v2749
      %v2751 = vmul.f32 %v2750, 0.6931472
      %v2752 = vmul.f32 -0.5, %v2484
      %v2753 = vadd.f32 %v2752, 1.0
      %v2754 = vmul.f32 %v2753, %v2484
      %v2755 = vand.u32 2147483647, %v2484
      %vm2756 = vcmp.lt.f32.partialorder %v2755, 0.0004427343
      %v2757 = vsel %vm2756, %v2754, %v2751
      %v2758 = vadd.f32 %v2486, 1.0
      %v2759 = vlog2.pop %v2758
      %v2760 = vmul.f32 %v2759, 0.6931472
      %v2761 = vmul.f32 -0.5, %v2486
      %v2762 = vadd.f32 %v2761, 1.0
      %v2763 = vmul.f32 %v2762, %v2486
      %v2764 = vand.u32 2147483647, %v2486
      %vm2765 = vcmp.lt.f32.partialorder %v2764, 0.0004427343
      %v2766 = vsel %vm2765, %v2763, %v2760
      %v2767 = vadd.f32 %v2488, 1.0
      %v2768 = vlog2.pop %v2767
      %v2769 = vmul.f32 %v2768, 0.6931472
      %v2770 = vmul.f32 -0.5, %v2488
      %v2771 = vadd.f32 %v2770, 1.0
      %v2772 = vmul.f32 %v2771, %v2488
      %v2773 = vand.u32 2147483647, %v2488
      %vm2774 = vcmp.lt.f32.partialorder %v2773, 0.0004427343
      %v2775 = vsel %vm2774, %v2772, %v2769
      %v2776 = vadd.f32 %v2490, 1.0
      %v2777 = vlog2.pop %v2776
      %v2778 = vmul.f32 %v2777, 0.6931472
      %v2779 = vmul.f32 -0.5, %v2490
      %v2780 = vadd.f32 %v2779, 1.0
      %v2781 = vmul.f32 %v2780, %v2490
      %v2782 = vand.u32 2147483647, %v2490
      %vm2783 = vcmp.lt.f32.partialorder %v2782, 0.0004427343
      %v2784 = vsel %vm2783, %v2781, %v2778
      %v2785 = vadd.f32 %v2492, 1.0
      %v2786 = vlog2.pop %v2785
      %v2787 = vmul.f32 %v2786, 0.6931472
      %v2788 = vmul.f32 -0.5, %v2492
      %v2789 = vadd.f32 %v2788, 1.0
      %v2790 = vmul.f32 %v2789, %v2492
      %v2791 = vand.u32 2147483647, %v2492
      %vm2792 = vcmp.lt.f32.partialorder %v2791, 0.0004427343
      %v2793 = vsel %vm2792, %v2790, %v2787
      %v2794 = vadd.f32 %v2494, 1.0
      %v2795 = vlog2.pop %v2794
      %v2796 = vmul.f32 %v2795, 0.6931472
      %v2797 = vmul.f32 -0.5, %v2494
      %v2798 = vadd.f32 %v2797, 1.0
      %v2799 = vmul.f32 %v2798, %v2494
      %v2800 = vand.u32 2147483647, %v2494
      %vm2801 = vcmp.lt.f32.partialorder %v2800, 0.0004427343
      %v2802 = vsel %vm2801, %v2799, %v2796
      %v2803 = vadd.f32 %v2496, 1.0
      %v2804 = vlog2.pop %v2803
      %v2805 = vmul.f32 %v2804, 0.6931472
      %v2806 = vmul.f32 -0.5, %v2496
      %v2807 = vadd.f32 %v2806, 1.0
      %v2808 = vmul.f32 %v2807, %v2496
      %v2809 = vand.u32 2147483647, %v2496
      %vm2810 = vcmp.lt.f32.partialorder %v2809, 0.0004427343
      %v2811 = vsel %vm2810, %v2808, %v2805
      %v2812 = vadd.f32 %v2498, 1.0
      %v2813 = vlog2.pop %v2812
      %v2814 = vmul.f32 %v2813, 0.6931472
      %v2815 = vmul.f32 -0.5, %v2498
      %v2816 = vadd.f32 %v2815, 1.0
      %v2817 = vmul.f32 %v2816, %v2498
      %v2818 = vand.u32 2147483647, %v2498
      %vm2819 = vcmp.lt.f32.partialorder %v2818, 0.0004427343
      %v2820 = vsel %vm2819, %v2817, %v2814
      %v2821 = vadd.f32 %v2500, 1.0
      %v2822 = vlog2.pop %v2821
      %v2823 = vmul.f32 %v2822, 0.6931472
      %v2824 = vmul.f32 -0.5, %v2500
      %v2825 = vadd.f32 %v2824, 1.0
      %v2826 = vmul.f32 %v2825, %v2500
      %v2827 = vand.u32 2147483647, %v2500
      %vm2828 = vcmp.lt.f32.partialorder %v2827, 0.0004427343
      %v2829 = vsel %vm2828, %v2826, %v2823
      %v2830 = vadd.f32 %v2502, 1.0
      %v2831 = vlog2.pop %v2830
      %v2832 = vmul.f32 %v2831, 0.6931472
      %v2833 = vmul.f32 -0.5, %v2502
      %v2834 = vadd.f32 %v2833, 1.0
      %v2835 = vmul.f32 %v2834, %v2502
      %v2836 = vand.u32 2147483647, %v2502
      %vm2837 = vcmp.lt.f32.partialorder %v2836, 0.0004427343
      %v2838 = vsel %vm2837, %v2835, %v2832
      %v2839 = vadd.f32 %v2504, 1.0
      %v2840 = vlog2.pop %v2839
      %v2841 = vmul.f32 %v2840, 0.6931472
      %v2842 = vmul.f32 -0.5, %v2504
      %v2843 = vadd.f32 %v2842, 1.0
      %v2844 = vmul.f32 %v2843, %v2504
      %v2845 = vand.u32 2147483647, %v2504
      %vm2846 = vcmp.lt.f32.partialorder %v2845, 0.0004427343
      %v2847 = vsel %vm2846, %v2844, %v2841
      %v2848 = vadd.f32 %v2506, 1.0
      %v2849 = vlog2.pop %v2848
      %v2850 = vmul.f32 %v2849, 0.6931472
      %v2851 = vmul.f32 -0.5, %v2506
      %v2852 = vadd.f32 %v2851, 1.0
      %v2853 = vmul.f32 %v2852, %v2506
      %v2854 = vand.u32 2147483647, %v2506
      %vm2855 = vcmp.lt.f32.partialorder %v2854, 0.0004427343
      %v2856 = vsel %vm2855, %v2853, %v2850
      %v2857 = vadd.f32 %v2508, 1.0
      %v2858 = vlog2.pop %v2857
      %v2859 = vmul.f32 %v2858, 0.6931472
      %v2860 = vmul.f32 -0.5, %v2508
      %v2861 = vadd.f32 %v2860, 1.0
      %v2862 = vmul.f32 %v2861, %v2508
      %v2863 = vand.u32 2147483647, %v2508
      %vm2864 = vcmp.lt.f32.partialorder %v2863, 0.0004427343
      %v2865 = vsel %vm2864, %v2862, %v2859
      %v2866 = vadd.f32 %v2510, 1.0
      %v2867 = vlog2.pop %v2866
      %v2868 = vmul.f32 %v2867, 0.6931472
      %v2869 = vmul.f32 -0.5, %v2510
      %v2870 = vadd.f32 %v2869, 1.0
      %v2871 = vmul.f32 %v2870, %v2510
      %v2872 = vand.u32 2147483647, %v2510
      %vm2873 = vcmp.lt.f32.partialorder %v2872, 0.0004427343
      %v2874 = vsel %vm2873, %v2871, %v2868
      %v2875 = vadd.f32 %v2512, 1.0
      %v2876 = vlog2.pop %v2875
      %v2877 = vmul.f32 %v2876, 0.6931472
      %v2878 = vmul.f32 -0.5, %v2512
      %v2879 = vadd.f32 %v2878, 1.0
      %v2880 = vmul.f32 %v2879, %v2512
      %v2881 = vand.u32 2147483647, %v2512
      %vm2882 = vcmp.lt.f32.partialorder %v2881, 0.0004427343
      %v2883 = vsel %vm2882, %v2880, %v2877
      %v2884 = vadd.f32 %v2514, 1.0
      %v2885 = vlog2.pop %v2884
      %v2886 = vmul.f32 %v2885, 0.6931472
      %v2887 = vmul.f32 -0.5, %v2514
      %v2888 = vadd.f32 %v2887, 1.0
      %v2889 = vmul.f32 %v2888, %v2514
      %v2890 = vand.u32 2147483647, %v2514
      %vm2891 = vcmp.lt.f32.partialorder %v2890, 0.0004427343
      %v2892 = vsel %vm2891, %v2889, %v2886
      %v2893 = vadd.f32 %v2516, 1.0
      %v2894 = vlog2.pop %v2893
      %v2895 = vmul.f32 %v2894, 0.6931472
      %v2896 = vmul.f32 -0.5, %v2516
      %v2897 = vadd.f32 %v2896, 1.0
      %v2898 = vmul.f32 %v2897, %v2516
      %v2899 = vand.u32 2147483647, %v2516
      %vm2900 = vcmp.lt.f32.partialorder %v2899, 0.0004427343
      %v2901 = vsel %vm2900, %v2898, %v2895
      %v2902 = vadd.f32 %v2518, 1.0
      %v2903 = vlog2.pop %v2902
      %v2904 = vmul.f32 %v2903, 0.6931472
      %v2905 = vmul.f32 -0.5, %v2518
      %v2906 = vadd.f32 %v2905, 1.0
      %v2907 = vmul.f32 %v2906, %v2518
      %v2908 = vand.u32 2147483647, %v2518
      %vm2909 = vcmp.lt.f32.partialorder %v2908, 0.0004427343
      %v2910 = vsel %vm2909, %v2907, %v2904
      %v2911 = vadd.f32 %v2520, 1.0
      %v2912 = vlog2.pop %v2911
      %v2913 = vmul.f32 %v2912, 0.6931472
      %v2914 = vmul.f32 -0.5, %v2520
      %v2915 = vadd.f32 %v2914, 1.0
      %v2916 = vmul.f32 %v2915, %v2520
      %v2917 = vand.u32 2147483647, %v2520
      %vm2918 = vcmp.lt.f32.partialorder %v2917, 0.0004427343
      %v2919 = vsel %vm2918, %v2916, %v2913
      %v2920 = vadd.f32 %v2522, 1.0
      %v2921 = vlog2.pop %v2920
      %v2922 = vmul.f32 %v2921, 0.6931472
      %v2923 = vmul.f32 -0.5, %v2522
      %v2924 = vadd.f32 %v2923, 1.0
      %v2925 = vmul.f32 %v2924, %v2522
      %v2926 = vand.u32 2147483647, %v2522
      %vm2927 = vcmp.lt.f32.partialorder %v2926, 0.0004427343
      %v2928 = vsel %vm2927, %v2925, %v2922
      %v2929 = vadd.f32 %v2524, 1.0
      %v2930 = vlog2.pop %v2929
      %v2931 = vmul.f32 %v2930, 0.6931472
      %v2932 = vmul.f32 -0.5, %v2524
      %v2933 = vadd.f32 %v2932, 1.0
      %v2934 = vmul.f32 %v2933, %v2524
      %v2935 = vand.u32 2147483647, %v2524
      %vm2936 = vcmp.lt.f32.partialorder %v2935, 0.0004427343
      %v2937 = vsel %vm2936, %v2934, %v2931
      %v2938 = vadd.f32 %v2526, 1.0
      %v2939 = vlog2.pop %v2938
      %v2940 = vmul.f32 %v2939, 0.6931472
      %v2941 = vmul.f32 -0.5, %v2526
      %v2942 = vadd.f32 %v2941, 1.0
      %v2943 = vmul.f32 %v2942, %v2526
      %v2944 = vand.u32 2147483647, %v2526
      %vm2945 = vcmp.lt.f32.partialorder %v2944, 0.0004427343
      %v2946 = vsel %vm2945, %v2943, %v2940
      %v2947 = vadd.f32 %v2528, 1.0
      %v2948 = vlog2.pop %v2947
      %v2949 = vmul.f32 %v2948, 0.6931472
      %v2950 = vmul.f32 -0.5, %v2528
      %v2951 = vadd.f32 %v2950, 1.0
      %v2952 = vmul.f32 %v2951, %v2528
      %v2953 = vand.u32 2147483647, %v2528
      %vm2954 = vcmp.lt.f32.partialorder %v2953, 0.0004427343
      %v2955 = vsel %vm2954, %v2952, %v2949
      %v2956 = vadd.f32 %v2530, 1.0
      %v2957 = vlog2.pop %v2956
      %v2958 = vmul.f32 %v2957, 0.6931472
      %v2959 = vmul.f32 -0.5, %v2530
      %v2960 = vadd.f32 %v2959, 1.0
      %v2961 = vmul.f32 %v2960, %v2530
      %v2962 = vand.u32 2147483647, %v2530
      %vm2963 = vcmp.lt.f32.partialorder %v2962, 0.0004427343
      %v2964 = vsel %vm2963, %v2961, %v2958
      %v2965 = vadd.f32 %v2532, 1.0
      %v2966 = vlog2.pop %v2965
      %v2967 = vmul.f32 %v2966, 0.6931472
      %v2968 = vmul.f32 -0.5, %v2532
      %v2969 = vadd.f32 %v2968, 1.0
      %v2970 = vmul.f32 %v2969, %v2532
      %v2971 = vand.u32 2147483647, %v2532
      %vm2972 = vcmp.lt.f32.partialorder %v2971, 0.0004427343
      %v2973 = vsel %vm2972, %v2970, %v2967
      %v2974 = vadd.f32 %v2534, 1.0
      %v2975 = vlog2.pop %v2974
      %v2976 = vmul.f32 %v2975, 0.6931472
      %v2977 = vmul.f32 -0.5, %v2534
      %v2978 = vadd.f32 %v2977, 1.0
      %v2979 = vmul.f32 %v2978, %v2534
      %v2980 = vand.u32 2147483647, %v2534
      %vm2981 = vcmp.lt.f32.partialorder %v2980, 0.0004427343
      %v2982 = vsel %vm2981, %v2979, %v2976
      %v2983 = vadd.f32 %v2536, 1.0
      %v2984 = vlog2.pop %v2983
      %v2985 = vmul.f32 %v2984, 0.6931472
      %v2986 = vmul.f32 -0.5, %v2536
      %v2987 = vadd.f32 %v2986, 1.0
      %v2988 = vmul.f32 %v2987, %v2536
      %v2989 = vand.u32 2147483647, %v2536
      %vm2990 = vcmp.lt.f32.partialorder %v2989, 0.0004427343
      %v2991 = vsel %vm2990, %v2988, %v2985
      %v2992 = vadd.f32 %v2538, 1.0
      %v2993 = vlog2.pop %v2992
      %v2994 = vmul.f32 %v2993, 0.6931472
      %v2995 = vmul.f32 -0.5, %v2538
      %v2996 = vadd.f32 %v2995, 1.0
      %v2997 = vmul.f32 %v2996, %v2538
      %v2998 = vand.u32 2147483647, %v2538
      %vm2999 = vcmp.lt.f32.partialorder %v2998, 0.0004427343
      %v3000 = vsel %vm2999, %v2997, %v2994
      %v3001 = vadd.f32 %v2540, 1.0
      %v3002 = vlog2.pop %v3001
      %v3003 = vmul.f32 %v3002, 0.6931472
      %v3004 = vmul.f32 -0.5, %v2540
      %v3005 = vadd.f32 %v3004, 1.0
      %v3006 = vmul.f32 %v3005, %v2540
      %v3007 = vand.u32 2147483647, %v2540
      %vm3008 = vcmp.lt.f32.partialorder %v3007, 0.0004427343
      %v3009 = vsel %vm3008, %v3006, %v3003
      %v3010 = vadd.f32 %v2542, 1.0
      %v3011 = vlog2.pop %v3010
      %v3012 = vmul.f32 %v3011, 0.6931472
      %v3013 = vmul.f32 -0.5, %v2542
      %v3014 = vadd.f32 %v3013, 1.0
      %v3015 = vmul.f32 %v3014, %v2542
      %v3016 = vand.u32 2147483647, %v2542
      %vm3017 = vcmp.lt.f32.partialorder %v3016, 0.0004427343
      %v3018 = vsel %vm3017, %v3015, %v3012
      %v3019 = vadd.f32 %v2544, 1.0
      %v3020 = vlog2.pop %v3019
      %v3021 = vmul.f32 %v3020, 0.6931472
      %v3022 = vmul.f32 -0.5, %v2544
      %v3023 = vadd.f32 %v3022, 1.0
      %v3024 = vmul.f32 %v3023, %v2544
      %v3025 = vand.u32 2147483647, %v2544
      %vm3026 = vcmp.lt.f32.partialorder %v3025, 0.0004427343
      %v3027 = vsel %vm3026, %v3024, %v3021
      %v3028 = vadd.f32 %v2546, 1.0
      %v3029 = vlog2.pop %v3028
      %v3030 = vmul.f32 %v3029, 0.6931472
      %v3031 = vmul.f32 -0.5, %v2546
      %v3032 = vadd.f32 %v3031, 1.0
      %v3033 = vmul.f32 %v3032, %v2546
      %v3034 = vand.u32 2147483647, %v2546
      %vm3035 = vcmp.lt.f32.partialorder %v3034, 0.0004427343
      %v3036 = vsel %vm3035, %v3033, %v3030
      %v3037 = vadd.f32 %v2548, 1.0
      %v3038 = vlog2.pop %v3037
      %v3039 = vmul.f32 %v3038, 0.6931472
      %v3040 = vmul.f32 -0.5, %v2548
      %v3041 = vadd.f32 %v3040, 1.0
      %v3042 = vmul.f32 %v3041, %v2548
      %v3043 = vand.u32 2147483647, %v2548
      %vm3044 = vcmp.lt.f32.partialorder %v3043, 0.0004427343
      %v3045 = vsel %vm3044, %v3042, %v3039
      %v3046 = vadd.f32 %v2550, 1.0
      %v3047 = vlog2.pop %v3046
      %v3048 = vmul.f32 %v3047, 0.6931472
      %v3049 = vmul.f32 -0.5, %v2550
      %v3050 = vadd.f32 %v3049, 1.0
      %v3051 = vmul.f32 %v3050, %v2550
      %v3052 = vand.u32 2147483647, %v2550
      %vm3053 = vcmp.lt.f32.partialorder %v3052, 0.0004427343
      %v3054 = vsel %vm3053, %v3051, %v3048
      %v3055 = vmul.f32 %v2559, 0.01
      %v3056 = vmul.f32 %v2568, 0.01
      %v3057 = vmul.f32 %v2577, 0.01
      %v3058 = vmul.f32 %v2586, 0.01
      %v3059 = vmul.f32 %v2595, 0.01
      %v3060 = vmul.f32 %v2604, 0.01
      %v3061 = vmul.f32 %v2613, 0.01
      %v3062 = vmul.f32 %v2622, 0.01
      %v3063 = vmul.f32 %v2631, 0.01
      %v3064 = vmul.f32 %v2640, 0.01
      %v3065 = vmul.f32 %v2649, 0.01
      %v3066 = vmul.f32 %v2658, 0.01
      %v3067 = vmul.f32 %v2667, 0.01
      %v3068 = vmul.f32 %v2676, 0.01
      %v3069 = vmul.f32 %v2685, 0.01
      %v3070 = vmul.f32 %v2694, 0.01
      %v3071 = vmul.f32 %v2703, 0.01
      %v3072 = vmul.f32 %v2712, 0.01
      %v3073 = vmul.f32 %v2721, 0.01
      %v3074 = vmul.f32 %v2730, 0.01
      %v3075 = vmul.f32 %v2739, 0.01
      %v3076 = vmul.f32 %v2748, 0.01
      %v3077 = vmul.f32 %v2757, 0.01
      %v3078 = vmul.f32 %v2766, 0.01
      %v3079 = vmul.f32 %v2775, 0.01
      %v3080 = vmul.f32 %v2784, 0.01
      %v3081 = vmul.f32 %v2793, 0.01
      %v3082 = vmul.f32 %v2802, 0.01
      %v3083 = vmul.f32 %v2811, 0.01
      %v3084 = vmul.f32 %v2820, 0.01
      %v3085 = vmul.f32 %v2829, 0.01
      %v3086 = vmul.f32 %v2838, 0.01
      %v3087 = vmul.f32 %v2847, 0.01
      %v3088 = vmul.f32 %v2856, 0.01
      %v3089 = vmul.f32 %v2865, 0.01
      %v3090 = vmul.f32 %v2874, 0.01
      %v3091 = vmul.f32 %v2883, 0.01
      %v3092 = vmul.f32 %v2892, 0.01
      %v3093 = vmul.f32 %v2901, 0.01
      %v3094 = vmul.f32 %v2910, 0.01
      %v3095 = vmul.f32 %v2919, 0.01
      %v3096 = vmul.f32 %v2928, 0.01
      %v3097 = vmul.f32 %v2937, 0.01
      %v3098 = vmul.f32 %v2946, 0.01
      %v3099 = vmul.f32 %v2955, 0.01
      %v3100 = vmul.f32 %v2964, 0.01
      %v3101 = vmul.f32 %v2973, 0.01
      %v3102 = vmul.f32 %v2982, 0.01
      %v3103 = vmul.f32 %v2991, 0.01
      %v3104 = vmul.f32 %v3000, 0.01
      %v3105 = vmul.f32 %v3009, 0.01
      %v3106 = vmul.f32 %v3018, 0.01
      %v3107 = vmul.f32 %v3027, 0.01
      %v3108 = vmul.f32 %v3036, 0.01
      %v3109 = vmul.f32 %v3045, 0.01
      %v3110 = vmul.f32 %v3054, 0.01
      %vm3111 = vcmp.gt.f32.partialorder %v2327, 20.0
      %vm3112 = vcmp.gt.f32.partialorder %v2328, 20.0
      %vm3113 = vcmp.gt.f32.partialorder %v2329, 20.0
      %vm3114 = vcmp.gt.f32.partialorder %v2330, 20.0
      %vm3115 = vcmp.gt.f32.partialorder %v2331, 20.0
      %vm3116 = vcmp.gt.f32.partialorder %v2332, 20.0
      %vm3117 = vcmp.gt.f32.partialorder %v2333, 20.0
      %vm3118 = vcmp.gt.f32.partialorder %v2334, 20.0
      %vm3119 = vcmp.gt.f32.partialorder %v2335, 20.0
      %vm3120 = vcmp.gt.f32.partialorder %v2336, 20.0
      %vm3121 = vcmp.gt.f32.partialorder %v2337, 20.0
      %vm3122 = vcmp.gt.f32.partialorder %v2338, 20.0
      %vm3123 = vcmp.gt.f32.partialorder %v2339, 20.0
      %vm3124 = vcmp.gt.f32.partialorder %v2340, 20.0
      %vm3125 = vcmp.gt.f32.partialorder %v2341, 20.0
      %vm3126 = vcmp.gt.f32.partialorder %v2342, 20.0
      %vm3127 = vcmp.gt.f32.partialorder %v2343, 20.0
      %vm3128 = vcmp.gt.f32.partialorder %v2344, 20.0
      %vm3129 = vcmp.gt.f32.partialorder %v2345, 20.0
      %vm3130 = vcmp.gt.f32.partialorder %v2346, 20.0
      %vm3131 = vcmp.gt.f32.partialorder %v2347, 20.0
      %vm3132 = vcmp.gt.f32.partialorder %v2348, 20.0
      %vm3133 = vcmp.gt.f32.partialorder %v2349, 20.0
      %vm3134 = vcmp.gt.f32.partialorder %v2350, 20.0
      %vm3135 = vcmp.gt.f32.partialorder %v2351, 20.0
      %vm3136 = vcmp.gt.f32.partialorder %v2352, 20.0
      %vm3137 = vcmp.gt.f32.partialorder %v2353, 20.0
      %vm3138 = vcmp.gt.f32.partialorder %v2354, 20.0
      %vm3139 = vcmp.gt.f32.partialorder %v2355, 20.0
      %vm3140 = vcmp.gt.f32.partialorder %v2356, 20.0
      %vm3141 = vcmp.gt.f32.partialorder %v2357, 20.0
      %vm3142 = vcmp.gt.f32.partialorder %v2358, 20.0
      %vm3143 = vcmp.gt.f32.partialorder %v2359, 20.0
      %vm3144 = vcmp.gt.f32.partialorder %v2360, 20.0
      %vm3145 = vcmp.gt.f32.partialorder %v2361, 20.0
      %vm3146 = vcmp.gt.f32.partialorder %v2362, 20.0
      %vm3147 = vcmp.gt.f32.partialorder %v2363, 20.0
      %vm3148 = vcmp.gt.f32.partialorder %v2364, 20.0
      %vm3149 = vcmp.gt.f32.partialorder %v2365, 20.0
      %vm3150 = vcmp.gt.f32.partialorder %v2366, 20.0
      %vm3151 = vcmp.gt.f32.partialorder %v2367, 20.0
      %vm3152 = vcmp.gt.f32.partialorder %v2368, 20.0
      %vm3153 = vcmp.gt.f32.partialorder %v2369, 20.0
      %vm3154 = vcmp.gt.f32.partialorder %v2370, 20.0
      %vm3155 = vcmp.gt.f32.partialorder %v2371, 20.0
      %vm3156 = vcmp.gt.f32.partialorder %v2372, 20.0
      %vm3157 = vcmp.gt.f32.partialorder %v2373, 20.0
      %vm3158 = vcmp.gt.f32.partialorder %v2374, 20.0
      %vm3159 = vcmp.gt.f32.partialorder %v2375, 20.0
      %vm3160 = vcmp.gt.f32.partialorder %v2376, 20.0
      %vm3161 = vcmp.gt.f32.partialorder %v2377, 20.0
      %vm3162 = vcmp.gt.f32.partialorder %v2378, 20.0
      %vm3163 = vcmp.gt.f32.partialorder %v2379, 20.0
      %vm3164 = vcmp.gt.f32.partialorder %v2380, 20.0
      %vm3165 = vcmp.gt.f32.partialorder %v2381, 20.0
      %vm3166 = vcmp.gt.f32.partialorder %v2382, 20.0
      %v3167 = vsel %vm3111, %v2058, %v3055
      %v3168 = vsel %vm3112, %v2099, %v3056
      %v3169 = vsel %vm3113, %v2140, %v3057
      %v3170 = vsel %vm3114, %v2181, %v3058
      %v3171 = vsel %vm3115, %v2222, %v3059
      %v3172 = vsel %vm3116, %v2263, %v3060
      %v3173 = vsel %vm3117, %v2304, %v3061
      %v3174 = vsel %vm3118, %v2061, %v3062
      %v3175 = vsel %vm3119, %v2102, %v3063
      %v3176 = vsel %vm3120, %v2143, %v3064
      %v3177 = vsel %vm3121, %v2184, %v3065
      %v3178 = vsel %vm3122, %v2225, %v3066
      %v3179 = vsel %vm3123, %v2266, %v3067
      %v3180 = vsel %vm3124, %v2307, %v3068
      %v3181 = vsel %vm3125, %v2064, %v3069
      %v3182 = vsel %vm3126, %v2105, %v3070
      %v3183 = vsel %vm3127, %v2146, %v3071
      %v3184 = vsel %vm3128, %v2187, %v3072
      %v3185 = vsel %vm3129, %v2228, %v3073
      %v3186 = vsel %vm3130, %v2269, %v3074
      %v3187 = vsel %vm3131, %v2310, %v3075
      %v3188 = vsel %vm3132, %v2067, %v3076
      %v3189 = vsel %vm3133, %v2108, %v3077
      %v3190 = vsel %vm3134, %v2149, %v3078
      %v3191 = vsel %vm3135, %v2190, %v3079
      %v3192 = vsel %vm3136, %v2231, %v3080
      %v3193 = vsel %vm3137, %v2272, %v3081
      %v3194 = vsel %vm3138, %v2313, %v3082
      %v3195 = vsel %vm3139, %v2070, %v3083
      %v3196 = vsel %vm3140, %v2111, %v3084
      %v3197 = vsel %vm3141, %v2152, %v3085
      %v3198 = vsel %vm3142, %v2193, %v3086
      %v3199 = vsel %vm3143, %v2234, %v3087
      %v3200 = vsel %vm3144, %v2275, %v3088
      %v3201 = vsel %vm3145, %v2316, %v3089
      %v3202 = vsel %vm3146, %v2073, %v3090
      %v3203 = vsel %vm3147, %v2114, %v3091
      %v3204 = vsel %vm3148, %v2155, %v3092
      %v3205 = vsel %vm3149, %v2196, %v3093
      %v3206 = vsel %vm3150, %v2237, %v3094
      %v3207 = vsel %vm3151, %v2278, %v3095
      %v3208 = vsel %vm3152, %v2319, %v3096
      %v3209 = vsel %vm3153, %v2076, %v3097
      %v3210 = vsel %vm3154, %v2117, %v3098
      %v3211 = vsel %vm3155, %v2158, %v3099
      %v3212 = vsel %vm3156, %v2199, %v3100
      %v3213 = vsel %vm3157, %v2240, %v3101
      %v3214 = vsel %vm3158, %v2281, %v3102
      %v3215 = vsel %vm3159, %v2322, %v3103
      %v3216 = vsel %vm3160, %v2079, %v3104
      %v3217 = vsel %vm3161, %v2120, %v3105
      %v3218 = vsel %vm3162, %v2161, %v3106
      %v3219 = vsel %vm3163, %v2202, %v3107
      %v3220 = vsel %vm3164, %v2243, %v3108
      %v3221 = vsel %vm3165, %v2284, %v3109
      %v3222 = vsel %vm3166, %v2325, %v3110
      %v3223 = vld [vmem:[%s4] sm:$0xff]
      %v3224 = vld [vmem:[%s4 + $0x8] sm:$0xff]
      %v3225 = vld [vmem:[%s4 + $0x10] sm:$0xff]
      %v3226 = vld [vmem:[%s4 + $0x18] sm:$0xff]
      %3228 = vset.pattern.permute.xlu0 0
      %3229 = vperm.xlu0 %3228, %v950
      %v3230 = vpop.permute.xlu0 %3229
      %3233 = vset.pattern.permute.xlu0 0
      %3234 = vperm.xlu0 %3233, %v951
      %v3235 = vpop.permute.xlu0 %3234
      %3238 = vset.pattern.permute.xlu0 0
      %3239 = vperm.xlu0 %3238, %v952
      %v3240 = vpop.permute.xlu0 %3239
      %3243 = vset.pattern.permute.xlu0 0
      %3244 = vperm.xlu0 %3243, %v953
      %v3245 = vpop.permute.xlu0 %3244
      %v3248 = vsel %vm2015, %v3223, 0
      %v3251 = vsel %vm2015, %v3224, 0
      %v3254 = vsel %vm2015, %v3225, 0
      %v3257 = vsel %vm2015, %v3226, 0
      %3259 = vmatpush.msra.mxu0 0.0
      %3260 = vmatpush.msra.mxu0 0.0
      %3261 = vmatpush.msra.mxu0 0.0
      %3262 = vmatpush.msra.mxu0 0.0
      %3263 = vmatpush.msra.mxu0 0.0
      %3264 = vmatpush.msra.mxu0 0.0
      %3265 = vmatpush.msra.mxu0 0.0
      %3266 = vmatpush.msra.mxu0 0.0
      %3267 = vmatpush.msra.mxu0 %v3216
      %3268 = vmatpush.msra.mxu0 %v3209
      %3269 = vmatpush.msra.mxu0 %v3202
      %3270 = vmatpush.msra.mxu0 %v3195
      %3271 = vmatpush.msra.mxu0 %v3188
      %3272 = vmatpush.msra.mxu0 %v3181
      %3273 = vmatpush.msra.mxu0 %v3174
      %3274 = vmatpush.msra.mxu0 %v3167
      %3275 = vmatmul.f32.gmra.mxu0 %v3248
      %v3276 = vpop.f32.mrf.mxu0
      %v3277 = vadd.f32 %v3230, %v3276
      %3278 = vmatmul.f32.gmra.mxu0 %v3251
      %v3279 = vpop.f32.mrf.mxu0
      %v3280 = vadd.f32 %v3235, %v3279
      %3281 = vmatmul.f32.gmra.mxu0 %v3254
      %v3282 = vpop.f32.mrf.mxu0
      %v3283 = vadd.f32 %v3240, %v3282
      %3284 = vmatmul.f32.gmra.mxu0 %v3257
      %v3285 = vpop.f32.mrf.mxu0
      %v3286 = vadd.f32 %v3245, %v3285
      %3287 = vdwg.mxu0
      %3288 = vmatpush.msra.mxu0 0.0
      %3289 = vmatpush.msra.mxu0 0.0
      %3290 = vmatpush.msra.mxu0 0.0
      %3291 = vmatpush.msra.mxu0 0.0
      %3292 = vmatpush.msra.mxu0 0.0
      %3293 = vmatpush.msra.mxu0 0.0
      %3294 = vmatpush.msra.mxu0 0.0
      %3295 = vmatpush.msra.mxu0 0.0
      %3296 = vmatpush.msra.mxu0 %v3217
      %3297 = vmatpush.msra.mxu0 %v3210
      %3298 = vmatpush.msra.mxu0 %v3203
      %3299 = vmatpush.msra.mxu0 %v3196
      %3300 = vmatpush.msra.mxu0 %v3189
      %3301 = vmatpush.msra.mxu0 %v3182
      %3302 = vmatpush.msra.mxu0 %v3175
      %3303 = vmatpush.msra.mxu0 %v3168
      %3304 = vmatmul.f32.gmra.mxu0 %v3248
      %v3305 = vpop.f32.mrf.mxu0
      %v3306 = vadd.f32 %v3230, %v3305
      %3307 = vmatmul.f32.gmra.mxu0 %v3251
      %v3308 = vpop.f32.mrf.mxu0
      %v3309 = vadd.f32 %v3235, %v3308
      %3310 = vmatmul.f32.gmra.mxu0 %v3254
      %v3311 = vpop.f32.mrf.mxu0
      %v3312 = vadd.f32 %v3240, %v3311
      %3313 = vmatmul.f32.gmra.mxu0 %v3257
      %v3314 = vpop.f32.mrf.mxu0
      %v3315 = vadd.f32 %v3245, %v3314
      %3316 = vdwg.mxu0
      %3317 = vmatpush.msra.mxu0 0.0
      %3318 = vmatpush.msra.mxu0 0.0
      %3319 = vmatpush.msra.mxu0 0.0
      %3320 = vmatpush.msra.mxu0 0.0
      %3321 = vmatpush.msra.mxu0 0.0
      %3322 = vmatpush.msra.mxu0 0.0
      %3323 = vmatpush.msra.mxu0 0.0
      %3324 = vmatpush.msra.mxu0 0.0
      %3325 = vmatpush.msra.mxu0 %v3218
      %3326 = vmatpush.msra.mxu0 %v3211
      %3327 = vmatpush.msra.mxu0 %v3204
      %3328 = vmatpush.msra.mxu0 %v3197
      %3329 = vmatpush.msra.mxu0 %v3190
      %3330 = vmatpush.msra.mxu0 %v3183
      %3331 = vmatpush.msra.mxu0 %v3176
      %3332 = vmatpush.msra.mxu0 %v3169
      %3333 = vmatmul.f32.gmra.mxu0 %v3248
      %v3334 = vpop.f32.mrf.mxu0
      %v3335 = vadd.f32 %v3230, %v3334
      %3336 = vmatmul.f32.gmra.mxu0 %v3251
      %v3337 = vpop.f32.mrf.mxu0
      %v3338 = vadd.f32 %v3235, %v3337
      %3339 = vmatmul.f32.gmra.mxu0 %v3254
      %v3340 = vpop.f32.mrf.mxu0
      %v3341 = vadd.f32 %v3240, %v3340
      %3342 = vmatmul.f32.gmra.mxu0 %v3257
      %v3343 = vpop.f32.mrf.mxu0
      %v3344 = vadd.f32 %v3245, %v3343
      %3345 = vdwg.mxu0
      %3346 = vmatpush.msra.mxu0 0.0
      %3347 = vmatpush.msra.mxu0 0.0
      %3348 = vmatpush.msra.mxu0 0.0
      %3349 = vmatpush.msra.mxu0 0.0
      %3350 = vmatpush.msra.mxu0 0.0
      %3351 = vmatpush.msra.mxu0 0.0
      %3352 = vmatpush.msra.mxu0 0.0
      %3353 = vmatpush.msra.mxu0 0.0
      %3354 = vmatpush.msra.mxu0 %v3219
      %3355 = vmatpush.msra.mxu0 %v3212
      %3356 = vmatpush.msra.mxu0 %v3205
      %3357 = vmatpush.msra.mxu0 %v3198
      %3358 = vmatpush.msra.mxu0 %v3191
      %3359 = vmatpush.msra.mxu0 %v3184
      %3360 = vmatpush.msra.mxu0 %v3177
      %3361 = vmatpush.msra.mxu0 %v3170
      %3362 = vmatmul.f32.gmra.mxu0 %v3248
      %v3363 = vpop.f32.mrf.mxu0
      %v3364 = vadd.f32 %v3230, %v3363
      %3365 = vmatmul.f32.gmra.mxu0 %v3251
      %v3366 = vpop.f32.mrf.mxu0
      %v3367 = vadd.f32 %v3235, %v3366
      %3368 = vmatmul.f32.gmra.mxu0 %v3254
      %v3369 = vpop.f32.mrf.mxu0
      %v3370 = vadd.f32 %v3240, %v3369
      %3371 = vmatmul.f32.gmra.mxu0 %v3257
      %v3372 = vpop.f32.mrf.mxu0
      %v3373 = vadd.f32 %v3245, %v3372
      %3374 = vdwg.mxu0
      %3375 = vmatpush.msra.mxu0 0.0
      %3376 = vmatpush.msra.mxu0 0.0
      %3377 = vmatpush.msra.mxu0 0.0
      %3378 = vmatpush.msra.mxu0 0.0
      %3379 = vmatpush.msra.mxu0 0.0
      %3380 = vmatpush.msra.mxu0 0.0
      %3381 = vmatpush.msra.mxu0 0.0
      %3382 = vmatpush.msra.mxu0 0.0
      %3383 = vmatpush.msra.mxu0 %v3220
      %3384 = vmatpush.msra.mxu0 %v3213
      %3385 = vmatpush.msra.mxu0 %v3206
      %3386 = vmatpush.msra.mxu0 %v3199
      %3387 = vmatpush.msra.mxu0 %v3192
      %3388 = vmatpush.msra.mxu0 %v3185
      %3389 = vmatpush.msra.mxu0 %v3178
      %3390 = vmatpush.msra.mxu0 %v3171
      %3391 = vmatmul.f32.gmra.mxu0 %v3248
      %v3392 = vpop.f32.mrf.mxu0
      %v3393 = vadd.f32 %v3230, %v3392
      %3394 = vmatmul.f32.gmra.mxu0 %v3251
      %v3395 = vpop.f32.mrf.mxu0
      %v3396 = vadd.f32 %v3235, %v3395
      %3397 = vmatmul.f32.gmra.mxu0 %v3254
      %v3398 = vpop.f32.mrf.mxu0
      %v3399 = vadd.f32 %v3240, %v3398
      %3400 = vmatmul.f32.gmra.mxu0 %v3257
      %v3401 = vpop.f32.mrf.mxu0
      %v3402 = vadd.f32 %v3245, %v3401
      %3403 = vdwg.mxu0
      %3404 = vmatpush.msra.mxu0 0.0
      %3405 = vmatpush.msra.mxu0 0.0
      %3406 = vmatpush.msra.mxu0 0.0
      %3407 = vmatpush.msra.mxu0 0.0
      %3408 = vmatpush.msra.mxu0 0.0
      %3409 = vmatpush.msra.mxu0 0.0
      %3410 = vmatpush.msra.mxu0 0.0
      %3411 = vmatpush.msra.mxu0 0.0
      %3412 = vmatpush.msra.mxu0 %v3221
      %3413 = vmatpush.msra.mxu0 %v3214
      %3414 = vmatpush.msra.mxu0 %v3207
      %3415 = vmatpush.msra.mxu0 %v3200
      %3416 = vmatpush.msra.mxu0 %v3193
      %3417 = vmatpush.msra.mxu0 %v3186
      %3418 = vmatpush.msra.mxu0 %v3179
      %3419 = vmatpush.msra.mxu0 %v3172
      %3420 = vmatmul.f32.gmra.mxu0 %v3248
      %v3421 = vpop.f32.mrf.mxu0
      %v3422 = vadd.f32 %v3230, %v3421
      %3423 = vmatmul.f32.gmra.mxu0 %v3251
      %v3424 = vpop.f32.mrf.mxu0
      %v3425 = vadd.f32 %v3235, %v3424
      %3426 = vmatmul.f32.gmra.mxu0 %v3254
      %v3427 = vpop.f32.mrf.mxu0
      %v3428 = vadd.f32 %v3240, %v3427
      %3429 = vmatmul.f32.gmra.mxu0 %v3257
      %v3430 = vpop.f32.mrf.mxu0
      %v3431 = vadd.f32 %v3245, %v3430
      %3432 = vdwg.mxu0
      %3433 = vmatpush.msra.mxu0 0.0
      %3434 = vmatpush.msra.mxu0 0.0
      %3435 = vmatpush.msra.mxu0 0.0
      %3436 = vmatpush.msra.mxu0 0.0
      %3437 = vmatpush.msra.mxu0 0.0
      %3438 = vmatpush.msra.mxu0 0.0
      %3439 = vmatpush.msra.mxu0 0.0
      %3440 = vmatpush.msra.mxu0 0.0
      %3441 = vmatpush.msra.mxu0 %v3222
      %3442 = vmatpush.msra.mxu0 %v3215
      %3443 = vmatpush.msra.mxu0 %v3208
      %3444 = vmatpush.msra.mxu0 %v3201
      %3445 = vmatpush.msra.mxu0 %v3194
      %3446 = vmatpush.msra.mxu0 %v3187
      %3447 = vmatpush.msra.mxu0 %v3180
      %3448 = vmatpush.msra.mxu0 %v3173
      %3449 = vmatmul.f32.gmra.mxu0 %v3248
      %v3450 = vpop.f32.mrf.mxu0
      %v3451 = vadd.f32 %v3230, %v3450
      %3452 = vmatmul.f32.gmra.mxu0 %v3251
      %v3453 = vpop.f32.mrf.mxu0
      %v3454 = vadd.f32 %v3235, %v3453
      %3455 = vmatmul.f32.gmra.mxu0 %v3254
      %v3456 = vpop.f32.mrf.mxu0
      %v3457 = vadd.f32 %v3240, %v3456
      %3458 = vmatmul.f32.gmra.mxu0 %v3257
      %v3459 = vpop.f32.mrf.mxu0
      %v3460 = vadd.f32 %v3245, %v3459
      %3461 = vdwg.mxu0
      %v3462 = vmul.f32 %v3277, 100.0
      %v3463 = vmul.f32 %v3306, 100.0
      %v3464 = vmul.f32 %v3335, 100.0
      %v3465 = vmul.f32 %v3364, 100.0
      %v3466 = vmul.f32 %v3393, 100.0
      %v3467 = vmul.f32 %v3422, 100.0
      %v3468 = vmul.f32 %v3451, 100.0
      %v3469 = vmul.f32 %v3280, 100.0
      %v3470 = vmul.f32 %v3309, 100.0
      %v3471 = vmul.f32 %v3338, 100.0
      %v3472 = vmul.f32 %v3367, 100.0
      %v3473 = vmul.f32 %v3396, 100.0
      %v3474 = vmul.f32 %v3425, 100.0
      %v3475 = vmul.f32 %v3454, 100.0
      %v3476 = vmul.f32 %v3283, 100.0
      %v3477 = vmul.f32 %v3312, 100.0
      %v3478 = vmul.f32 %v3341, 100.0
      %v3479 = vmul.f32 %v3370, 100.0
      %v3480 = vmul.f32 %v3399, 100.0
      %v3481 = vmul.f32 %v3428, 100.0
      %v3482 = vmul.f32 %v3457, 100.0
      %v3483 = vmul.f32 %v3286, 100.0
      %v3484 = vmul.f32 %v3315, 100.0
      %v3485 = vmul.f32 %v3344, 100.0
      %v3486 = vmul.f32 %v3373, 100.0
      %v3487 = vmul.f32 %v3402, 100.0
      %v3488 = vmul.f32 %v3431, 100.0
      %v3489 = vmul.f32 %v3460, 100.0
      %v3490 = vmin.f32 %v3462, 20.0
      %v3491 = vmin.f32 %v3463, 20.0
      %v3492 = vmin.f32 %v3464, 20.0
      %v3493 = vmin.f32 %v3465, 20.0
      %v3494 = vmin.f32 %v3466, 20.0
      %v3495 = vmin.f32 %v3467, 20.0
      %v3496 = vmin.f32 %v3468, 20.0
      %v3497 = vmin.f32 %v3469, 20.0
      %v3498 = vmin.f32 %v3470, 20.0
      %v3499 = vmin.f32 %v3471, 20.0
      %v3500 = vmin.f32 %v3472, 20.0
      %v3501 = vmin.f32 %v3473, 20.0
      %v3502 = vmin.f32 %v3474, 20.0
      %v3503 = vmin.f32 %v3475, 20.0
      %v3504 = vmin.f32 %v3476, 20.0
      %v3505 = vmin.f32 %v3477, 20.0
      %v3506 = vmin.f32 %v3478, 20.0
      %v3507 = vmin.f32 %v3479, 20.0
      %v3508 = vmin.f32 %v3480, 20.0
      %v3509 = vmin.f32 %v3481, 20.0
      %v3510 = vmin.f32 %v3482, 20.0
      %v3511 = vmin.f32 %v3483, 20.0
      %v3512 = vmin.f32 %v3484, 20.0
      %v3513 = vmin.f32 %v3485, 20.0
      %v3514 = vmin.f32 %v3486, 20.0
      %v3515 = vmin.f32 %v3487, 20.0
      %v3516 = vmin.f32 %v3488, 20.0
      %v3517 = vmin.f32 %v3489, 20.0
      %v3518 = vmul.f32 %v3490, 1.442695
      %v3519 = vpow.pop %v3518
      %v3520 = vmul.f32 %v3491, 1.442695
      %v3521 = vpow.pop %v3520
      %v3522 = vmul.f32 %v3492, 1.442695
      %v3523 = vpow.pop %v3522
      %v3524 = vmul.f32 %v3493, 1.442695
      %v3525 = vpow.pop %v3524
      %v3526 = vmul.f32 %v3494, 1.442695
      %v3527 = vpow.pop %v3526
      %v3528 = vmul.f32 %v3495, 1.442695
      %v3529 = vpow.pop %v3528
      %v3530 = vmul.f32 %v3496, 1.442695
      %v3531 = vpow.pop %v3530
      %v3532 = vmul.f32 %v3497, 1.442695
      %v3533 = vpow.pop %v3532
      %v3534 = vmul.f32 %v3498, 1.442695
      %v3535 = vpow.pop %v3534
      %v3536 = vmul.f32 %v3499, 1.442695
      %v3537 = vpow.pop %v3536
      %v3538 = vmul.f32 %v3500, 1.442695
      %v3539 = vpow.pop %v3538
      %v3540 = vmul.f32 %v3501, 1.442695
      %v3541 = vpow.pop %v3540
      %v3542 = vmul.f32 %v3502, 1.442695
      %v3543 = vpow.pop %v3542
      %v3544 = vmul.f32 %v3503, 1.442695
      %v3545 = vpow.pop %v3544
      %v3546 = vmul.f32 %v3504, 1.442695
      %v3547 = vpow.pop %v3546
      %v3548 = vmul.f32 %v3505, 1.442695
      %v3549 = vpow.pop %v3548
      %v3550 = vmul.f32 %v3506, 1.442695
      %v3551 = vpow.pop %v3550
      %v3552 = vmul.f32 %v3507, 1.442695
      %v3553 = vpow.pop %v3552
      %v3554 = vmul.f32 %v3508, 1.442695
      %v3555 = vpow.pop %v3554
      %v3556 = vmul.f32 %v3509, 1.442695
      %v3557 = vpow.pop %v3556
      %v3558 = vmul.f32 %v3510, 1.442695
      %v3559 = vpow.pop %v3558
      %v3560 = vmul.f32 %v3511, 1.442695
      %v3561 = vpow.pop %v3560
      %v3562 = vmul.f32 %v3512, 1.442695
      %v3563 = vpow.pop %v3562
      %v3564 = vmul.f32 %v3513, 1.442695
      %v3565 = vpow.pop %v3564
      %v3566 = vmul.f32 %v3514, 1.442695
      %v3567 = vpow.pop %v3566
      %v3568 = vmul.f32 %v3515, 1.442695
      %v3569 = vpow.pop %v3568
      %v3570 = vmul.f32 %v3516, 1.442695
      %v3571 = vpow.pop %v3570
      %v3572 = vmul.f32 %v3517, 1.442695
      %v3573 = vpow.pop %v3572
      %v3574 = vadd.f32 %v3519, 1.0
      %v3575 = vlog2.pop %v3574
      %v3576 = vmul.f32 %v3575, 0.6931472
      %v3577 = vmul.f32 -0.5, %v3519
      %v3578 = vadd.f32 %v3577, 1.0
      %v3579 = vmul.f32 %v3578, %v3519
      %v3580 = vand.u32 2147483647, %v3519
      %vm3581 = vcmp.lt.f32.partialorder %v3580, 0.0004427343
      %v3582 = vsel %vm3581, %v3579, %v3576
      %v3583 = vadd.f32 %v3521, 1.0
      %v3584 = vlog2.pop %v3583
      %v3585 = vmul.f32 %v3584, 0.6931472
      %v3586 = vmul.f32 -0.5, %v3521
      %v3587 = vadd.f32 %v3586, 1.0
      %v3588 = vmul.f32 %v3587, %v3521
      %v3589 = vand.u32 2147483647, %v3521
      %vm3590 = vcmp.lt.f32.partialorder %v3589, 0.0004427343
      %v3591 = vsel %vm3590, %v3588, %v3585
      %v3592 = vadd.f32 %v3523, 1.0
      %v3593 = vlog2.pop %v3592
      %v3594 = vmul.f32 %v3593, 0.6931472
      %v3595 = vmul.f32 -0.5, %v3523
      %v3596 = vadd.f32 %v3595, 1.0
      %v3597 = vmul.f32 %v3596, %v3523
      %v3598 = vand.u32 2147483647, %v3523
      %vm3599 = vcmp.lt.f32.partialorder %v3598, 0.0004427343
      %v3600 = vsel %vm3599, %v3597, %v3594
      %v3601 = vadd.f32 %v3525, 1.0
      %v3602 = vlog2.pop %v3601
      %v3603 = vmul.f32 %v3602, 0.6931472
      %v3604 = vmul.f32 -0.5, %v3525
      %v3605 = vadd.f32 %v3604, 1.0
      %v3606 = vmul.f32 %v3605, %v3525
      %v3607 = vand.u32 2147483647, %v3525
      %vm3608 = vcmp.lt.f32.partialorder %v3607, 0.0004427343
      %v3609 = vsel %vm3608, %v3606, %v3603
      %v3610 = vadd.f32 %v3527, 1.0
      %v3611 = vlog2.pop %v3610
      %v3612 = vmul.f32 %v3611, 0.6931472
      %v3613 = vmul.f32 -0.5, %v3527
      %v3614 = vadd.f32 %v3613, 1.0
      %v3615 = vmul.f32 %v3614, %v3527
      %v3616 = vand.u32 2147483647, %v3527
      %vm3617 = vcmp.lt.f32.partialorder %v3616, 0.0004427343
      %v3618 = vsel %vm3617, %v3615, %v3612
      %v3619 = vadd.f32 %v3529, 1.0
      %v3620 = vlog2.pop %v3619
      %v3621 = vmul.f32 %v3620, 0.6931472
      %v3622 = vmul.f32 -0.5, %v3529
      %v3623 = vadd.f32 %v3622, 1.0
      %v3624 = vmul.f32 %v3623, %v3529
      %v3625 = vand.u32 2147483647, %v3529
      %vm3626 = vcmp.lt.f32.partialorder %v3625, 0.0004427343
      %v3627 = vsel %vm3626, %v3624, %v3621
      %v3628 = vadd.f32 %v3531, 1.0
      %v3629 = vlog2.pop %v3628
      %v3630 = vmul.f32 %v3629, 0.6931472
      %v3631 = vmul.f32 -0.5, %v3531
      %v3632 = vadd.f32 %v3631, 1.0
      %v3633 = vmul.f32 %v3632, %v3531
      %v3634 = vand.u32 2147483647, %v3531
      %vm3635 = vcmp.lt.f32.partialorder %v3634, 0.0004427343
      %v3636 = vsel %vm3635, %v3633, %v3630
      %v3637 = vadd.f32 %v3533, 1.0
      %v3638 = vlog2.pop %v3637
      %v3639 = vmul.f32 %v3638, 0.6931472
      %v3640 = vmul.f32 -0.5, %v3533
      %v3641 = vadd.f32 %v3640, 1.0
      %v3642 = vmul.f32 %v3641, %v3533
      %v3643 = vand.u32 2147483647, %v3533
      %vm3644 = vcmp.lt.f32.partialorder %v3643, 0.0004427343
      %v3645 = vsel %vm3644, %v3642, %v3639
      %v3646 = vadd.f32 %v3535, 1.0
      %v3647 = vlog2.pop %v3646
      %v3648 = vmul.f32 %v3647, 0.6931472
      %v3649 = vmul.f32 -0.5, %v3535
      %v3650 = vadd.f32 %v3649, 1.0
      %v3651 = vmul.f32 %v3650, %v3535
      %v3652 = vand.u32 2147483647, %v3535
      %vm3653 = vcmp.lt.f32.partialorder %v3652, 0.0004427343
      %v3654 = vsel %vm3653, %v3651, %v3648
      %v3655 = vadd.f32 %v3537, 1.0
      %v3656 = vlog2.pop %v3655
      %v3657 = vmul.f32 %v3656, 0.6931472
      %v3658 = vmul.f32 -0.5, %v3537
      %v3659 = vadd.f32 %v3658, 1.0
      %v3660 = vmul.f32 %v3659, %v3537
      %v3661 = vand.u32 2147483647, %v3537
      %vm3662 = vcmp.lt.f32.partialorder %v3661, 0.0004427343
      %v3663 = vsel %vm3662, %v3660, %v3657
      %v3664 = vadd.f32 %v3539, 1.0
      %v3665 = vlog2.pop %v3664
      %v3666 = vmul.f32 %v3665, 0.6931472
      %v3667 = vmul.f32 -0.5, %v3539
      %v3668 = vadd.f32 %v3667, 1.0
      %v3669 = vmul.f32 %v3668, %v3539
      %v3670 = vand.u32 2147483647, %v3539
      %vm3671 = vcmp.lt.f32.partialorder %v3670, 0.0004427343
      %v3672 = vsel %vm3671, %v3669, %v3666
      %v3673 = vadd.f32 %v3541, 1.0
      %v3674 = vlog2.pop %v3673
      %v3675 = vmul.f32 %v3674, 0.6931472
      %v3676 = vmul.f32 -0.5, %v3541
      %v3677 = vadd.f32 %v3676, 1.0
      %v3678 = vmul.f32 %v3677, %v3541
      %v3679 = vand.u32 2147483647, %v3541
      %vm3680 = vcmp.lt.f32.partialorder %v3679, 0.0004427343
      %v3681 = vsel %vm3680, %v3678, %v3675
      %v3682 = vadd.f32 %v3543, 1.0
      %v3683 = vlog2.pop %v3682
      %v3684 = vmul.f32 %v3683, 0.6931472
      %v3685 = vmul.f32 -0.5, %v3543
      %v3686 = vadd.f32 %v3685, 1.0
      %v3687 = vmul.f32 %v3686, %v3543
      %v3688 = vand.u32 2147483647, %v3543
      %vm3689 = vcmp.lt.f32.partialorder %v3688, 0.0004427343
      %v3690 = vsel %vm3689, %v3687, %v3684
      %v3691 = vadd.f32 %v3545, 1.0
      %v3692 = vlog2.pop %v3691
      %v3693 = vmul.f32 %v3692, 0.6931472
      %v3694 = vmul.f32 -0.5, %v3545
      %v3695 = vadd.f32 %v3694, 1.0
      %v3696 = vmul.f32 %v3695, %v3545
      %v3697 = vand.u32 2147483647, %v3545
      %vm3698 = vcmp.lt.f32.partialorder %v3697, 0.0004427343
      %v3699 = vsel %vm3698, %v3696, %v3693
      %v3700 = vadd.f32 %v3547, 1.0
      %v3701 = vlog2.pop %v3700
      %v3702 = vmul.f32 %v3701, 0.6931472
      %v3703 = vmul.f32 -0.5, %v3547
      %v3704 = vadd.f32 %v3703, 1.0
      %v3705 = vmul.f32 %v3704, %v3547
      %v3706 = vand.u32 2147483647, %v3547
      %vm3707 = vcmp.lt.f32.partialorder %v3706, 0.0004427343
      %v3708 = vsel %vm3707, %v3705, %v3702
      %v3709 = vadd.f32 %v3549, 1.0
      %v3710 = vlog2.pop %v3709
      %v3711 = vmul.f32 %v3710, 0.6931472
      %v3712 = vmul.f32 -0.5, %v3549
      %v3713 = vadd.f32 %v3712, 1.0
      %v3714 = vmul.f32 %v3713, %v3549
      %v3715 = vand.u32 2147483647, %v3549
      %vm3716 = vcmp.lt.f32.partialorder %v3715, 0.0004427343
      %v3717 = vsel %vm3716, %v3714, %v3711
      %v3718 = vadd.f32 %v3551, 1.0
      %v3719 = vlog2.pop %v3718
      %v3720 = vmul.f32 %v3719, 0.6931472
      %v3721 = vmul.f32 -0.5, %v3551
      %v3722 = vadd.f32 %v3721, 1.0
      %v3723 = vmul.f32 %v3722, %v3551
      %v3724 = vand.u32 2147483647, %v3551
      %vm3725 = vcmp.lt.f32.partialorder %v3724, 0.0004427343
      %v3726 = vsel %vm3725, %v3723, %v3720
      %v3727 = vadd.f32 %v3553, 1.0
      %v3728 = vlog2.pop %v3727
      %v3729 = vmul.f32 %v3728, 0.6931472
      %v3730 = vmul.f32 -0.5, %v3553
      %v3731 = vadd.f32 %v3730, 1.0
      %v3732 = vmul.f32 %v3731, %v3553
      %v3733 = vand.u32 2147483647, %v3553
      %vm3734 = vcmp.lt.f32.partialorder %v3733, 0.0004427343
      %v3735 = vsel %vm3734, %v3732, %v3729
      %v3736 = vadd.f32 %v3555, 1.0
      %v3737 = vlog2.pop %v3736
      %v3738 = vmul.f32 %v3737, 0.6931472
      %v3739 = vmul.f32 -0.5, %v3555
      %v3740 = vadd.f32 %v3739, 1.0
      %v3741 = vmul.f32 %v3740, %v3555
      %v3742 = vand.u32 2147483647, %v3555
      %vm3743 = vcmp.lt.f32.partialorder %v3742, 0.0004427343
      %v3744 = vsel %vm3743, %v3741, %v3738
      %v3745 = vadd.f32 %v3557, 1.0
      %v3746 = vlog2.pop %v3745
      %v3747 = vmul.f32 %v3746, 0.6931472
      %v3748 = vmul.f32 -0.5, %v3557
      %v3749 = vadd.f32 %v3748, 1.0
      %v3750 = vmul.f32 %v3749, %v3557
      %v3751 = vand.u32 2147483647, %v3557
      %vm3752 = vcmp.lt.f32.partialorder %v3751, 0.0004427343
      %v3753 = vsel %vm3752, %v3750, %v3747
      %v3754 = vadd.f32 %v3559, 1.0
      %v3755 = vlog2.pop %v3754
      %v3756 = vmul.f32 %v3755, 0.6931472
      %v3757 = vmul.f32 -0.5, %v3559
      %v3758 = vadd.f32 %v3757, 1.0
      %v3759 = vmul.f32 %v3758, %v3559
      %v3760 = vand.u32 2147483647, %v3559
      %vm3761 = vcmp.lt.f32.partialorder %v3760, 0.0004427343
      %v3762 = vsel %vm3761, %v3759, %v3756
      %v3763 = vadd.f32 %v3561, 1.0
      %v3764 = vlog2.pop %v3763
      %v3765 = vmul.f32 %v3764, 0.6931472
      %v3766 = vmul.f32 -0.5, %v3561
      %v3767 = vadd.f32 %v3766, 1.0
      %v3768 = vmul.f32 %v3767, %v3561
      %v3769 = vand.u32 2147483647, %v3561
      %vm3770 = vcmp.lt.f32.partialorder %v3769, 0.0004427343
      %v3771 = vsel %vm3770, %v3768, %v3765
      %v3772 = vadd.f32 %v3563, 1.0
      %v3773 = vlog2.pop %v3772
      %v3774 = vmul.f32 %v3773, 0.6931472
      %v3775 = vmul.f32 -0.5, %v3563
      %v3776 = vadd.f32 %v3775, 1.0
      %v3777 = vmul.f32 %v3776, %v3563
      %v3778 = vand.u32 2147483647, %v3563
      %vm3779 = vcmp.lt.f32.partialorder %v3778, 0.0004427343
      %v3780 = vsel %vm3779, %v3777, %v3774
      %v3781 = vadd.f32 %v3565, 1.0
      %v3782 = vlog2.pop %v3781
      %v3783 = vmul.f32 %v3782, 0.6931472
      %v3784 = vmul.f32 -0.5, %v3565
      %v3785 = vadd.f32 %v3784, 1.0
      %v3786 = vmul.f32 %v3785, %v3565
      %v3787 = vand.u32 2147483647, %v3565
      %vm3788 = vcmp.lt.f32.partialorder %v3787, 0.0004427343
      %v3789 = vsel %vm3788, %v3786, %v3783
      %v3790 = vadd.f32 %v3567, 1.0
      %v3791 = vlog2.pop %v3790
      %v3792 = vmul.f32 %v3791, 0.6931472
      %v3793 = vmul.f32 -0.5, %v3567
      %v3794 = vadd.f32 %v3793, 1.0
      %v3795 = vmul.f32 %v3794, %v3567
      %v3796 = vand.u32 2147483647, %v3567
      %vm3797 = vcmp.lt.f32.partialorder %v3796, 0.0004427343
      %v3798 = vsel %vm3797, %v3795, %v3792
      %v3799 = vadd.f32 %v3569, 1.0
      %v3800 = vlog2.pop %v3799
      %v3801 = vmul.f32 %v3800, 0.6931472
      %v3802 = vmul.f32 -0.5, %v3569
      %v3803 = vadd.f32 %v3802, 1.0
      %v3804 = vmul.f32 %v3803, %v3569
      %v3805 = vand.u32 2147483647, %v3569
      %vm3806 = vcmp.lt.f32.partialorder %v3805, 0.0004427343
      %v3807 = vsel %vm3806, %v3804, %v3801
      %v3808 = vadd.f32 %v3571, 1.0
      %v3809 = vlog2.pop %v3808
      %v3810 = vmul.f32 %v3809, 0.6931472
      %v3811 = vmul.f32 -0.5, %v3571
      %v3812 = vadd.f32 %v3811, 1.0
      %v3813 = vmul.f32 %v3812, %v3571
      %v3814 = vand.u32 2147483647, %v3571
      %vm3815 = vcmp.lt.f32.partialorder %v3814, 0.0004427343
      %v3816 = vsel %vm3815, %v3813, %v3810
      %v3817 = vadd.f32 %v3573, 1.0
      %v3818 = vlog2.pop %v3817
      %v3819 = vmul.f32 %v3818, 0.6931472
      %v3820 = vmul.f32 -0.5, %v3573
      %v3821 = vadd.f32 %v3820, 1.0
      %v3822 = vmul.f32 %v3821, %v3573
      %v3823 = vand.u32 2147483647, %v3573
      %vm3824 = vcmp.lt.f32.partialorder %v3823, 0.0004427343
      %v3825 = vsel %vm3824, %v3822, %v3819
      %v3826 = vmul.f32 %v3582, 0.01
      %v3827 = vmul.f32 %v3591, 0.01
      %v3828 = vmul.f32 %v3600, 0.01
      %v3829 = vmul.f32 %v3609, 0.01
      %v3830 = vmul.f32 %v3618, 0.01
      %v3831 = vmul.f32 %v3627, 0.01
      %v3832 = vmul.f32 %v3636, 0.01
      %v3833 = vmul.f32 %v3645, 0.01
      %v3834 = vmul.f32 %v3654, 0.01
      %v3835 = vmul.f32 %v3663, 0.01
      %v3836 = vmul.f32 %v3672, 0.01
      %v3837 = vmul.f32 %v3681, 0.01
      %v3838 = vmul.f32 %v3690, 0.01
      %v3839 = vmul.f32 %v3699, 0.01
      %v3840 = vmul.f32 %v3708, 0.01
      %v3841 = vmul.f32 %v3717, 0.01
      %v3842 = vmul.f32 %v3726, 0.01
      %v3843 = vmul.f32 %v3735, 0.01
      %v3844 = vmul.f32 %v3744, 0.01
      %v3845 = vmul.f32 %v3753, 0.01
      %v3846 = vmul.f32 %v3762, 0.01
      %v3847 = vmul.f32 %v3771, 0.01
      %v3848 = vmul.f32 %v3780, 0.01
      %v3849 = vmul.f32 %v3789, 0.01
      %v3850 = vmul.f32 %v3798, 0.01
      %v3851 = vmul.f32 %v3807, 0.01
      %v3852 = vmul.f32 %v3816, 0.01
      %v3853 = vmul.f32 %v3825, 0.01
      %vm3854 = vcmp.gt.f32.partialorder %v3462, 20.0
      %vm3855 = vcmp.gt.f32.partialorder %v3463, 20.0
      %vm3856 = vcmp.gt.f32.partialorder %v3464, 20.0
      %vm3857 = vcmp.gt.f32.partialorder %v3465, 20.0
      %vm3858 = vcmp.gt.f32.partialorder %v3466, 20.0
      %vm3859 = vcmp.gt.f32.partialorder %v3467, 20.0
      %vm3860 = vcmp.gt.f32.partialorder %v3468, 20.0
      %vm3861 = vcmp.gt.f32.partialorder %v3469, 20.0
      %vm3862 = vcmp.gt.f32.partialorder %v3470, 20.0
      %vm3863 = vcmp.gt.f32.partialorder %v3471, 20.0
      %vm3864 = vcmp.gt.f32.partialorder %v3472, 20.0
      %vm3865 = vcmp.gt.f32.partialorder %v3473, 20.0
      %vm3866 = vcmp.gt.f32.partialorder %v3474, 20.0
      %vm3867 = vcmp.gt.f32.partialorder %v3475, 20.0
      %vm3868 = vcmp.gt.f32.partialorder %v3476, 20.0
      %vm3869 = vcmp.gt.f32.partialorder %v3477, 20.0
      %vm3870 = vcmp.gt.f32.partialorder %v3478, 20.0
      %vm3871 = vcmp.gt.f32.partialorder %v3479, 20.0
      %vm3872 = vcmp.gt.f32.partialorder %v3480, 20.0
      %vm3873 = vcmp.gt.f32.partialorder %v3481, 20.0
      %vm3874 = vcmp.gt.f32.partialorder %v3482, 20.0
      %vm3875 = vcmp.gt.f32.partialorder %v3483, 20.0
      %vm3876 = vcmp.gt.f32.partialorder %v3484, 20.0
      %vm3877 = vcmp.gt.f32.partialorder %v3485, 20.0
      %vm3878 = vcmp.gt.f32.partialorder %v3486, 20.0
      %vm3879 = vcmp.gt.f32.partialorder %v3487, 20.0
      %vm3880 = vcmp.gt.f32.partialorder %v3488, 20.0
      %vm3881 = vcmp.gt.f32.partialorder %v3489, 20.0
      %v3882 = vsel %vm3854, %v3277, %v3826
      %v3883 = vsel %vm3855, %v3306, %v3827
      %v3884 = vsel %vm3856, %v3335, %v3828
      %v3885 = vsel %vm3857, %v3364, %v3829
      %v3886 = vsel %vm3858, %v3393, %v3830
      %v3887 = vsel %vm3859, %v3422, %v3831
      %v3888 = vsel %vm3860, %v3451, %v3832
      %v3889 = vsel %vm3861, %v3280, %v3833
      %v3890 = vsel %vm3862, %v3309, %v3834
      %v3891 = vsel %vm3863, %v3338, %v3835
      %v3892 = vsel %vm3864, %v3367, %v3836
      %v3893 = vsel %vm3865, %v3396, %v3837
      %v3894 = vsel %vm3866, %v3425, %v3838
      %v3895 = vsel %vm3867, %v3454, %v3839
      %v3896 = vsel %vm3868, %v3283, %v3840
      %v3897 = vsel %vm3869, %v3312, %v3841
      %v3898 = vsel %vm3870, %v3341, %v3842
      %v3899 = vsel %vm3871, %v3370, %v3843
      %v3900 = vsel %vm3872, %v3399, %v3844
      %v3901 = vsel %vm3873, %v3428, %v3845
      %v3902 = vsel %vm3874, %v3457, %v3846
      %v3903 = vsel %vm3875, %v3286, %v3847
      %v3904 = vsel %vm3876, %v3315, %v3848
      %v3905 = vsel %vm3877, %v3344, %v3849
      %v3906 = vsel %vm3878, %v3373, %v3850
      %v3907 = vsel %vm3879, %v3402, %v3851
      %v3908 = vsel %vm3880, %v3431, %v3852
      %v3909 = vsel %vm3881, %v3460, %v3853
      %v3910 = vld [vmem:[%s5] sm:$0xff]
      %v3911 = vld [vmem:[%s5 + $0x8] sm:$0xff]
      %v3912 = vld [vmem:[%s5 + $0x10] sm:$0xff]
      %v3913 = vld [vmem:[%s5 + $0x18] sm:$0xff]
      %v3914 = vld [vmem:[%s5 + $0x20] sm:$0xff]
      %v3915 = vld [vmem:[%s5 + $0x28] sm:$0xff]
      %v3916 = vld [vmem:[%s5 + $0x30] sm:$0xff]
      %v3917 = vld [vmem:[%s5 + $0x38] sm:$0xff]
      %vm3918 = vcmask 261120
      %v3920 = vsel %vm3918, %v3910, 0
      %v3923 = vsel %vm3918, %v3911, 0
      %v3926 = vsel %vm3918, %v3912, 0
      %v3929 = vsel %vm3918, %v3913, 0
      %v3932 = vsel %vm3918, %v3914, 0
      %v3935 = vsel %vm3918, %v3915, 0
      %v3938 = vsel %vm3918, %v3916, 0
      %v3941 = vsel %vm3918, %v3917, 0
      %3943 = vmatpush.msra.mxu0 0.0
      %3944 = vmatpush.msra.mxu0 0.0
      %3945 = vmatpush.msra.mxu0 0.0
      %3946 = vmatpush.msra.mxu0 0.0
      %3947 = vmatpush.msra.mxu0 0.0
      %3948 = vmatpush.msra.mxu0 0.0
      %3949 = vmatpush.msra.mxu0 0.0
      %3950 = vmatpush.msra.mxu0 0.0
      %3951 = vmatpush.msra.mxu0 0.0
      %3952 = vmatpush.msra.mxu0 0.0
      %3953 = vmatpush.msra.mxu0 0.0
      %3954 = vmatpush.msra.mxu0 0.0
      %3955 = vmatpush.msra.mxu0 %v3903
      %3956 = vmatpush.msra.mxu0 %v3896
      %3957 = vmatpush.msra.mxu0 %v3889
      %3958 = vmatpush.msra.mxu0 %v3882
      %3959 = vmatmul.f32.gmra.mxu0 %v3920
      %v3960 = vpop.f32.mrf.mxu0
      %v3961 = vadd.f32 %v529, %v3960
      %3962 = vmatmul.f32.gmra.mxu0 %v3923
      %v3963 = vpop.f32.mrf.mxu0
      %v3964 = vadd.f32 %v532, %v3963
      %3965 = vmatmul.f32.gmra.mxu0 %v3926
      %v3966 = vpop.f32.mrf.mxu0
      %v3967 = vadd.f32 %v535, %v3966
      %3968 = vmatmul.f32.gmra.mxu0 %v3929
      %v3969 = vpop.f32.mrf.mxu0
      %v3970 = vadd.f32 %v538, %v3969
      %3971 = vmatmul.f32.gmra.mxu0 %v3932
      %v3972 = vpop.f32.mrf.mxu0
      %v3973 = vadd.f32 %v541, %v3972
      %3974 = vmatmul.f32.gmra.mxu0 %v3935
      %v3975 = vpop.f32.mrf.mxu0
      %v3976 = vadd.f32 %v544, %v3975
      %3977 = vmatmul.f32.gmra.mxu0 %v3938
      %v3978 = vpop.f32.mrf.mxu0
      %v3979 = vadd.f32 %v547, %v3978
      %3980 = vmatmul.f32.gmra.mxu0 %v3941
      %v3981 = vpop.f32.mrf.mxu0
      %v3982 = vadd.f32 %v550, %v3981
      %3983 = vdwg.mxu0
      %3984 = vmatpush.msra.mxu0 0.0
      %3985 = vmatpush.msra.mxu0 0.0
      %3986 = vmatpush.msra.mxu0 0.0
      %3987 = vmatpush.msra.mxu0 0.0
      %3988 = vmatpush.msra.mxu0 0.0
      %3989 = vmatpush.msra.mxu0 0.0
      %3990 = vmatpush.msra.mxu0 0.0
      %3991 = vmatpush.msra.mxu0 0.0
      %3992 = vmatpush.msra.mxu0 0.0
      %3993 = vmatpush.msra.mxu0 0.0
      %3994 = vmatpush.msra.mxu0 0.0
      %3995 = vmatpush.msra.mxu0 0.0
      %3996 = vmatpush.msra.mxu0 %v3904
      %3997 = vmatpush.msra.mxu0 %v3897
      %3998 = vmatpush.msra.mxu0 %v3890
      %3999 = vmatpush.msra.mxu0 %v3883
      %4000 = vmatmul.f32.gmra.mxu0 %v3920
      %v4001 = vpop.f32.mrf.mxu0
      %v4002 = vadd.f32 %v594, %v4001
      %4003 = vmatmul.f32.gmra.mxu0 %v3923
      %v4004 = vpop.f32.mrf.mxu0
      %v4005 = vadd.f32 %v597, %v4004
      %4006 = vmatmul.f32.gmra.mxu0 %v3926
      %v4007 = vpop.f32.mrf.mxu0
      %v4008 = vadd.f32 %v600, %v4007
      %4009 = vmatmul.f32.gmra.mxu0 %v3929
      %v4010 = vpop.f32.mrf.mxu0
      %v4011 = vadd.f32 %v603, %v4010
      %4012 = vmatmul.f32.gmra.mxu0 %v3932
      %v4013 = vpop.f32.mrf.mxu0
      %v4014 = vadd.f32 %v606, %v4013
      %4015 = vmatmul.f32.gmra.mxu0 %v3935
      %v4016 = vpop.f32.mrf.mxu0
      %v4017 = vadd.f32 %v609, %v4016
      %4018 = vmatmul.f32.gmra.mxu0 %v3938
      %v4019 = vpop.f32.mrf.mxu0
      %v4020 = vadd.f32 %v612, %v4019
      %4021 = vmatmul.f32.gmra.mxu0 %v3941
      %v4022 = vpop.f32.mrf.mxu0
      %v4023 = vadd.f32 %v615, %v4022
      %4024 = vdwg.mxu0
      %4025 = vmatpush.msra.mxu0 0.0
      %4026 = vmatpush.msra.mxu0 0.0
      %4027 = vmatpush.msra.mxu0 0.0
      %4028 = vmatpush.msra.mxu0 0.0
      %4029 = vmatpush.msra.mxu0 0.0
      %4030 = vmatpush.msra.mxu0 0.0
      %4031 = vmatpush.msra.mxu0 0.0
      %4032 = vmatpush.msra.mxu0 0.0
      %4033 = vmatpush.msra.mxu0 0.0
      %4034 = vmatpush.msra.mxu0 0.0
      %4035 = vmatpush.msra.mxu0 0.0
      %4036 = vmatpush.msra.mxu0 0.0
      %4037 = vmatpush.msra.mxu0 %v3905
      %4038 = vmatpush.msra.mxu0 %v3898
      %4039 = vmatpush.msra.mxu0 %v3891
      %4040 = vmatpush.msra.mxu0 %v3884
      %4041 = vmatmul.f32.gmra.mxu0 %v3920
      %v4042 = vpop.f32.mrf.mxu0
      %v4043 = vadd.f32 %v659, %v4042
      %4044 = vmatmul.f32.gmra.mxu0 %v3923
      %v4045 = vpop.f32.mrf.mxu0
      %v4046 = vadd.f32 %v662, %v4045
      %4047 = vmatmul.f32.gmra.mxu0 %v3926
      %v4048 = vpop.f32.mrf.mxu0
      %v4049 = vadd.f32 %v665, %v4048
      %4050 = vmatmul.f32.gmra.mxu0 %v3929
      %v4051 = vpop.f32.mrf.mxu0
      %v4052 = vadd.f32 %v668, %v4051
      %4053 = vmatmul.f32.gmra.mxu0 %v3932
      %v4054 = vpop.f32.mrf.mxu0
      %v4055 = vadd.f32 %v671, %v4054
      %4056 = vmatmul.f32.gmra.mxu0 %v3935
      %v4057 = vpop.f32.mrf.mxu0
      %v4058 = vadd.f32 %v674, %v4057
      %4059 = vmatmul.f32.gmra.mxu0 %v3938
      %v4060 = vpop.f32.mrf.mxu0
      %v4061 = vadd.f32 %v677, %v4060
      %4062 = vmatmul.f32.gmra.mxu0 %v3941
      %v4063 = vpop.f32.mrf.mxu0
      %v4064 = vadd.f32 %v680, %v4063
      %4065 = vdwg.mxu0
      %4066 = vmatpush.msra.mxu0 0.0
      %4067 = vmatpush.msra.mxu0 0.0
      %4068 = vmatpush.msra.mxu0 0.0
      %4069 = vmatpush.msra.mxu0 0.0
      %4070 = vmatpush.msra.mxu0 0.0
      %4071 = vmatpush.msra.mxu0 0.0
      %4072 = vmatpush.msra.mxu0 0.0
      %4073 = vmatpush.msra.mxu0 0.0
      %4074 = vmatpush.msra.mxu0 0.0
      %4075 = vmatpush.msra.mxu0 0.0
      %4076 = vmatpush.msra.mxu0 0.0
      %4077 = vmatpush.msra.mxu0 0.0
      %4078 = vmatpush.msra.mxu0 %v3906
      %4079 = vmatpush.msra.mxu0 %v3899
      %4080 = vmatpush.msra.mxu0 %v3892
      %4081 = vmatpush.msra.mxu0 %v3885
      %4082 = vmatmul.f32.gmra.mxu0 %v3920
      %v4083 = vpop.f32.mrf.mxu0
      %v4084 = vadd.f32 %v724, %v4083
      %4085 = vmatmul.f32.gmra.mxu0 %v3923
      %v4086 = vpop.f32.mrf.mxu0
      %v4087 = vadd.f32 %v727, %v4086
      %4088 = vmatmul.f32.gmra.mxu0 %v3926
      %v4089 = vpop.f32.mrf.mxu0
      %v4090 = vadd.f32 %v730, %v4089
      %4091 = vmatmul.f32.gmra.mxu0 %v3929
      %v4092 = vpop.f32.mrf.mxu0
      %v4093 = vadd.f32 %v733, %v4092
      %4094 = vmatmul.f32.gmra.mxu0 %v3932
      %v4095 = vpop.f32.mrf.mxu0
      %v4096 = vadd.f32 %v736, %v4095
      %4097 = vmatmul.f32.gmra.mxu0 %v3935
      %v4098 = vpop.f32.mrf.mxu0
      %v4099 = vadd.f32 %v739, %v4098
      %4100 = vmatmul.f32.gmra.mxu0 %v3938
      %v4101 = vpop.f32.mrf.mxu0
      %v4102 = vadd.f32 %v742, %v4101
      %4103 = vmatmul.f32.gmra.mxu0 %v3941
      %v4104 = vpop.f32.mrf.mxu0
      %v4105 = vadd.f32 %v745, %v4104
      %4106 = vdwg.mxu0
      %4107 = vmatpush.msra.mxu0 0.0
      %4108 = vmatpush.msra.mxu0 0.0
      %4109 = vmatpush.msra.mxu0 0.0
      %4110 = vmatpush.msra.mxu0 0.0
      %4111 = vmatpush.msra.mxu0 0.0
      %4112 = vmatpush.msra.mxu0 0.0
      %4113 = vmatpush.msra.mxu0 0.0
      %4114 = vmatpush.msra.mxu0 0.0
      %4115 = vmatpush.msra.mxu0 0.0
      %4116 = vmatpush.msra.mxu0 0.0
      %4117 = vmatpush.msra.mxu0 0.0
      %4118 = vmatpush.msra.mxu0 0.0
      %4119 = vmatpush.msra.mxu0 %v3907
      %4120 = vmatpush.msra.mxu0 %v3900
      %4121 = vmatpush.msra.mxu0 %v3893
      %4122 = vmatpush.msra.mxu0 %v3886
      %4123 = vmatmul.f32.gmra.mxu0 %v3920
      %v4124 = vpop.f32.mrf.mxu0
      %v4125 = vadd.f32 %v789, %v4124
      %4126 = vmatmul.f32.gmra.mxu0 %v3923
      %v4127 = vpop.f32.mrf.mxu0
      %v4128 = vadd.f32 %v792, %v4127
      %4129 = vmatmul.f32.gmra.mxu0 %v3926
      %v4130 = vpop.f32.mrf.mxu0
      %v4131 = vadd.f32 %v795, %v4130
      %4132 = vmatmul.f32.gmra.mxu0 %v3929
      %v4133 = vpop.f32.mrf.mxu0
      %v4134 = vadd.f32 %v798, %v4133
      %4135 = vmatmul.f32.gmra.mxu0 %v3932
      %v4136 = vpop.f32.mrf.mxu0
      %v4137 = vadd.f32 %v801, %v4136
      %4138 = vmatmul.f32.gmra.mxu0 %v3935
      %v4139 = vpop.f32.mrf.mxu0
      %v4140 = vadd.f32 %v804, %v4139
      %4141 = vmatmul.f32.gmra.mxu0 %v3938
      %v4142 = vpop.f32.mrf.mxu0
      %v4143 = vadd.f32 %v807, %v4142
      %4144 = vmatmul.f32.gmra.mxu0 %v3941
      %v4145 = vpop.f32.mrf.mxu0
      %v4146 = vadd.f32 %v810, %v4145
      %4147 = vdwg.mxu0
      %4148 = vmatpush.msra.mxu0 0.0
      %4149 = vmatpush.msra.mxu0 0.0
      %4150 = vmatpush.msra.mxu0 0.0
      %4151 = vmatpush.msra.mxu0 0.0
      %4152 = vmatpush.msra.mxu0 0.0
      %4153 = vmatpush.msra.mxu0 0.0
      %4154 = vmatpush.msra.mxu0 0.0
      %4155 = vmatpush.msra.mxu0 0.0
      %4156 = vmatpush.msra.mxu0 0.0
      %4157 = vmatpush.msra.mxu0 0.0
      %4158 = vmatpush.msra.mxu0 0.0
      %4159 = vmatpush.msra.mxu0 0.0
      %4160 = vmatpush.msra.mxu0 %v3908
      %4161 = vmatpush.msra.mxu0 %v3901
      %4162 = vmatpush.msra.mxu0 %v3894
      %4163 = vmatpush.msra.mxu0 %v3887
      %4164 = vmatmul.f32.gmra.mxu0 %v3920
      %v4165 = vpop.f32.mrf.mxu0
      %v4166 = vadd.f32 %v854, %v4165
      %4167 = vmatmul.f32.gmra.mxu0 %v3923
      %v4168 = vpop.f32.mrf.mxu0
      %v4169 = vadd.f32 %v857, %v4168
      %4170 = vmatmul.f32.gmra.mxu0 %v3926
      %v4171 = vpop.f32.mrf.mxu0
      %v4172 = vadd.f32 %v860, %v4171
      %4173 = vmatmul.f32.gmra.mxu0 %v3929
      %v4174 = vpop.f32.mrf.mxu0
      %v4175 = vadd.f32 %v863, %v4174
      %4176 = vmatmul.f32.gmra.mxu0 %v3932
      %v4177 = vpop.f32.mrf.mxu0
      %v4178 = vadd.f32 %v866, %v4177
      %4179 = vmatmul.f32.gmra.mxu0 %v3935
      %v4180 = vpop.f32.mrf.mxu0
      %v4181 = vadd.f32 %v869, %v4180
      %4182 = vmatmul.f32.gmra.mxu0 %v3938
      %v4183 = vpop.f32.mrf.mxu0
      %v4184 = vadd.f32 %v872, %v4183
      %4185 = vmatmul.f32.gmra.mxu0 %v3941
      %v4186 = vpop.f32.mrf.mxu0
      %v4187 = vadd.f32 %v875, %v4186
      %4188 = vdwg.mxu0
      %4189 = vmatpush.msra.mxu0 0.0
      %4190 = vmatpush.msra.mxu0 0.0
      %4191 = vmatpush.msra.mxu0 0.0
      %4192 = vmatpush.msra.mxu0 0.0
      %4193 = vmatpush.msra.mxu0 0.0
      %4194 = vmatpush.msra.mxu0 0.0
      %4195 = vmatpush.msra.mxu0 0.0
      %4196 = vmatpush.msra.mxu0 0.0
      %4197 = vmatpush.msra.mxu0 0.0
      %4198 = vmatpush.msra.mxu0 0.0
      %4199 = vmatpush.msra.mxu0 0.0
      %4200 = vmatpush.msra.mxu0 0.0
      %4201 = vmatpush.msra.mxu0 %v3909
      %4202 = vmatpush.msra.mxu0 %v3902
      %4203 = vmatpush.msra.mxu0 %v3895
      %4204 = vmatpush.msra.mxu0 %v3888
      %4205 = vmatmul.f32.gmra.mxu0 %v3920
      %v4206 = vpop.f32.mrf.mxu0
      %v4207 = vadd.f32 %v919, %v4206
      %4208 = vmatmul.f32.gmra.mxu0 %v3923
      %v4209 = vpop.f32.mrf.mxu0
      %v4210 = vadd.f32 %v922, %v4209
      %4211 = vmatmul.f32.gmra.mxu0 %v3926
      %v4212 = vpop.f32.mrf.mxu0
      %v4213 = vadd.f32 %v925, %v4212
      %4214 = vmatmul.f32.gmra.mxu0 %v3929
      %v4215 = vpop.f32.mrf.mxu0
      %v4216 = vadd.f32 %v928, %v4215
      %4217 = vmatmul.f32.gmra.mxu0 %v3932
      %v4218 = vpop.f32.mrf.mxu0
      %v4219 = vadd.f32 %v931, %v4218
      %4220 = vmatmul.f32.gmra.mxu0 %v3935
      %v4221 = vpop.f32.mrf.mxu0
      %v4222 = vadd.f32 %v934, %v4221
      %4223 = vmatmul.f32.gmra.mxu0 %v3938
      %v4224 = vpop.f32.mrf.mxu0
      %v4225 = vadd.f32 %v937, %v4224
      %4226 = vmatmul.f32.gmra.mxu0 %v3941
      %v4227 = vpop.f32.mrf.mxu0
      %v4228 = vadd.f32 %v940, %v4227
      %4229 = vdwg.mxu0
      %4231 = vset.pattern.permute.xlu0 0
      %4232 = vperm.xlu0 %4231, %v954
      %v4233 = vpop.permute.xlu0 %4232
      %4236 = vset.pattern.permute.xlu0 0
      %4237 = vperm.xlu0 %4236, %v955
      %v4238 = vpop.permute.xlu0 %4237
      %4241 = vset.pattern.permute.xlu0 0
      %4242 = vperm.xlu0 %4241, %v956
      %v4243 = vpop.permute.xlu0 %4242
      %4246 = vset.pattern.permute.xlu0 0
      %4247 = vperm.xlu0 %4246, %v957
      %v4248 = vpop.permute.xlu0 %4247
      %4251 = vset.pattern.permute.xlu0 0
      %4252 = vperm.xlu0 %4251, %v958
      %v4253 = vpop.permute.xlu0 %4252
      %4256 = vset.pattern.permute.xlu0 0
      %4257 = vperm.xlu0 %4256, %v959
      %v4258 = vpop.permute.xlu0 %4257
      %4261 = vset.pattern.permute.xlu0 0
      %4262 = vperm.xlu0 %4261, %v960
      %v4263 = vpop.permute.xlu0 %4262
      %4266 = vset.pattern.permute.xlu0 0
      %4267 = vperm.xlu0 %4266, %v961
      %v4268 = vpop.permute.xlu0 %4267
      %v4270 = vadd.f32 %v3961, %v4233
      %v4271 = vadd.f32 %v4002, %v4233
      %v4272 = vadd.f32 %v4043, %v4233
      %v4273 = vadd.f32 %v4084, %v4233
      %v4274 = vadd.f32 %v4125, %v4233
      %v4275 = vadd.f32 %v4166, %v4233
      %v4276 = vadd.f32 %v4207, %v4233
      %v4277 = vadd.f32 %v3964, %v4238
      %v4278 = vadd.f32 %v4005, %v4238
      %v4279 = vadd.f32 %v4046, %v4238
      %v4280 = vadd.f32 %v4087, %v4238
      %v4281 = vadd.f32 %v4128, %v4238
      %v4282 = vadd.f32 %v4169, %v4238
      %v4283 = vadd.f32 %v4210, %v4238
      %v4284 = vadd.f32 %v3967, %v4243
      %v4285 = vadd.f32 %v4008, %v4243
      %v4286 = vadd.f32 %v4049, %v4243
      %v4287 = vadd.f32 %v4090, %v4243
      %v4288 = vadd.f32 %v4131, %v4243
      %v4289 = vadd.f32 %v4172, %v4243
      %v4290 = vadd.f32 %v4213, %v4243
      %v4291 = vadd.f32 %v3970, %v4248
      %v4292 = vadd.f32 %v4011, %v4248
      %v4293 = vadd.f32 %v4052, %v4248
      %v4294 = vadd.f32 %v4093, %v4248
      %v4295 = vadd.f32 %v4134, %v4248
      %v4296 = vadd.f32 %v4175, %v4248
      %v4297 = vadd.f32 %v4216, %v4248
      %v4298 = vadd.f32 %v3973, %v4253
      %v4299 = vadd.f32 %v4014, %v4253
      %v4300 = vadd.f32 %v4055, %v4253
      %v4301 = vadd.f32 %v4096, %v4253
      %v4302 = vadd.f32 %v4137, %v4253
      %v4303 = vadd.f32 %v4178, %v4253
      %v4304 = vadd.f32 %v4219, %v4253
      %v4305 = vadd.f32 %v3976, %v4258
      %v4306 = vadd.f32 %v4017, %v4258
      %v4307 = vadd.f32 %v4058, %v4258
      %v4308 = vadd.f32 %v4099, %v4258
      %v4309 = vadd.f32 %v4140, %v4258
      %v4310 = vadd.f32 %v4181, %v4258
      %v4311 = vadd.f32 %v4222, %v4258
      %v4312 = vadd.f32 %v3979, %v4263
      %v4313 = vadd.f32 %v4020, %v4263
      %v4314 = vadd.f32 %v4061, %v4263
      %v4315 = vadd.f32 %v4102, %v4263
      %v4316 = vadd.f32 %v4143, %v4263
      %v4317 = vadd.f32 %v4184, %v4263
      %v4318 = vadd.f32 %v4225, %v4263
      %v4319 = vadd.f32 %v3982, %v4268
      %v4320 = vadd.f32 %v4023, %v4268
      %v4321 = vadd.f32 %v4064, %v4268
      %v4322 = vadd.f32 %v4105, %v4268
      %v4323 = vadd.f32 %v4146, %v4268
      %v4324 = vadd.f32 %v4187, %v4268
      %v4325 = vadd.f32 %v4228, %v4268
      %v4326 = vmul.f32 %v4270, 100.0
      %v4327 = vmul.f32 %v4271, 100.0
      %v4328 = vmul.f32 %v4272, 100.0
      %v4329 = vmul.f32 %v4273, 100.0
      %v4330 = vmul.f32 %v4274, 100.0
      %v4331 = vmul.f32 %v4275, 100.0
      %v4332 = vmul.f32 %v4276, 100.0
      %v4333 = vmul.f32 %v4277, 100.0
      %v4334 = vmul.f32 %v4278, 100.0
      %v4335 = vmul.f32 %v4279, 100.0
      %v4336 = vmul.f32 %v4280, 100.0
      %v4337 = vmul.f32 %v4281, 100.0
      %v4338 = vmul.f32 %v4282, 100.0
      %v4339 = vmul.f32 %v4283, 100.0
      %v4340 = vmul.f32 %v4284, 100.0
      %v4341 = vmul.f32 %v4285, 100.0
      %v4342 = vmul.f32 %v4286, 100.0
      %v4343 = vmul.f32 %v4287, 100.0
      %v4344 = vmul.f32 %v4288, 100.0
      %v4345 = vmul.f32 %v4289, 100.0
      %v4346 = vmul.f32 %v4290, 100.0
      %v4347 = vmul.f32 %v4291, 100.0
      %v4348 = vmul.f32 %v4292, 100.0
      %v4349 = vmul.f32 %v4293, 100.0
      %v4350 = vmul.f32 %v4294, 100.0
      %v4351 = vmul.f32 %v4295, 100.0
      %v4352 = vmul.f32 %v4296, 100.0
      %v4353 = vmul.f32 %v4297, 100.0
      %v4354 = vmul.f32 %v4298, 100.0
      %v4355 = vmul.f32 %v4299, 100.0
      %v4356 = vmul.f32 %v4300, 100.0
      %v4357 = vmul.f32 %v4301, 100.0
      %v4358 = vmul.f32 %v4302, 100.0
      %v4359 = vmul.f32 %v4303, 100.0
      %v4360 = vmul.f32 %v4304, 100.0
      %v4361 = vmul.f32 %v4305, 100.0
      %v4362 = vmul.f32 %v4306, 100.0
      %v4363 = vmul.f32 %v4307, 100.0
      %v4364 = vmul.f32 %v4308, 100.0
      %v4365 = vmul.f32 %v4309, 100.0
      %v4366 = vmul.f32 %v4310, 100.0
      %v4367 = vmul.f32 %v4311, 100.0
      %v4368 = vmul.f32 %v4312, 100.0
      %v4369 = vmul.f32 %v4313, 100.0
      %v4370 = vmul.f32 %v4314, 100.0
      %v4371 = vmul.f32 %v4315, 100.0
      %v4372 = vmul.f32 %v4316, 100.0
      %v4373 = vmul.f32 %v4317, 100.0
      %v4374 = vmul.f32 %v4318, 100.0
      %v4375 = vmul.f32 %v4319, 100.0
      %v4376 = vmul.f32 %v4320, 100.0
      %v4377 = vmul.f32 %v4321, 100.0
      %v4378 = vmul.f32 %v4322, 100.0
      %v4379 = vmul.f32 %v4323, 100.0
      %v4380 = vmul.f32 %v4324, 100.0
      %v4381 = vmul.f32 %v4325, 100.0
      %v4382 = vmin.f32 %v4326, 20.0
      %v4383 = vmin.f32 %v4327, 20.0
      %v4384 = vmin.f32 %v4328, 20.0
      %v4385 = vmin.f32 %v4329, 20.0
      %v4386 = vmin.f32 %v4330, 20.0
      %v4387 = vmin.f32 %v4331, 20.0
      %v4388 = vmin.f32 %v4332, 20.0
      %v4389 = vmin.f32 %v4333, 20.0
      %v4390 = vmin.f32 %v4334, 20.0
      %v4391 = vmin.f32 %v4335, 20.0
      %v4392 = vmin.f32 %v4336, 20.0
      %v4393 = vmin.f32 %v4337, 20.0
      %v4394 = vmin.f32 %v4338, 20.0
      %v4395 = vmin.f32 %v4339, 20.0
      %v4396 = vmin.f32 %v4340, 20.0
      %v4397 = vmin.f32 %v4341, 20.0
      %v4398 = vmin.f32 %v4342, 20.0
      %v4399 = vmin.f32 %v4343, 20.0
      %v4400 = vmin.f32 %v4344, 20.0
      %v4401 = vmin.f32 %v4345, 20.0
      %v4402 = vmin.f32 %v4346, 20.0
      %v4403 = vmin.f32 %v4347, 20.0
      %v4404 = vmin.f32 %v4348, 20.0
      %v4405 = vmin.f32 %v4349, 20.0
      %v4406 = vmin.f32 %v4350, 20.0
      %v4407 = vmin.f32 %v4351, 20.0
      %v4408 = vmin.f32 %v4352, 20.0
      %v4409 = vmin.f32 %v4353, 20.0
      %v4410 = vmin.f32 %v4354, 20.0
      %v4411 = vmin.f32 %v4355, 20.0
      %v4412 = vmin.f32 %v4356, 20.0
      %v4413 = vmin.f32 %v4357, 20.0
      %v4414 = vmin.f32 %v4358, 20.0
      %v4415 = vmin.f32 %v4359, 20.0
      %v4416 = vmin.f32 %v4360, 20.0
      %v4417 = vmin.f32 %v4361, 20.0
      %v4418 = vmin.f32 %v4362, 20.0
      %v4419 = vmin.f32 %v4363, 20.0
      %v4420 = vmin.f32 %v4364, 20.0
      %v4421 = vmin.f32 %v4365, 20.0
      %v4422 = vmin.f32 %v4366, 20.0
      %v4423 = vmin.f32 %v4367, 20.0
      %v4424 = vmin.f32 %v4368, 20.0
      %v4425 = vmin.f32 %v4369, 20.0
      %v4426 = vmin.f32 %v4370, 20.0
      %v4427 = vmin.f32 %v4371, 20.0
      %v4428 = vmin.f32 %v4372, 20.0
      %v4429 = vmin.f32 %v4373, 20.0
      %v4430 = vmin.f32 %v4374, 20.0
      %v4431 = vmin.f32 %v4375, 20.0
      %v4432 = vmin.f32 %v4376, 20.0
      %v4433 = vmin.f32 %v4377, 20.0
      %v4434 = vmin.f32 %v4378, 20.0
      %v4435 = vmin.f32 %v4379, 20.0
      %v4436 = vmin.f32 %v4380, 20.0
      %v4437 = vmin.f32 %v4381, 20.0
      %v4438 = vmul.f32 %v4382, 1.442695
      %v4439 = vpow.pop %v4438
      %v4440 = vmul.f32 %v4383, 1.442695
      %v4441 = vpow.pop %v4440
      %v4442 = vmul.f32 %v4384, 1.442695
      %v4443 = vpow.pop %v4442
      %v4444 = vmul.f32 %v4385, 1.442695
      %v4445 = vpow.pop %v4444
      %v4446 = vmul.f32 %v4386, 1.442695
      %v4447 = vpow.pop %v4446
      %v4448 = vmul.f32 %v4387, 1.442695
      %v4449 = vpow.pop %v4448
      %v4450 = vmul.f32 %v4388, 1.442695
      %v4451 = vpow.pop %v4450
      %v4452 = vmul.f32 %v4389, 1.442695
      %v4453 = vpow.pop %v4452
      %v4454 = vmul.f32 %v4390, 1.442695
      %v4455 = vpow.pop %v4454
      %v4456 = vmul.f32 %v4391, 1.442695
      %v4457 = vpow.pop %v4456
      %v4458 = vmul.f32 %v4392, 1.442695
      %v4459 = vpow.pop %v4458
      %v4460 = vmul.f32 %v4393, 1.442695
      %v4461 = vpow.pop %v4460
      %v4462 = vmul.f32 %v4394, 1.442695
      %v4463 = vpow.pop %v4462
      %v4464 = vmul.f32 %v4395, 1.442695
      %v4465 = vpow.pop %v4464
      %v4466 = vmul.f32 %v4396, 1.442695
      %v4467 = vpow.pop %v4466
      %v4468 = vmul.f32 %v4397, 1.442695
      %v4469 = vpow.pop %v4468
      %v4470 = vmul.f32 %v4398, 1.442695
      %v4471 = vpow.pop %v4470
      %v4472 = vmul.f32 %v4399, 1.442695
      %v4473 = vpow.pop %v4472
      %v4474 = vmul.f32 %v4400, 1.442695
      %v4475 = vpow.pop %v4474
      %v4476 = vmul.f32 %v4401, 1.442695
      %v4477 = vpow.pop %v4476
      %v4478 = vmul.f32 %v4402, 1.442695
      %v4479 = vpow.pop %v4478
      %v4480 = vmul.f32 %v4403, 1.442695
      %v4481 = vpow.pop %v4480
      %v4482 = vmul.f32 %v4404, 1.442695
      %v4483 = vpow.pop %v4482
      %v4484 = vmul.f32 %v4405, 1.442695
      %v4485 = vpow.pop %v4484
      %v4486 = vmul.f32 %v4406, 1.442695
      %v4487 = vpow.pop %v4486
      %v4488 = vmul.f32 %v4407, 1.442695
      %v4489 = vpow.pop %v4488
      %v4490 = vmul.f32 %v4408, 1.442695
      %v4491 = vpow.pop %v4490
      %v4492 = vmul.f32 %v4409, 1.442695
      %v4493 = vpow.pop %v4492
      %v4494 = vmul.f32 %v4410, 1.442695
      %v4495 = vpow.pop %v4494
      %v4496 = vmul.f32 %v4411, 1.442695
      %v4497 = vpow.pop %v4496
      %v4498 = vmul.f32 %v4412, 1.442695
      %v4499 = vpow.pop %v4498
      %v4500 = vmul.f32 %v4413, 1.442695
      %v4501 = vpow.pop %v4500
      %v4502 = vmul.f32 %v4414, 1.442695
      %v4503 = vpow.pop %v4502
      %v4504 = vmul.f32 %v4415, 1.442695
      %v4505 = vpow.pop %v4504
      %v4506 = vmul.f32 %v4416, 1.442695
      %v4507 = vpow.pop %v4506
      %v4508 = vmul.f32 %v4417, 1.442695
      %v4509 = vpow.pop %v4508
      %v4510 = vmul.f32 %v4418, 1.442695
      %v4511 = vpow.pop %v4510
      %v4512 = vmul.f32 %v4419, 1.442695
      %v4513 = vpow.pop %v4512
      %v4514 = vmul.f32 %v4420, 1.442695
      %v4515 = vpow.pop %v4514
      %v4516 = vmul.f32 %v4421, 1.442695
      %v4517 = vpow.pop %v4516
      %v4518 = vmul.f32 %v4422, 1.442695
      %v4519 = vpow.pop %v4518
      %v4520 = vmul.f32 %v4423, 1.442695
      %v4521 = vpow.pop %v4520
      %v4522 = vmul.f32 %v4424, 1.442695
      %v4523 = vpow.pop %v4522
      %v4524 = vmul.f32 %v4425, 1.442695
      %v4525 = vpow.pop %v4524
      %v4526 = vmul.f32 %v4426, 1.442695
      %v4527 = vpow.pop %v4526
      %v4528 = vmul.f32 %v4427, 1.442695
      %v4529 = vpow.pop %v4528
      %v4530 = vmul.f32 %v4428, 1.442695
      %v4531 = vpow.pop %v4530
      %v4532 = vmul.f32 %v4429, 1.442695
      %v4533 = vpow.pop %v4532
      %v4534 = vmul.f32 %v4430, 1.442695
      %v4535 = vpow.pop %v4534
      %v4536 = vmul.f32 %v4431, 1.442695
      %v4537 = vpow.pop %v4536
      %v4538 = vmul.f32 %v4432, 1.442695
      %v4539 = vpow.pop %v4538
      %v4540 = vmul.f32 %v4433, 1.442695
      %v4541 = vpow.pop %v4540
      %v4542 = vmul.f32 %v4434, 1.442695
      %v4543 = vpow.pop %v4542
      %v4544 = vmul.f32 %v4435, 1.442695
      %v4545 = vpow.pop %v4544
      %v4546 = vmul.f32 %v4436, 1.442695
      %v4547 = vpow.pop %v4546
      %v4548 = vmul.f32 %v4437, 1.442695
      %v4549 = vpow.pop %v4548
      %v4550 = vadd.f32 %v4439, 1.0
      %v4551 = vlog2.pop %v4550
      %v4552 = vmul.f32 %v4551, 0.6931472
      %v4553 = vmul.f32 -0.5, %v4439
      %v4554 = vadd.f32 %v4553, 1.0
      %v4555 = vmul.f32 %v4554, %v4439
      %v4556 = vand.u32 2147483647, %v4439
      %vm4557 = vcmp.lt.f32.partialorder %v4556, 0.0004427343
      %v4558 = vsel %vm4557, %v4555, %v4552
      %v4559 = vadd.f32 %v4441, 1.0
      %v4560 = vlog2.pop %v4559
      %v4561 = vmul.f32 %v4560, 0.6931472
      %v4562 = vmul.f32 -0.5, %v4441
      %v4563 = vadd.f32 %v4562, 1.0
      %v4564 = vmul.f32 %v4563, %v4441
      %v4565 = vand.u32 2147483647, %v4441
      %vm4566 = vcmp.lt.f32.partialorder %v4565, 0.0004427343
      %v4567 = vsel %vm4566, %v4564, %v4561
      %v4568 = vadd.f32 %v4443, 1.0
      %v4569 = vlog2.pop %v4568
      %v4570 = vmul.f32 %v4569, 0.6931472
      %v4571 = vmul.f32 -0.5, %v4443
      %v4572 = vadd.f32 %v4571, 1.0
      %v4573 = vmul.f32 %v4572, %v4443
      %v4574 = vand.u32 2147483647, %v4443
      %vm4575 = vcmp.lt.f32.partialorder %v4574, 0.0004427343
      %v4576 = vsel %vm4575, %v4573, %v4570
      %v4577 = vadd.f32 %v4445, 1.0
      %v4578 = vlog2.pop %v4577
      %v4579 = vmul.f32 %v4578, 0.6931472
      %v4580 = vmul.f32 -0.5, %v4445
      %v4581 = vadd.f32 %v4580, 1.0
      %v4582 = vmul.f32 %v4581, %v4445
      %v4583 = vand.u32 2147483647, %v4445
      %vm4584 = vcmp.lt.f32.partialorder %v4583, 0.0004427343
      %v4585 = vsel %vm4584, %v4582, %v4579
      %v4586 = vadd.f32 %v4447, 1.0
      %v4587 = vlog2.pop %v4586
      %v4588 = vmul.f32 %v4587, 0.6931472
      %v4589 = vmul.f32 -0.5, %v4447
      %v4590 = vadd.f32 %v4589, 1.0
      %v4591 = vmul.f32 %v4590, %v4447
      %v4592 = vand.u32 2147483647, %v4447
      %vm4593 = vcmp.lt.f32.partialorder %v4592, 0.0004427343
      %v4594 = vsel %vm4593, %v4591, %v4588
      %v4595 = vadd.f32 %v4449, 1.0
      %v4596 = vlog2.pop %v4595
      %v4597 = vmul.f32 %v4596, 0.6931472
      %v4598 = vmul.f32 -0.5, %v4449
      %v4599 = vadd.f32 %v4598, 1.0
      %v4600 = vmul.f32 %v4599, %v4449
      %v4601 = vand.u32 2147483647, %v4449
      %vm4602 = vcmp.lt.f32.partialorder %v4601, 0.0004427343
      %v4603 = vsel %vm4602, %v4600, %v4597
      %v4604 = vadd.f32 %v4451, 1.0
      %v4605 = vlog2.pop %v4604
      %v4606 = vmul.f32 %v4605, 0.6931472
      %v4607 = vmul.f32 -0.5, %v4451
      %v4608 = vadd.f32 %v4607, 1.0
      %v4609 = vmul.f32 %v4608, %v4451
      %v4610 = vand.u32 2147483647, %v4451
      %vm4611 = vcmp.lt.f32.partialorder %v4610, 0.0004427343
      %v4612 = vsel %vm4611, %v4609, %v4606
      %v4613 = vadd.f32 %v4453, 1.0
      %v4614 = vlog2.pop %v4613
      %v4615 = vmul.f32 %v4614, 0.6931472
      %v4616 = vmul.f32 -0.5, %v4453
      %v4617 = vadd.f32 %v4616, 1.0
      %v4618 = vmul.f32 %v4617, %v4453
      %v4619 = vand.u32 2147483647, %v4453
      %vm4620 = vcmp.lt.f32.partialorder %v4619, 0.0004427343
      %v4621 = vsel %vm4620, %v4618, %v4615
      %v4622 = vadd.f32 %v4455, 1.0
      %v4623 = vlog2.pop %v4622
      %v4624 = vmul.f32 %v4623, 0.6931472
      %v4625 = vmul.f32 -0.5, %v4455
      %v4626 = vadd.f32 %v4625, 1.0
      %v4627 = vmul.f32 %v4626, %v4455
      %v4628 = vand.u32 2147483647, %v4455
      %vm4629 = vcmp.lt.f32.partialorder %v4628, 0.0004427343
      %v4630 = vsel %vm4629, %v4627, %v4624
      %v4631 = vadd.f32 %v4457, 1.0
      %v4632 = vlog2.pop %v4631
      %v4633 = vmul.f32 %v4632, 0.6931472
      %v4634 = vmul.f32 -0.5, %v4457
      %v4635 = vadd.f32 %v4634, 1.0
      %v4636 = vmul.f32 %v4635, %v4457
      %v4637 = vand.u32 2147483647, %v4457
      %vm4638 = vcmp.lt.f32.partialorder %v4637, 0.0004427343
      %v4639 = vsel %vm4638, %v4636, %v4633
      %v4640 = vadd.f32 %v4459, 1.0
      %v4641 = vlog2.pop %v4640
      %v4642 = vmul.f32 %v4641, 0.6931472
      %v4643 = vmul.f32 -0.5, %v4459
      %v4644 = vadd.f32 %v4643, 1.0
      %v4645 = vmul.f32 %v4644, %v4459
      %v4646 = vand.u32 2147483647, %v4459
      %vm4647 = vcmp.lt.f32.partialorder %v4646, 0.0004427343
      %v4648 = vsel %vm4647, %v4645, %v4642
      %v4649 = vadd.f32 %v4461, 1.0
      %v4650 = vlog2.pop %v4649
      %v4651 = vmul.f32 %v4650, 0.6931472
      %v4652 = vmul.f32 -0.5, %v4461
      %v4653 = vadd.f32 %v4652, 1.0
      %v4654 = vmul.f32 %v4653, %v4461
      %v4655 = vand.u32 2147483647, %v4461
      %vm4656 = vcmp.lt.f32.partialorder %v4655, 0.0004427343
      %v4657 = vsel %vm4656, %v4654, %v4651
      %v4658 = vadd.f32 %v4463, 1.0
      %v4659 = vlog2.pop %v4658
      %v4660 = vmul.f32 %v4659, 0.6931472
      %v4661 = vmul.f32 -0.5, %v4463
      %v4662 = vadd.f32 %v4661, 1.0
      %v4663 = vmul.f32 %v4662, %v4463
      %v4664 = vand.u32 2147483647, %v4463
      %vm4665 = vcmp.lt.f32.partialorder %v4664, 0.0004427343
      %v4666 = vsel %vm4665, %v4663, %v4660
      %v4667 = vadd.f32 %v4465, 1.0
      %v4668 = vlog2.pop %v4667
      %v4669 = vmul.f32 %v4668, 0.6931472
      %v4670 = vmul.f32 -0.5, %v4465
      %v4671 = vadd.f32 %v4670, 1.0
      %v4672 = vmul.f32 %v4671, %v4465
      %v4673 = vand.u32 2147483647, %v4465
      %vm4674 = vcmp.lt.f32.partialorder %v4673, 0.0004427343
      %v4675 = vsel %vm4674, %v4672, %v4669
      %v4676 = vadd.f32 %v4467, 1.0
      %v4677 = vlog2.pop %v4676
      %v4678 = vmul.f32 %v4677, 0.6931472
      %v4679 = vmul.f32 -0.5, %v4467
      %v4680 = vadd.f32 %v4679, 1.0
      %v4681 = vmul.f32 %v4680, %v4467
      %v4682 = vand.u32 2147483647, %v4467
      %vm4683 = vcmp.lt.f32.partialorder %v4682, 0.0004427343
      %v4684 = vsel %vm4683, %v4681, %v4678
      %v4685 = vadd.f32 %v4469, 1.0
      %v4686 = vlog2.pop %v4685
      %v4687 = vmul.f32 %v4686, 0.6931472
      %v4688 = vmul.f32 -0.5, %v4469
      %v4689 = vadd.f32 %v4688, 1.0
      %v4690 = vmul.f32 %v4689, %v4469
      %v4691 = vand.u32 2147483647, %v4469
      %vm4692 = vcmp.lt.f32.partialorder %v4691, 0.0004427343
      %v4693 = vsel %vm4692, %v4690, %v4687
      %v4694 = vadd.f32 %v4471, 1.0
      %v4695 = vlog2.pop %v4694
      %v4696 = vmul.f32 %v4695, 0.6931472
      %v4697 = vmul.f32 -0.5, %v4471
      %v4698 = vadd.f32 %v4697, 1.0
      %v4699 = vmul.f32 %v4698, %v4471
      %v4700 = vand.u32 2147483647, %v4471
      %vm4701 = vcmp.lt.f32.partialorder %v4700, 0.0004427343
      %v4702 = vsel %vm4701, %v4699, %v4696
      %v4703 = vadd.f32 %v4473, 1.0
      %v4704 = vlog2.pop %v4703
      %v4705 = vmul.f32 %v4704, 0.6931472
      %v4706 = vmul.f32 -0.5, %v4473
      %v4707 = vadd.f32 %v4706, 1.0
      %v4708 = vmul.f32 %v4707, %v4473
      %v4709 = vand.u32 2147483647, %v4473
      %vm4710 = vcmp.lt.f32.partialorder %v4709, 0.0004427343
      %v4711 = vsel %vm4710, %v4708, %v4705
      %v4712 = vadd.f32 %v4475, 1.0
      %v4713 = vlog2.pop %v4712
      %v4714 = vmul.f32 %v4713, 0.6931472
      %v4715 = vmul.f32 -0.5, %v4475
      %v4716 = vadd.f32 %v4715, 1.0
      %v4717 = vmul.f32 %v4716, %v4475
      %v4718 = vand.u32 2147483647, %v4475
      %vm4719 = vcmp.lt.f32.partialorder %v4718, 0.0004427343
      %v4720 = vsel %vm4719, %v4717, %v4714
      %v4721 = vadd.f32 %v4477, 1.0
      %v4722 = vlog2.pop %v4721
      %v4723 = vmul.f32 %v4722, 0.6931472
      %v4724 = vmul.f32 -0.5, %v4477
      %v4725 = vadd.f32 %v4724, 1.0
      %v4726 = vmul.f32 %v4725, %v4477
      %v4727 = vand.u32 2147483647, %v4477
      %vm4728 = vcmp.lt.f32.partialorder %v4727, 0.0004427343
      %v4729 = vsel %vm4728, %v4726, %v4723
      %v4730 = vadd.f32 %v4479, 1.0
      %v4731 = vlog2.pop %v4730
      %v4732 = vmul.f32 %v4731, 0.6931472
      %v4733 = vmul.f32 -0.5, %v4479
      %v4734 = vadd.f32 %v4733, 1.0
      %v4735 = vmul.f32 %v4734, %v4479
      %v4736 = vand.u32 2147483647, %v4479
      %vm4737 = vcmp.lt.f32.partialorder %v4736, 0.0004427343
      %v4738 = vsel %vm4737, %v4735, %v4732
      %v4739 = vadd.f32 %v4481, 1.0
      %v4740 = vlog2.pop %v4739
      %v4741 = vmul.f32 %v4740, 0.6931472
      %v4742 = vmul.f32 -0.5, %v4481
      %v4743 = vadd.f32 %v4742, 1.0
      %v4744 = vmul.f32 %v4743, %v4481
      %v4745 = vand.u32 2147483647, %v4481
      %vm4746 = vcmp.lt.f32.partialorder %v4745, 0.0004427343
      %v4747 = vsel %vm4746, %v4744, %v4741
      %v4748 = vadd.f32 %v4483, 1.0
      %v4749 = vlog2.pop %v4748
      %v4750 = vmul.f32 %v4749, 0.6931472
      %v4751 = vmul.f32 -0.5, %v4483
      %v4752 = vadd.f32 %v4751, 1.0
      %v4753 = vmul.f32 %v4752, %v4483
      %v4754 = vand.u32 2147483647, %v4483
      %vm4755 = vcmp.lt.f32.partialorder %v4754, 0.0004427343
      %v4756 = vsel %vm4755, %v4753, %v4750
      %v4757 = vadd.f32 %v4485, 1.0
      %v4758 = vlog2.pop %v4757
      %v4759 = vmul.f32 %v4758, 0.6931472
      %v4760 = vmul.f32 -0.5, %v4485
      %v4761 = vadd.f32 %v4760, 1.0
      %v4762 = vmul.f32 %v4761, %v4485
      %v4763 = vand.u32 2147483647, %v4485
      %vm4764 = vcmp.lt.f32.partialorder %v4763, 0.0004427343
      %v4765 = vsel %vm4764, %v4762, %v4759
      %v4766 = vadd.f32 %v4487, 1.0
      %v4767 = vlog2.pop %v4766
      %v4768 = vmul.f32 %v4767, 0.6931472
      %v4769 = vmul.f32 -0.5, %v4487
      %v4770 = vadd.f32 %v4769, 1.0
      %v4771 = vmul.f32 %v4770, %v4487
      %v4772 = vand.u32 2147483647, %v4487
      %vm4773 = vcmp.lt.f32.partialorder %v4772, 0.0004427343
      %v4774 = vsel %vm4773, %v4771, %v4768
      %v4775 = vadd.f32 %v4489, 1.0
      %v4776 = vlog2.pop %v4775
      %v4777 = vmul.f32 %v4776, 0.6931472
      %v4778 = vmul.f32 -0.5, %v4489
      %v4779 = vadd.f32 %v4778, 1.0
      %v4780 = vmul.f32 %v4779, %v4489
      %v4781 = vand.u32 2147483647, %v4489
      %vm4782 = vcmp.lt.f32.partialorder %v4781, 0.0004427343
      %v4783 = vsel %vm4782, %v4780, %v4777
      %v4784 = vadd.f32 %v4491, 1.0
      %v4785 = vlog2.pop %v4784
      %v4786 = vmul.f32 %v4785, 0.6931472
      %v4787 = vmul.f32 -0.5, %v4491
      %v4788 = vadd.f32 %v4787, 1.0
      %v4789 = vmul.f32 %v4788, %v4491
      %v4790 = vand.u32 2147483647, %v4491
      %vm4791 = vcmp.lt.f32.partialorder %v4790, 0.0004427343
      %v4792 = vsel %vm4791, %v4789, %v4786
      %v4793 = vadd.f32 %v4493, 1.0
      %v4794 = vlog2.pop %v4793
      %v4795 = vmul.f32 %v4794, 0.6931472
      %v4796 = vmul.f32 -0.5, %v4493
      %v4797 = vadd.f32 %v4796, 1.0
      %v4798 = vmul.f32 %v4797, %v4493
      %v4799 = vand.u32 2147483647, %v4493
      %vm4800 = vcmp.lt.f32.partialorder %v4799, 0.0004427343
      %v4801 = vsel %vm4800, %v4798, %v4795
      %v4802 = vadd.f32 %v4495, 1.0
      %v4803 = vlog2.pop %v4802
      %v4804 = vmul.f32 %v4803, 0.6931472
      %v4805 = vmul.f32 -0.5, %v4495
      %v4806 = vadd.f32 %v4805, 1.0
      %v4807 = vmul.f32 %v4806, %v4495
      %v4808 = vand.u32 2147483647, %v4495
      %vm4809 = vcmp.lt.f32.partialorder %v4808, 0.0004427343
      %v4810 = vsel %vm4809, %v4807, %v4804
      %v4811 = vadd.f32 %v4497, 1.0
      %v4812 = vlog2.pop %v4811
      %v4813 = vmul.f32 %v4812, 0.6931472
      %v4814 = vmul.f32 -0.5, %v4497
      %v4815 = vadd.f32 %v4814, 1.0
      %v4816 = vmul.f32 %v4815, %v4497
      %v4817 = vand.u32 2147483647, %v4497
      %vm4818 = vcmp.lt.f32.partialorder %v4817, 0.0004427343
      %v4819 = vsel %vm4818, %v4816, %v4813
      %v4820 = vadd.f32 %v4499, 1.0
      %v4821 = vlog2.pop %v4820
      %v4822 = vmul.f32 %v4821, 0.6931472
      %v4823 = vmul.f32 -0.5, %v4499
      %v4824 = vadd.f32 %v4823, 1.0
      %v4825 = vmul.f32 %v4824, %v4499
      %v4826 = vand.u32 2147483647, %v4499
      %vm4827 = vcmp.lt.f32.partialorder %v4826, 0.0004427343
      %v4828 = vsel %vm4827, %v4825, %v4822
      %v4829 = vadd.f32 %v4501, 1.0
      %v4830 = vlog2.pop %v4829
      %v4831 = vmul.f32 %v4830, 0.6931472
      %v4832 = vmul.f32 -0.5, %v4501
      %v4833 = vadd.f32 %v4832, 1.0
      %v4834 = vmul.f32 %v4833, %v4501
      %v4835 = vand.u32 2147483647, %v4501
      %vm4836 = vcmp.lt.f32.partialorder %v4835, 0.0004427343
      %v4837 = vsel %vm4836, %v4834, %v4831
      %v4838 = vadd.f32 %v4503, 1.0
      %v4839 = vlog2.pop %v4838
      %v4840 = vmul.f32 %v4839, 0.6931472
      %v4841 = vmul.f32 -0.5, %v4503
      %v4842 = vadd.f32 %v4841, 1.0
      %v4843 = vmul.f32 %v4842, %v4503
      %v4844 = vand.u32 2147483647, %v4503
      %vm4845 = vcmp.lt.f32.partialorder %v4844, 0.0004427343
      %v4846 = vsel %vm4845, %v4843, %v4840
      %v4847 = vadd.f32 %v4505, 1.0
      %v4848 = vlog2.pop %v4847
      %v4849 = vmul.f32 %v4848, 0.6931472
      %v4850 = vmul.f32 -0.5, %v4505
      %v4851 = vadd.f32 %v4850, 1.0
      %v4852 = vmul.f32 %v4851, %v4505
      %v4853 = vand.u32 2147483647, %v4505
      %vm4854 = vcmp.lt.f32.partialorder %v4853, 0.0004427343
      %v4855 = vsel %vm4854, %v4852, %v4849
      %v4856 = vadd.f32 %v4507, 1.0
      %v4857 = vlog2.pop %v4856
      %v4858 = vmul.f32 %v4857, 0.6931472
      %v4859 = vmul.f32 -0.5, %v4507
      %v4860 = vadd.f32 %v4859, 1.0
      %v4861 = vmul.f32 %v4860, %v4507
      %v4862 = vand.u32 2147483647, %v4507
      %vm4863 = vcmp.lt.f32.partialorder %v4862, 0.0004427343
      %v4864 = vsel %vm4863, %v4861, %v4858
      %v4865 = vadd.f32 %v4509, 1.0
      %v4866 = vlog2.pop %v4865
      %v4867 = vmul.f32 %v4866, 0.6931472
      %v4868 = vmul.f32 -0.5, %v4509
      %v4869 = vadd.f32 %v4868, 1.0
      %v4870 = vmul.f32 %v4869, %v4509
      %v4871 = vand.u32 2147483647, %v4509
      %vm4872 = vcmp.lt.f32.partialorder %v4871, 0.0004427343
      %v4873 = vsel %vm4872, %v4870, %v4867
      %v4874 = vadd.f32 %v4511, 1.0
      %v4875 = vlog2.pop %v4874
      %v4876 = vmul.f32 %v4875, 0.6931472
      %v4877 = vmul.f32 -0.5, %v4511
      %v4878 = vadd.f32 %v4877, 1.0
      %v4879 = vmul.f32 %v4878, %v4511
      %v4880 = vand.u32 2147483647, %v4511
      %vm4881 = vcmp.lt.f32.partialorder %v4880, 0.0004427343
      %v4882 = vsel %vm4881, %v4879, %v4876
      %v4883 = vadd.f32 %v4513, 1.0
      %v4884 = vlog2.pop %v4883
      %v4885 = vmul.f32 %v4884, 0.6931472
      %v4886 = vmul.f32 -0.5, %v4513
      %v4887 = vadd.f32 %v4886, 1.0
      %v4888 = vmul.f32 %v4887, %v4513
      %v4889 = vand.u32 2147483647, %v4513
      %vm4890 = vcmp.lt.f32.partialorder %v4889, 0.0004427343
      %v4891 = vsel %vm4890, %v4888, %v4885
      %v4892 = vadd.f32 %v4515, 1.0
      %v4893 = vlog2.pop %v4892
      %v4894 = vmul.f32 %v4893, 0.6931472
      %v4895 = vmul.f32 -0.5, %v4515
      %v4896 = vadd.f32 %v4895, 1.0
      %v4897 = vmul.f32 %v4896, %v4515
      %v4898 = vand.u32 2147483647, %v4515
      %vm4899 = vcmp.lt.f32.partialorder %v4898, 0.0004427343
      %v4900 = vsel %vm4899, %v4897, %v4894
      %v4901 = vadd.f32 %v4517, 1.0
      %v4902 = vlog2.pop %v4901
      %v4903 = vmul.f32 %v4902, 0.6931472
      %v4904 = vmul.f32 -0.5, %v4517
      %v4905 = vadd.f32 %v4904, 1.0
      %v4906 = vmul.f32 %v4905, %v4517
      %v4907 = vand.u32 2147483647, %v4517
      %vm4908 = vcmp.lt.f32.partialorder %v4907, 0.0004427343
      %v4909 = vsel %vm4908, %v4906, %v4903
      %v4910 = vadd.f32 %v4519, 1.0
      %v4911 = vlog2.pop %v4910
      %v4912 = vmul.f32 %v4911, 0.6931472
      %v4913 = vmul.f32 -0.5, %v4519
      %v4914 = vadd.f32 %v4913, 1.0
      %v4915 = vmul.f32 %v4914, %v4519
      %v4916 = vand.u32 2147483647, %v4519
      %vm4917 = vcmp.lt.f32.partialorder %v4916, 0.0004427343
      %v4918 = vsel %vm4917, %v4915, %v4912
      %v4919 = vadd.f32 %v4521, 1.0
      %v4920 = vlog2.pop %v4919
      %v4921 = vmul.f32 %v4920, 0.6931472
      %v4922 = vmul.f32 -0.5, %v4521
      %v4923 = vadd.f32 %v4922, 1.0
      %v4924 = vmul.f32 %v4923, %v4521
      %v4925 = vand.u32 2147483647, %v4521
      %vm4926 = vcmp.lt.f32.partialorder %v4925, 0.0004427343
      %v4927 = vsel %vm4926, %v4924, %v4921
      %v4928 = vadd.f32 %v4523, 1.0
      %v4929 = vlog2.pop %v4928
      %v4930 = vmul.f32 %v4929, 0.6931472
      %v4931 = vmul.f32 -0.5, %v4523
      %v4932 = vadd.f32 %v4931, 1.0
      %v4933 = vmul.f32 %v4932, %v4523
      %v4934 = vand.u32 2147483647, %v4523
      %vm4935 = vcmp.lt.f32.partialorder %v4934, 0.0004427343
      %v4936 = vsel %vm4935, %v4933, %v4930
      %v4937 = vadd.f32 %v4525, 1.0
      %v4938 = vlog2.pop %v4937
      %v4939 = vmul.f32 %v4938, 0.6931472
      %v4940 = vmul.f32 -0.5, %v4525
      %v4941 = vadd.f32 %v4940, 1.0
      %v4942 = vmul.f32 %v4941, %v4525
      %v4943 = vand.u32 2147483647, %v4525
      %vm4944 = vcmp.lt.f32.partialorder %v4943, 0.0004427343
      %v4945 = vsel %vm4944, %v4942, %v4939
      %v4946 = vadd.f32 %v4527, 1.0
      %v4947 = vlog2.pop %v4946
      %v4948 = vmul.f32 %v4947, 0.6931472
      %v4949 = vmul.f32 -0.5, %v4527
      %v4950 = vadd.f32 %v4949, 1.0
      %v4951 = vmul.f32 %v4950, %v4527
      %v4952 = vand.u32 2147483647, %v4527
      %vm4953 = vcmp.lt.f32.partialorder %v4952, 0.0004427343
      %v4954 = vsel %vm4953, %v4951, %v4948
      %v4955 = vadd.f32 %v4529, 1.0
      %v4956 = vlog2.pop %v4955
      %v4957 = vmul.f32 %v4956, 0.6931472
      %v4958 = vmul.f32 -0.5, %v4529
      %v4959 = vadd.f32 %v4958, 1.0
      %v4960 = vmul.f32 %v4959, %v4529
      %v4961 = vand.u32 2147483647, %v4529
      %vm4962 = vcmp.lt.f32.partialorder %v4961, 0.0004427343
      %v4963 = vsel %vm4962, %v4960, %v4957
      %v4964 = vadd.f32 %v4531, 1.0
      %v4965 = vlog2.pop %v4964
      %v4966 = vmul.f32 %v4965, 0.6931472
      %v4967 = vmul.f32 -0.5, %v4531
      %v4968 = vadd.f32 %v4967, 1.0
      %v4969 = vmul.f32 %v4968, %v4531
      %v4970 = vand.u32 2147483647, %v4531
      %vm4971 = vcmp.lt.f32.partialorder %v4970, 0.0004427343
      %v4972 = vsel %vm4971, %v4969, %v4966
      %v4973 = vadd.f32 %v4533, 1.0
      %v4974 = vlog2.pop %v4973
      %v4975 = vmul.f32 %v4974, 0.6931472
      %v4976 = vmul.f32 -0.5, %v4533
      %v4977 = vadd.f32 %v4976, 1.0
      %v4978 = vmul.f32 %v4977, %v4533
      %v4979 = vand.u32 2147483647, %v4533
      %vm4980 = vcmp.lt.f32.partialorder %v4979, 0.0004427343
      %v4981 = vsel %vm4980, %v4978, %v4975
      %v4982 = vadd.f32 %v4535, 1.0
      %v4983 = vlog2.pop %v4982
      %v4984 = vmul.f32 %v4983, 0.6931472
      %v4985 = vmul.f32 -0.5, %v4535
      %v4986 = vadd.f32 %v4985, 1.0
      %v4987 = vmul.f32 %v4986, %v4535
      %v4988 = vand.u32 2147483647, %v4535
      %vm4989 = vcmp.lt.f32.partialorder %v4988, 0.0004427343
      %v4990 = vsel %vm4989, %v4987, %v4984
      %v4991 = vadd.f32 %v4537, 1.0
      %v4992 = vlog2.pop %v4991
      %v4993 = vmul.f32 %v4992, 0.6931472
      %v4994 = vmul.f32 -0.5, %v4537
      %v4995 = vadd.f32 %v4994, 1.0
      %v4996 = vmul.f32 %v4995, %v4537
      %v4997 = vand.u32 2147483647, %v4537
      %vm4998 = vcmp.lt.f32.partialorder %v4997, 0.0004427343
      %v4999 = vsel %vm4998, %v4996, %v4993
      %v5000 = vadd.f32 %v4539, 1.0
      %v5001 = vlog2.pop %v5000
      %v5002 = vmul.f32 %v5001, 0.6931472
      %v5003 = vmul.f32 -0.5, %v4539
      %v5004 = vadd.f32 %v5003, 1.0
      %v5005 = vmul.f32 %v5004, %v4539
      %v5006 = vand.u32 2147483647, %v4539
      %vm5007 = vcmp.lt.f32.partialorder %v5006, 0.0004427343
      %v5008 = vsel %vm5007, %v5005, %v5002
      %v5009 = vadd.f32 %v4541, 1.0
      %v5010 = vlog2.pop %v5009
      %v5011 = vmul.f32 %v5010, 0.6931472
      %v5012 = vmul.f32 -0.5, %v4541
      %v5013 = vadd.f32 %v5012, 1.0
      %v5014 = vmul.f32 %v5013, %v4541
      %v5015 = vand.u32 2147483647, %v4541
      %vm5016 = vcmp.lt.f32.partialorder %v5015, 0.0004427343
      %v5017 = vsel %vm5016, %v5014, %v5011
      %v5018 = vadd.f32 %v4543, 1.0
      %v5019 = vlog2.pop %v5018
      %v5020 = vmul.f32 %v5019, 0.6931472
      %v5021 = vmul.f32 -0.5, %v4543
      %v5022 = vadd.f32 %v5021, 1.0
      %v5023 = vmul.f32 %v5022, %v4543
      %v5024 = vand.u32 2147483647, %v4543
      %vm5025 = vcmp.lt.f32.partialorder %v5024, 0.0004427343
      %v5026 = vsel %vm5025, %v5023, %v5020
      %v5027 = vadd.f32 %v4545, 1.0
      %v5028 = vlog2.pop %v5027
      %v5029 = vmul.f32 %v5028, 0.6931472
      %v5030 = vmul.f32 -0.5, %v4545
      %v5031 = vadd.f32 %v5030, 1.0
      %v5032 = vmul.f32 %v5031, %v4545
      %v5033 = vand.u32 2147483647, %v4545
      %vm5034 = vcmp.lt.f32.partialorder %v5033, 0.0004427343
      %v5035 = vsel %vm5034, %v5032, %v5029
      %v5036 = vadd.f32 %v4547, 1.0
      %v5037 = vlog2.pop %v5036
      %v5038 = vmul.f32 %v5037, 0.6931472
      %v5039 = vmul.f32 -0.5, %v4547
      %v5040 = vadd.f32 %v5039, 1.0
      %v5041 = vmul.f32 %v5040, %v4547
      %v5042 = vand.u32 2147483647, %v4547
      %vm5043 = vcmp.lt.f32.partialorder %v5042, 0.0004427343
      %v5044 = vsel %vm5043, %v5041, %v5038
      %v5045 = vadd.f32 %v4549, 1.0
      %v5046 = vlog2.pop %v5045
      %v5047 = vmul.f32 %v5046, 0.6931472
      %v5048 = vmul.f32 -0.5, %v4549
      %v5049 = vadd.f32 %v5048, 1.0
      %v5050 = vmul.f32 %v5049, %v4549
      %v5051 = vand.u32 2147483647, %v4549
      %vm5052 = vcmp.lt.f32.partialorder %v5051, 0.0004427343
      %v5053 = vsel %vm5052, %v5050, %v5047
      %v5054 = vmul.f32 %v4558, 0.01
      %v5055 = vmul.f32 %v4567, 0.01
      %v5056 = vmul.f32 %v4576, 0.01
      %v5057 = vmul.f32 %v4585, 0.01
      %v5058 = vmul.f32 %v4594, 0.01
      %v5059 = vmul.f32 %v4603, 0.01
      %v5060 = vmul.f32 %v4612, 0.01
      %v5061 = vmul.f32 %v4621, 0.01
      %v5062 = vmul.f32 %v4630, 0.01
      %v5063 = vmul.f32 %v4639, 0.01
      %v5064 = vmul.f32 %v4648, 0.01
      %v5065 = vmul.f32 %v4657, 0.01
      %v5066 = vmul.f32 %v4666, 0.01
      %v5067 = vmul.f32 %v4675, 0.01
      %v5068 = vmul.f32 %v4684, 0.01
      %v5069 = vmul.f32 %v4693, 0.01
      %v5070 = vmul.f32 %v4702, 0.01
      %v5071 = vmul.f32 %v4711, 0.01
      %v5072 = vmul.f32 %v4720, 0.01
      %v5073 = vmul.f32 %v4729, 0.01
      %v5074 = vmul.f32 %v4738, 0.01
      %v5075 = vmul.f32 %v4747, 0.01
      %v5076 = vmul.f32 %v4756, 0.01
      %v5077 = vmul.f32 %v4765, 0.01
      %v5078 = vmul.f32 %v4774, 0.01
      %v5079 = vmul.f32 %v4783, 0.01
      %v5080 = vmul.f32 %v4792, 0.01
      %v5081 = vmul.f32 %v4801, 0.01
      %v5082 = vmul.f32 %v4810, 0.01
      %v5083 = vmul.f32 %v4819, 0.01
      %v5084 = vmul.f32 %v4828, 0.01
      %v5085 = vmul.f32 %v4837, 0.01
      %v5086 = vmul.f32 %v4846, 0.01
      %v5087 = vmul.f32 %v4855, 0.01
      %v5088 = vmul.f32 %v4864, 0.01
      %v5089 = vmul.f32 %v4873, 0.01
      %v5090 = vmul.f32 %v4882, 0.01
      %v5091 = vmul.f32 %v4891, 0.01
      %v5092 = vmul.f32 %v4900, 0.01
      %v5093 = vmul.f32 %v4909, 0.01
      %v5094 = vmul.f32 %v4918, 0.01
      %v5095 = vmul.f32 %v4927, 0.01
      %v5096 = vmul.f32 %v4936, 0.01
      %v5097 = vmul.f32 %v4945, 0.01
      %v5098 = vmul.f32 %v4954, 0.01
      %v5099 = vmul.f32 %v4963, 0.01
      %v5100 = vmul.f32 %v4972, 0.01
      %v5101 = vmul.f32 %v4981, 0.01
      %v5102 = vmul.f32 %v4990, 0.01
      %v5103 = vmul.f32 %v4999, 0.01
      %v5104 = vmul.f32 %v5008, 0.01
      %v5105 = vmul.f32 %v5017, 0.01
      %v5106 = vmul.f32 %v5026, 0.01
      %v5107 = vmul.f32 %v5035, 0.01
      %v5108 = vmul.f32 %v5044, 0.01
      %v5109 = vmul.f32 %v5053, 0.01
      %vm5110 = vcmp.gt.f32.partialorder %v4326, 20.0
      %vm5111 = vcmp.gt.f32.partialorder %v4327, 20.0
      %vm5112 = vcmp.gt.f32.partialorder %v4328, 20.0
      %vm5113 = vcmp.gt.f32.partialorder %v4329, 20.0
      %vm5114 = vcmp.gt.f32.partialorder %v4330, 20.0
      %vm5115 = vcmp.gt.f32.partialorder %v4331, 20.0
      %vm5116 = vcmp.gt.f32.partialorder %v4332, 20.0
      %vm5117 = vcmp.gt.f32.partialorder %v4333, 20.0
      %vm5118 = vcmp.gt.f32.partialorder %v4334, 20.0
      %vm5119 = vcmp.gt.f32.partialorder %v4335, 20.0
      %vm5120 = vcmp.gt.f32.partialorder %v4336, 20.0
      %vm5121 = vcmp.gt.f32.partialorder %v4337, 20.0
      %vm5122 = vcmp.gt.f32.partialorder %v4338, 20.0
      %vm5123 = vcmp.gt.f32.partialorder %v4339, 20.0
      %vm5124 = vcmp.gt.f32.partialorder %v4340, 20.0
      %vm5125 = vcmp.gt.f32.partialorder %v4341, 20.0
      %vm5126 = vcmp.gt.f32.partialorder %v4342, 20.0
      %vm5127 = vcmp.gt.f32.partialorder %v4343, 20.0
      %vm5128 = vcmp.gt.f32.partialorder %v4344, 20.0
      %vm5129 = vcmp.gt.f32.partialorder %v4345, 20.0
      %vm5130 = vcmp.gt.f32.partialorder %v4346, 20.0
      %vm5131 = vcmp.gt.f32.partialorder %v4347, 20.0
      %vm5132 = vcmp.gt.f32.partialorder %v4348, 20.0
      %vm5133 = vcmp.gt.f32.partialorder %v4349, 20.0
      %vm5134 = vcmp.gt.f32.partialorder %v4350, 20.0
      %vm5135 = vcmp.gt.f32.partialorder %v4351, 20.0
      %vm5136 = vcmp.gt.f32.partialorder %v4352, 20.0
      %vm5137 = vcmp.gt.f32.partialorder %v4353, 20.0
      %vm5138 = vcmp.gt.f32.partialorder %v4354, 20.0
      %vm5139 = vcmp.gt.f32.partialorder %v4355, 20.0
      %vm5140 = vcmp.gt.f32.partialorder %v4356, 20.0
      %vm5141 = vcmp.gt.f32.partialorder %v4357, 20.0
      %vm5142 = vcmp.gt.f32.partialorder %v4358, 20.0
      %vm5143 = vcmp.gt.f32.partialorder %v4359, 20.0
      %vm5144 = vcmp.gt.f32.partialorder %v4360, 20.0
      %vm5145 = vcmp.gt.f32.partialorder %v4361, 20.0
      %vm5146 = vcmp.gt.f32.partialorder %v4362, 20.0
      %vm5147 = vcmp.gt.f32.partialorder %v4363, 20.0
      %vm5148 = vcmp.gt.f32.partialorder %v4364, 20.0
      %vm5149 = vcmp.gt.f32.partialorder %v4365, 20.0
      %vm5150 = vcmp.gt.f32.partialorder %v4366, 20.0
      %vm5151 = vcmp.gt.f32.partialorder %v4367, 20.0
      %vm5152 = vcmp.gt.f32.partialorder %v4368, 20.0
      %vm5153 = vcmp.gt.f32.partialorder %v4369, 20.0
      %vm5154 = vcmp.gt.f32.partialorder %v4370, 20.0
      %vm5155 = vcmp.gt.f32.partialorder %v4371, 20.0
      %vm5156 = vcmp.gt.f32.partialorder %v4372, 20.0
      %vm5157 = vcmp.gt.f32.partialorder %v4373, 20.0
      %vm5158 = vcmp.gt.f32.partialorder %v4374, 20.0
      %vm5159 = vcmp.gt.f32.partialorder %v4375, 20.0
      %vm5160 = vcmp.gt.f32.partialorder %v4376, 20.0
      %vm5161 = vcmp.gt.f32.partialorder %v4377, 20.0
      %vm5162 = vcmp.gt.f32.partialorder %v4378, 20.0
      %vm5163 = vcmp.gt.f32.partialorder %v4379, 20.0
      %vm5164 = vcmp.gt.f32.partialorder %v4380, 20.0
      %vm5165 = vcmp.gt.f32.partialorder %v4381, 20.0
      %v5166 = vsel %vm5110, %v4270, %v5054
      %v5167 = vsel %vm5111, %v4271, %v5055
      %v5168 = vsel %vm5112, %v4272, %v5056
      %v5169 = vsel %vm5113, %v4273, %v5057
      %v5170 = vsel %vm5114, %v4274, %v5058
      %v5171 = vsel %vm5115, %v4275, %v5059
      %v5172 = vsel %vm5116, %v4276, %v5060
      %v5173 = vsel %vm5117, %v4277, %v5061
      %v5174 = vsel %vm5118, %v4278, %v5062
      %v5175 = vsel %vm5119, %v4279, %v5063
      %v5176 = vsel %vm5120, %v4280, %v5064
      %v5177 = vsel %vm5121, %v4281, %v5065
      %v5178 = vsel %vm5122, %v4282, %v5066
      %v5179 = vsel %vm5123, %v4283, %v5067
      %v5180 = vsel %vm5124, %v4284, %v5068
      %v5181 = vsel %vm5125, %v4285, %v5069
      %v5182 = vsel %vm5126, %v4286, %v5070
      %v5183 = vsel %vm5127, %v4287, %v5071
      %v5184 = vsel %vm5128, %v4288, %v5072
      %v5185 = vsel %vm5129, %v4289, %v5073
      %v5186 = vsel %vm5130, %v4290, %v5074
      %v5187 = vsel %vm5131, %v4291, %v5075
      %v5188 = vsel %vm5132, %v4292, %v5076
      %v5189 = vsel %vm5133, %v4293, %v5077
      %v5190 = vsel %vm5134, %v4294, %v5078
      %v5191 = vsel %vm5135, %v4295, %v5079
      %v5192 = vsel %vm5136, %v4296, %v5080
      %v5193 = vsel %vm5137, %v4297, %v5081
      %v5194 = vsel %vm5138, %v4298, %v5082
      %v5195 = vsel %vm5139, %v4299, %v5083
      %v5196 = vsel %vm5140, %v4300, %v5084
      %v5197 = vsel %vm5141, %v4301, %v5085
      %v5198 = vsel %vm5142, %v4302, %v5086
      %v5199 = vsel %vm5143, %v4303, %v5087
      %v5200 = vsel %vm5144, %v4304, %v5088
      %v5201 = vsel %vm5145, %v4305, %v5089
      %v5202 = vsel %vm5146, %v4306, %v5090
      %v5203 = vsel %vm5147, %v4307, %v5091
      %v5204 = vsel %vm5148, %v4308, %v5092
      %v5205 = vsel %vm5149, %v4309, %v5093
      %v5206 = vsel %vm5150, %v4310, %v5094
      %v5207 = vsel %vm5151, %v4311, %v5095
      %v5208 = vsel %vm5152, %v4312, %v5096
      %v5209 = vsel %vm5153, %v4313, %v5097
      %v5210 = vsel %vm5154, %v4314, %v5098
      %v5211 = vsel %vm5155, %v4315, %v5099
      %v5212 = vsel %vm5156, %v4316, %v5100
      %v5213 = vsel %vm5157, %v4317, %v5101
      %v5214 = vsel %vm5158, %v4318, %v5102
      %v5215 = vsel %vm5159, %v4319, %v5103
      %v5216 = vsel %vm5160, %v4320, %v5104
      %v5217 = vsel %vm5161, %v4321, %v5105
      %v5218 = vsel %vm5162, %v4322, %v5106
      %v5219 = vsel %vm5163, %v4323, %v5107
      %v5220 = vsel %vm5164, %v4324, %v5108
      %v5221 = vsel %vm5165, %v4325, %v5109
      %v5222 = vld [vmem:[%s6] sm:$0xff]
      %v5223 = vld [vmem:[%s6 + $0x8] sm:$0xff]
      %v5224 = vld [vmem:[%s6 + $0x10] sm:$0xff]
      %v5225 = vld [vmem:[%s6 + $0x18] sm:$0xff]
      %v5226 = vld [vmem:[%s6 + $0x20] sm:$0x1]
      %5228 = vset.pattern.permute.xlu0 0
      %5229 = vperm.xlu0 %5228, %v962
      %v5230 = vpop.permute.xlu0 %5229
      %5233 = vset.pattern.permute.xlu0 0
      %5234 = vperm.xlu0 %5233, %v963
      %v5235 = vpop.permute.xlu0 %5234
      %5238 = vset.pattern.permute.xlu0 0
      %5239 = vperm.xlu0 %5238, %v964
      %v5240 = vpop.permute.xlu0 %5239
      %5243 = vset.pattern.permute.xlu0 0
      %5244 = vperm.xlu0 %5243, %v965
      %v5245 = vpop.permute.xlu0 %5244
      %5248 = vset.pattern.permute.xlu0 0
      %5249 = vperm.xlu0 %5248, %v966
      %v5250 = vpop.permute.xlu0 %5249
      %v5253 = vsel %vm2015, %v5222, 0
      %v5256 = vsel %vm2015, %v5223, 0
      %v5259 = vsel %vm2015, %v5224, 0
      %v5262 = vsel %vm2015, %v5225, 0
      %v5265 = vsel %vm2015, %v5226, 0
      %5267 = vmatpush.msra.mxu0 0.0
      %5268 = vmatpush.msra.mxu0 0.0
      %5269 = vmatpush.msra.mxu0 0.0
      %5270 = vmatpush.msra.mxu0 0.0
      %5271 = vmatpush.msra.mxu0 0.0
      %5272 = vmatpush.msra.mxu0 0.0
      %5273 = vmatpush.msra.mxu0 0.0
      %5274 = vmatpush.msra.mxu0 0.0
      %5275 = vmatpush.msra.mxu0 %v5215
      %5276 = vmatpush.msra.mxu0 %v5208
      %5277 = vmatpush.msra.mxu0 %v5201
      %5278 = vmatpush.msra.mxu0 %v5194
      %5279 = vmatpush.msra.mxu0 %v5187
      %5280 = vmatpush.msra.mxu0 %v5180
      %5281 = vmatpush.msra.mxu0 %v5173
      %5282 = vmatpush.msra.mxu0 %v5166
      %5283 = vmatmul.f32.gmra.mxu0 %v5253
      %v5284 = vpop.f32.mrf.mxu0
      %v5285 = vadd.f32 %v5230, %v5284
      %5286 = vmatmul.f32.gmra.mxu0 %v5256
      %v5287 = vpop.f32.mrf.mxu0
      %v5288 = vadd.f32 %v5235, %v5287
      %5289 = vmatmul.f32.gmra.mxu0 %v5259
      %v5290 = vpop.f32.mrf.mxu0
      %v5291 = vadd.f32 %v5240, %v5290
      %5292 = vmatmul.f32.gmra.mxu0 %v5262
      %v5293 = vpop.f32.mrf.mxu0
      %v5294 = vadd.f32 %v5245, %v5293
      %5295 = vmatmul.f32.gmra.mxu0 %v5265
      %v5296 = vpop.f32.mrf.mxu0
      %v5297 = vadd.f32 %v5250, %v5296
      %5298 = vdwg.mxu0
      %5299 = vmatpush.msra.mxu0 0.0
      %5300 = vmatpush.msra.mxu0 0.0
      %5301 = vmatpush.msra.mxu0 0.0
      %5302 = vmatpush.msra.mxu0 0.0
      %5303 = vmatpush.msra.mxu0 0.0
      %5304 = vmatpush.msra.mxu0 0.0
      %5305 = vmatpush.msra.mxu0 0.0
      %5306 = vmatpush.msra.mxu0 0.0
      %5307 = vmatpush.msra.mxu0 %v5216
      %5308 = vmatpush.msra.mxu0 %v5209
      %5309 = vmatpush.msra.mxu0 %v5202
      %5310 = vmatpush.msra.mxu0 %v5195
      %5311 = vmatpush.msra.mxu0 %v5188
      %5312 = vmatpush.msra.mxu0 %v5181
      %5313 = vmatpush.msra.mxu0 %v5174
      %5314 = vmatpush.msra.mxu0 %v5167
      %5315 = vmatmul.f32.gmra.mxu0 %v5253
      %v5316 = vpop.f32.mrf.mxu0
      %v5317 = vadd.f32 %v5230, %v5316
      %5318 = vmatmul.f32.gmra.mxu0 %v5256
      %v5319 = vpop.f32.mrf.mxu0
      %v5320 = vadd.f32 %v5235, %v5319
      %5321 = vmatmul.f32.gmra.mxu0 %v5259
      %v5322 = vpop.f32.mrf.mxu0
      %v5323 = vadd.f32 %v5240, %v5322
      %5324 = vmatmul.f32.gmra.mxu0 %v5262
      %v5325 = vpop.f32.mrf.mxu0
      %v5326 = vadd.f32 %v5245, %v5325
      %5327 = vmatmul.f32.gmra.mxu0 %v5265
      %v5328 = vpop.f32.mrf.mxu0
      %v5329 = vadd.f32 %v5250, %v5328
      %5330 = vdwg.mxu0
      %5331 = vmatpush.msra.mxu0 0.0
      %5332 = vmatpush.msra.mxu0 0.0
      %5333 = vmatpush.msra.mxu0 0.0
      %5334 = vmatpush.msra.mxu0 0.0
      %5335 = vmatpush.msra.mxu0 0.0
      %5336 = vmatpush.msra.mxu0 0.0
      %5337 = vmatpush.msra.mxu0 0.0
      %5338 = vmatpush.msra.mxu0 0.0
      %5339 = vmatpush.msra.mxu0 %v5217
      %5340 = vmatpush.msra.mxu0 %v5210
      %5341 = vmatpush.msra.mxu0 %v5203
      %5342 = vmatpush.msra.mxu0 %v5196
      %5343 = vmatpush.msra.mxu0 %v5189
      %5344 = vmatpush.msra.mxu0 %v5182
      %5345 = vmatpush.msra.mxu0 %v5175
      %5346 = vmatpush.msra.mxu0 %v5168
      %5347 = vmatmul.f32.gmra.mxu0 %v5253
      %v5348 = vpop.f32.mrf.mxu0
      %v5349 = vadd.f32 %v5230, %v5348
      %5350 = vmatmul.f32.gmra.mxu0 %v5256
      %v5351 = vpop.f32.mrf.mxu0
      %v5352 = vadd.f32 %v5235, %v5351
      %5353 = vmatmul.f32.gmra.mxu0 %v5259
      %v5354 = vpop.f32.mrf.mxu0
      %v5355 = vadd.f32 %v5240, %v5354
      %5356 = vmatmul.f32.gmra.mxu0 %v5262
      %v5357 = vpop.f32.mrf.mxu0
      %v5358 = vadd.f32 %v5245, %v5357
      %5359 = vmatmul.f32.gmra.mxu0 %v5265
      %v5360 = vpop.f32.mrf.mxu0
      %v5361 = vadd.f32 %v5250, %v5360
      %5362 = vdwg.mxu0
      %5363 = vmatpush.msra.mxu0 0.0
      %5364 = vmatpush.msra.mxu0 0.0
      %5365 = vmatpush.msra.mxu0 0.0
      %5366 = vmatpush.msra.mxu0 0.0
      %5367 = vmatpush.msra.mxu0 0.0
      %5368 = vmatpush.msra.mxu0 0.0
      %5369 = vmatpush.msra.mxu0 0.0
      %5370 = vmatpush.msra.mxu0 0.0
      %5371 = vmatpush.msra.mxu0 %v5218
      %5372 = vmatpush.msra.mxu0 %v5211
      %5373 = vmatpush.msra.mxu0 %v5204
      %5374 = vmatpush.msra.mxu0 %v5197
      %5375 = vmatpush.msra.mxu0 %v5190
      %5376 = vmatpush.msra.mxu0 %v5183
      %5377 = vmatpush.msra.mxu0 %v5176
      %5378 = vmatpush.msra.mxu0 %v5169
      %5379 = vmatmul.f32.gmra.mxu0 %v5253
      %v5380 = vpop.f32.mrf.mxu0
      %v5381 = vadd.f32 %v5230, %v5380
      %5382 = vmatmul.f32.gmra.mxu0 %v5256
      %v5383 = vpop.f32.mrf.mxu0
      %v5384 = vadd.f32 %v5235, %v5383
      %5385 = vmatmul.f32.gmra.mxu0 %v5259
      %v5386 = vpop.f32.mrf.mxu0
      %v5387 = vadd.f32 %v5240, %v5386
      %5388 = vmatmul.f32.gmra.mxu0 %v5262
      %v5389 = vpop.f32.mrf.mxu0
      %v5390 = vadd.f32 %v5245, %v5389
      %5391 = vmatmul.f32.gmra.mxu0 %v5265
      %v5392 = vpop.f32.mrf.mxu0
      %v5393 = vadd.f32 %v5250, %v5392
      %5394 = vdwg.mxu0
      %5395 = vmatpush.msra.mxu0 0.0
      %5396 = vmatpush.msra.mxu0 0.0
      %5397 = vmatpush.msra.mxu0 0.0
      %5398 = vmatpush.msra.mxu0 0.0
      %5399 = vmatpush.msra.mxu0 0.0
      %5400 = vmatpush.msra.mxu0 0.0
      %5401 = vmatpush.msra.mxu0 0.0
      %5402 = vmatpush.msra.mxu0 0.0
      %5403 = vmatpush.msra.mxu0 %v5219
      %5404 = vmatpush.msra.mxu0 %v5212
      %5405 = vmatpush.msra.mxu0 %v5205
      %5406 = vmatpush.msra.mxu0 %v5198
      %5407 = vmatpush.msra.mxu0 %v5191
      %5408 = vmatpush.msra.mxu0 %v5184
      %5409 = vmatpush.msra.mxu0 %v5177
      %5410 = vmatpush.msra.mxu0 %v5170
      %5411 = vmatmul.f32.gmra.mxu0 %v5253
      %v5412 = vpop.f32.mrf.mxu0
      %v5413 = vadd.f32 %v5230, %v5412
      %5414 = vmatmul.f32.gmra.mxu0 %v5256
      %v5415 = vpop.f32.mrf.mxu0
      %v5416 = vadd.f32 %v5235, %v5415
      %5417 = vmatmul.f32.gmra.mxu0 %v5259
      %v5418 = vpop.f32.mrf.mxu0
      %v5419 = vadd.f32 %v5240, %v5418
      %5420 = vmatmul.f32.gmra.mxu0 %v5262
      %v5421 = vpop.f32.mrf.mxu0
      %v5422 = vadd.f32 %v5245, %v5421
      %5423 = vmatmul.f32.gmra.mxu0 %v5265
      %v5424 = vpop.f32.mrf.mxu0
      %v5425 = vadd.f32 %v5250, %v5424
      %5426 = vdwg.mxu0
      %5427 = vmatpush.msra.mxu0 0.0
      %5428 = vmatpush.msra.mxu0 0.0
      %5429 = vmatpush.msra.mxu0 0.0
      %5430 = vmatpush.msra.mxu0 0.0
      %5431 = vmatpush.msra.mxu0 0.0
      %5432 = vmatpush.msra.mxu0 0.0
      %5433 = vmatpush.msra.mxu0 0.0
      %5434 = vmatpush.msra.mxu0 0.0
      %5435 = vmatpush.msra.mxu0 %v5220
      %5436 = vmatpush.msra.mxu0 %v5213
      %5437 = vmatpush.msra.mxu0 %v5206
      %5438 = vmatpush.msra.mxu0 %v5199
      %5439 = vmatpush.msra.mxu0 %v5192
      %5440 = vmatpush.msra.mxu0 %v5185
      %5441 = vmatpush.msra.mxu0 %v5178
      %5442 = vmatpush.msra.mxu0 %v5171
      %5443 = vmatmul.f32.gmra.mxu0 %v5253
      %v5444 = vpop.f32.mrf.mxu0
      %v5445 = vadd.f32 %v5230, %v5444
      %5446 = vmatmul.f32.gmra.mxu0 %v5256
      %v5447 = vpop.f32.mrf.mxu0
      %v5448 = vadd.f32 %v5235, %v5447
      %5449 = vmatmul.f32.gmra.mxu0 %v5259
      %v5450 = vpop.f32.mrf.mxu0
      %v5451 = vadd.f32 %v5240, %v5450
      %5452 = vmatmul.f32.gmra.mxu0 %v5262
      %v5453 = vpop.f32.mrf.mxu0
      %v5454 = vadd.f32 %v5245, %v5453
      %5455 = vmatmul.f32.gmra.mxu0 %v5265
      %v5456 = vpop.f32.mrf.mxu0
      %v5457 = vadd.f32 %v5250, %v5456
      %5458 = vdwg.mxu0
      %5459 = vmatpush.msra.mxu0 0.0
      %5460 = vmatpush.msra.mxu0 0.0
      %5461 = vmatpush.msra.mxu0 0.0
      %5462 = vmatpush.msra.mxu0 0.0
      %5463 = vmatpush.msra.mxu0 0.0
      %5464 = vmatpush.msra.mxu0 0.0
      %5465 = vmatpush.msra.mxu0 0.0
      %5466 = vmatpush.msra.mxu0 0.0
      %5467 = vmatpush.msra.mxu0 %v5221
      %5468 = vmatpush.msra.mxu0 %v5214
      %5469 = vmatpush.msra.mxu0 %v5207
      %5470 = vmatpush.msra.mxu0 %v5200
      %5471 = vmatpush.msra.mxu0 %v5193
      %5472 = vmatpush.msra.mxu0 %v5186
      %5473 = vmatpush.msra.mxu0 %v5179
      %5474 = vmatpush.msra.mxu0 %v5172
      %5475 = vmatmul.f32.gmra.mxu0 %v5253
      %v5476 = vpop.f32.mrf.mxu0
      %v5477 = vadd.f32 %v5230, %v5476
      %5478 = vmatmul.f32.gmra.mxu0 %v5256
      %v5479 = vpop.f32.mrf.mxu0
      %v5480 = vadd.f32 %v5235, %v5479
      %5481 = vmatmul.f32.gmra.mxu0 %v5259
      %v5482 = vpop.f32.mrf.mxu0
      %v5483 = vadd.f32 %v5240, %v5482
      %5484 = vmatmul.f32.gmra.mxu0 %v5262
      %v5485 = vpop.f32.mrf.mxu0
      %v5486 = vadd.f32 %v5245, %v5485
      %5487 = vmatmul.f32.gmra.mxu0 %v5265
      %v5488 = vpop.f32.mrf.mxu0
      %v5489 = vadd.f32 %v5250, %v5488
      %5490 = vdwg.mxu0
      %5491 = vst [vmem:[%s363] sm:$0xff] %v5285
      %5492 = vst [vmem:[%s363 + $0x8] sm:$0xff] %v5317
      %5493 = vst [vmem:[%s363 + $0x10] sm:$0xff] %v5349
      %5494 = vst [vmem:[%s363 + $0x18] sm:$0xff] %v5381
      %5495 = vst [vmem:[%s363 + $0x20] sm:$0xff] %v5413
      %5496 = vst [vmem:[%s363 + $0x28] sm:$0xff] %v5445
      %5497 = vst [vmem:[%s363 + $0x30] sm:$0xff] %v5477
      %5498 = vst [vmem:[%s363 + $0x38] sm:$0xff] %v5288
      %5499 = vst [vmem:[%s363 + $0x40] sm:$0xff] %v5320
      %5500 = vst [vmem:[%s363 + $0x48] sm:$0xff] %v5352
      %5501 = vst [vmem:[%s363 + $0x50] sm:$0xff] %v5384
      %5502 = vst [vmem:[%s363 + $0x58] sm:$0xff] %v5416
      %5503 = vst [vmem:[%s363 + $0x60] sm:$0xff] %v5448
      %5504 = vst [vmem:[%s363 + $0x68] sm:$0xff] %v5480
      %5505 = vst [vmem:[%s363 + $0x70] sm:$0xff] %v5291
      %5506 = vst [vmem:[%s363 + $0x78] sm:$0xff] %v5323
      %5507 = vst [vmem:[%s363 + $0x80] sm:$0xff] %v5355
      %5508 = vst [vmem:[%s363 + $0x88] sm:$0xff] %v5387
      %5509 = vst [vmem:[%s363 + $0x90] sm:$0xff] %v5419
      %5510 = vst [vmem:[%s363 + $0x98] sm:$0xff] %v5451
      %5511 = vst [vmem:[%s363 + $0xa0] sm:$0xff] %v5483
      %5512 = vst [vmem:[%s363 + $0xa8] sm:$0xff] %v5294
      %5513 = vst [vmem:[%s363 + $0xb0] sm:$0xff] %v5326
      %5514 = vst [vmem:[%s363 + $0xb8] sm:$0xff] %v5358
      %5515 = vst [vmem:[%s363 + $0xc0] sm:$0xff] %v5390
      %5516 = vst [vmem:[%s363 + $0xc8] sm:$0xff] %v5422
      %5517 = vst [vmem:[%s363 + $0xd0] sm:$0xff] %v5454
      %5518 = vst [vmem:[%s363 + $0xd8] sm:$0xff] %v5486
      %5519 = vst [vmem:[%s363 + $0xe0] sm:$0x1] %v5297
      %5520 = vst [vmem:[%s363 + $0xe8] sm:$0x1] %v5329
      %5521 = vst [vmem:[%s363 + $0xf0] sm:$0x1] %v5361
      %5522 = vst [vmem:[%s363 + $0xf8] sm:$0x1] %v5393
      %5523 = vst [vmem:[%s363 + $0x100] sm:$0x1] %v5425
      %5524 = vst [vmem:[%s363 + $0x108] sm:$0x1] %v5457
      %5525 = vst [vmem:[%s363 + $0x110] sm:$0x1] %v5489
      %s5526 = smul.u32 7, %s24
      %p5527 = scmp.lt.s32.totalorder %s23, 1
      %s5528 = scalar_select %p5527, %s23, 1
      %p5529 = scmp.lt.s32.totalorder %s5526, 6
      %s5530 = scalar_select %p5529, %s5526, 6
      %s5531 = smul.addr %s5528, 35
      %s5532 = sadd.s32 %s5530, %s5531
      %s5533 = smul.addr %s5532, 8
      %s5534 = scalar_lea.vmem %s8, %s5533
      // Predicated region
      $region53: #{tpu_custom_call.1} parent=51 // pred_check
        %p5535 = pneg %p231
      $region54: #{tpu_custom_call.1} parent=51 // pred_check_branch
        %5537 = sbr.rel (%p5535) target = $region56
      $region55: #{tpu_custom_call.1} parent=51 // pred_region
        %s5538 = smul.u32 7, %s24
      $region56: #{tpu_custom_call.1} parent=51 // pred_fallthru
        _
    $region52: #{tpu_custom_call.1} parent=5 // pred_fallthru
      _
    %p5539 = scmp.le.s32.totalorder 2, %s14
    // Predicated region
    $region57: #{tpu_custom_call.1} parent=5 // pred_check
      %p5540 = pneg %p5539
    $region58: #{tpu_custom_call.1} parent=5 // pred_check_branch
      %5542 = sbr.rel (%p5540) target = $region60
    $region59: #{tpu_custom_call.1} parent=5 // pred_region
      %s5543 = ssub.s32 %s14, 2
      // Predicated region
      $region61: #{tpu_custom_call.1} parent=59 // pred_check
        %p5544 = pneg %p237
      $region62: #{tpu_custom_call.1} parent=59 // pred_check_branch
        %5546 = sbr.rel (%p5544) target = $region64
      $region63: #{tpu_custom_call.1} parent=59 // pred_region
        %s5547 = smul.u32 7, %s26
        %p5548 = scmp.lt.s32.totalorder %s25, 1
        %s5549 = scalar_select %p5548, %s25, 1
        %p5550 = scmp.lt.s32.totalorder %s5547, 6
        %s5551 = scalar_select %p5550, %s5547, 6
        %s5552 = smul.addr %s5549, 35
        %s5553 = sadd.s32 %s5551, %s5552
        %s5554 = smul.addr %s5553, 8
        %s5555 = scalar_lea.vmem %s8, %s5554
      $region64: #{tpu_custom_call.1} parent=59 // pred_fallthru
        _
    $region60: #{tpu_custom_call.1} parent=5 // pred_fallthru
      _
  $region6: #{tpu_custom_call.1} parent=0 // loop_footer
    %s18 = sadd.s32 1, %s14
  $region7: #{tpu_custom_call.1} parent=0 // loop_footer_branch
    %13 = sbr.rel target = $region3
  $region8: #{tpu_custom_call.1} parent=0 // loop_exit
    _

</llo_original>
